<compile_context>
chip_gen: v6e
topology: v6e:2x2x1
jax: 0.10.0
libtpu: 0.0.40
codegen_flags: <defaults>
</compile_context>

<pallas_src>
from typing import NamedTuple

import jax
import jax.numpy as jnp
from jax.experimental import pallas as pl
from jax.experimental.pallas import tpu as pltpu


def _cbow_kernel(idx_ref, emb_hbm, wt_ref, b_ref, out_ref,
                 gather, sem, mean_f, mean_w, m_s, l_s):
    # idx_ref : SMEM i32 (B_pad*C,)         -- scalar-prefetched context word ids
    # emb_hbm : HBM  f32 (V, D_pad)         -- embedding table (never fully loaded)
    # wt_ref  : VMEM bf16/f32 (D_pad, Tv)   -- current W^T tile (streamed)
    # b_ref   : VMEM f32 (1, Tv)            -- current bias tile (pad lanes = -1e30)
    # out_ref : VMEM f32 (B_pad, V_pad)     -- resident logits / final log-probs
    # gather  : VMEM f32 (B_pad*C, D_pad)   -- DMA-gathered context rows
    # sem     : DMA sems (B_pad*C,)
    # mean_f  : VMEM f32 (B_pad, D_pad)     -- context means (f32 staging)
    # mean_w  : VMEM wt  (B_pad, D_pad)     -- context means, weight dtype (hoisted cast)
    # m_s,l_s : VMEM f32 (B_pad, 1)         -- running max / running sum(exp) per row
    j = pl.program_id(0)
    n_tiles = pl.num_programs(0)
    n_rows, _ = gather.shape
    b_pad = mean_w.shape[0]
    ctx = n_rows // b_pad                    # context size C (static)
    tile_v = wt_ref.shape[1]

    # --- first tile only: gather the B*C context rows from HBM, build means.
    @pl.when(j == 0)
    def _():
        for r in range(n_rows):              # B_pad*C is small & static: unrolled
            pltpu.make_async_copy(emb_hbm.at[idx_ref[r]], gather.at[r],
                                  sem.at[r]).start()
        for r in range(n_rows):
            pltpu.make_async_copy(emb_hbm.at[idx_ref[r]], gather.at[r],
                                  sem.at[r]).wait()
        inv_c = 1.0 / ctx
        for b in range(b_pad):
            rows = gather[pl.ds(b * ctx, ctx), :]             # (C, D_pad) f32
            mean_f[pl.ds(b, 1), :] = jnp.sum(rows, axis=0, keepdims=True) * inv_c
        mean_w[...] = mean_f[...].astype(mean_w.dtype)        # cast once, not per tile
        m_s[...] = jnp.full_like(m_s, -jnp.inf)
        l_s[...] = jnp.zeros_like(l_s)

    # --- batched linear layer for this V tile on the MXU (f32 accumulate). --
    logits = jnp.dot(mean_w[...], wt_ref[...],
                     preferred_element_type=jnp.float32) + b_ref[...]  # (B_pad, Tv)

    # Stash raw logits into the resident output block (lane-aligned store).
    off = pl.multiple_of(j * tile_v, tile_v)
    out_ref[:, pl.ds(off, tile_v)] = logits

    # --- online logsumexp across V tiles (per row). --------------------------
    tile_max = jnp.max(logits, axis=-1, keepdims=True)        # (B_pad, 1)
    m_new = jnp.maximum(m_s[...], tile_max)
    l_s[...] = l_s[...] * jnp.exp(m_s[...] - m_new) + jnp.sum(
        jnp.exp(logits - m_new), axis=-1, keepdims=True)
    m_s[...] = m_new

    # --- last tile: normalize the resident logits into log-probabilities. ---
    @pl.when(j == n_tiles - 1)
    def _():
        out_ref[...] = out_ref[...] - (m_s[...] + jnp.log(l_s[...]))


class CBOWParams(NamedTuple):
    emb_pad: jax.Array     # (V, D_pad) f32
    wt_pad: jax.Array      # (D_pad, V_pad) weights dtype (bf16 default)
    bias_pad: jax.Array    # (1, V_pad) f32, padded lanes = -1e30
    tile_v: int
    vocab_size: int


def prepare_cbow_params(embeddings, weight, bias, *, tile_v=2048,
                        weights_dtype=jnp.bfloat16):
    """One-time parameter prep (hoisted out of the forward path).

    * embedding table columns zero-padded to D_pad (multiple of 128)
    * linear weight transposed to W^T of shape (D_pad, V_pad), zero-padded
    * bias padded with -1e30 so padded vocab lanes never contribute.

    NOTE on the -1e30 padding: padded vocab columns only ever appear in the
    LAST V tile (v_pad - V < tile_v by construction), so by the time the
    online softmax sees them the running max has already been raised by real
    logits and exp(-1e30 - m) underflows to 0 — they cannot corrupt l_s.
    """
    V, D = weight.shape
    assert embeddings.shape == (V, D) and bias.shape == (V,)
    assert tile_v % 128 == 0, "tile_v must be lane-dense (multiple of 128)"
    d_pad = ((D + 127) // 128) * 128
    v_pad = ((V + tile_v - 1) // tile_v) * tile_v
    assert v_pad - V < tile_v           # padding confined to the last tile

    emb_pad = jnp.zeros((V, d_pad), jnp.float32).at[:, :D].set(
        embeddings.astype(jnp.float32))
    wt_pad = jnp.zeros((d_pad, v_pad), weights_dtype).at[:D, :V].set(
        weight.T.astype(weights_dtype))
    bias_pad = jnp.full((1, v_pad), -1e30, jnp.float32).at[:, :V].set(
        bias.astype(jnp.float32))
    return CBOWParams(emb_pad, wt_pad, bias_pad, int(tile_v), int(V))


def cbow_forward(indices, params: CBOWParams):
    """indices: (C,) or (B, C) int32 context word ids.
    Returns f32 log-probs of shape (V,) or (B, V)."""
    squeeze = (indices.ndim == 1)
    idx2d = indices[None, :] if squeeze else indices
    B, C = idx2d.shape
    b_pad = max(8, ((B + 7) // 8) * 8)                  # sublane-aligned batch
    idx_p = jnp.zeros((b_pad, C), jnp.int32).at[:B].set(idx2d.astype(jnp.int32))
    idx_flat = idx_p.reshape(-1)

    V = params.vocab_size
    d_pad = params.emb_pad.shape[1]
    v_pad = params.wt_pad.shape[1]
    tile_v = params.tile_v
    assert v_pad % tile_v == 0
    n_tiles = v_pad // tile_v

    out = pl.pallas_call(
        _cbow_kernel,
        out_shape=jax.ShapeDtypeStruct((b_pad, v_pad), jnp.float32),
        grid_spec=pltpu.PrefetchScalarGridSpec(
            num_scalar_prefetch=1,                       # indices -> SMEM
            grid=(n_tiles,),
            in_specs=[
                pl.BlockSpec(memory_space=pl.ANY),                    # emb table stays in HBM
                pl.BlockSpec((d_pad, tile_v), lambda j, idx: (0, j)),  # W^T tile (streamed)
                pl.BlockSpec((1, tile_v), lambda j, idx: (0, j)),      # bias tile
            ],
            out_specs=pl.BlockSpec((b_pad, v_pad), lambda j, idx: (0, 0)),  # resident logits
            scratch_shapes=[
                pltpu.VMEM((b_pad * C, d_pad), jnp.float32),   # gathered context rows
                pltpu.SemaphoreType.DMA((b_pad * C,)),         # one sem per row DMA
                pltpu.VMEM((b_pad, d_pad), jnp.float32),       # context means (f32)
                pltpu.VMEM((b_pad, d_pad), params.wt_pad.dtype),  # means in weight dtype
                pltpu.VMEM((b_pad, 1), jnp.float32),           # running max
                pltpu.VMEM((b_pad, 1), jnp.float32),           # running sum(exp)
            ],
        ),
        compiler_params=pltpu.CompilerParams(
            dimension_semantics=("arbitrary",),          # online softmax reduction over V tiles
            vmem_limit_bytes=32 * 1024 * 1024,
        ),
    )(idx_flat, params.emb_pad, params.wt_pad, params.bias_pad)

    out = out[:B, :V]
    return out[0] if squeeze else out


def reference_forward(indices, embeddings, weight, bias):
    idx2d = indices if indices.ndim == 2 else indices[None, :]
    embedded = embeddings[idx2d].mean(axis=1)            # (B, D)
    logits = embedded @ weight.T + bias                  # (B, V)
    out = jax.nn.log_softmax(logits, axis=-1)
    return out if indices.ndim == 2 else out[0]


if __name__ == "__main__":
    # Small shapes consistent with the module (embedding_dim = 100; vocab is
    # data-dependent -> small V; context = 2*window).  Batched contexts per
    # the performance review; tile_v raised so the W^T stream is not
    # grid-step-overhead bound.
    vocab_size = 5000
    embedding_dim = 100
    context_size = 4
    batch = 8
    tile_v = 2048            # V_pad = 6144 -> 3 tiles, exercises online log_softmax

    key = jax.random.PRNGKey(0)
    k_emb, k_w, k_b, k_idx = jax.random.split(key, 4)

    # nn.Embedding default init: N(0, 1); nn.Linear default: U(+-1/sqrt(in)).
    embeddings = jax.random.normal(k_emb, (vocab_size, embedding_dim),
                                   dtype=jnp.float32)
    bound = 1.0 / (embedding_dim ** 0.5)
    weight = jax.random.uniform(k_w, (vocab_size, embedding_dim),
                                minval=-bound, maxval=bound, dtype=jnp.float32)
    bias = jax.random.uniform(k_b, (vocab_size,),
                              minval=-bound, maxval=bound, dtype=jnp.float32)
    indices = jax.random.randint(k_idx, (batch, context_size), 0, vocab_size,
                                 dtype=jnp.int32)

    ref = reference_forward(indices, embeddings, weight, bias)

    # Default (recommended) path: bf16-streamed W^T, batched contexts.
    params_bf16 = prepare_cbow_params(embeddings, weight, bias, tile_v=tile_v)
    out_bf16 = cbow_forward(indices, params_bf16)
    jax.block_until_ready(out_bf16)
    assert out_bf16.shape == (batch, vocab_size)
    assert jnp.allclose(out_bf16, ref, atol=5e-2, rtol=5e-2), float(
        jnp.max(jnp.abs(out_bf16 - ref)))

    # Exactness check with f32-streamed weights.
    params_f32 = prepare_cbow_params(embeddings, weight, bias, tile_v=tile_v,
                                     weights_dtype=jnp.float32)
    out_f32 = cbow_forward(indices, params_f32)
    jax.block_until_ready(out_f32)
    assert jnp.allclose(out_f32, ref, atol=1e-4, rtol=1e-4), float(
        jnp.max(jnp.abs(out_f32 - ref)))

    # Original module semantics: a single (C,) context -> (V,) log-probs.
    single = cbow_forward(indices[0], params_f32)
    jax.block_until_ready(single)
    assert single.shape == (vocab_size,)
    assert jnp.allclose(single, ref[0], atol=1e-4, rtol=1e-4)

    print("KERNEL_OK")
</pallas_src>

<mosaic_0001>
module attributes {stable_mosaic.version = 11 : i64} {
  func.func @_cbow_kernel(%arg0: i32, %arg1: memref<32xi32, #tpu.memory_space<smem>>, %arg2: memref<5000x128xf32, #tpu.memory_space<any>>, %arg3: memref<128x2048xbf16, #tpu.memory_space<vmem>>, %arg4: memref<1x2048xf32, #tpu.memory_space<vmem>>, %arg5: memref<8x6144xf32, #tpu.memory_space<vmem>>, %arg6: memref<32x128xf32, #tpu.memory_space<vmem>>, %arg7: memref<32x!tpu.dma_semaphore, #tpu.memory_space<semaphore_mem>>, %arg8: memref<8x128xf32, #tpu.memory_space<vmem>>, %arg9: memref<8x128xbf16, #tpu.memory_space<vmem>>, %arg10: memref<8x1xf32, #tpu.memory_space<vmem>>, %arg11: memref<8x1xf32, #tpu.memory_space<vmem>>) attributes {dimension_semantics = [#tpu.dimension_semantics<arbitrary>], iteration_bounds = array<i64: 3>, scalar_prefetch = 1 : i64, scratch_operands = 6 : i64, tpu.core_type = #tpu.core_type<tc>, window_params = [{}, {transform_indices = @transform_1, window_bounds = array<i64: 128, 2048>}, {transform_indices = @transform_2, window_bounds = array<i64: 1, 2048>}, {pipeline_mode = #tpu.pipeline_mode<synchronous>, transform_indices = @transform_3, window_bounds = array<i64: 8, 6144>}]} {
    %c0_i32 = arith.constant 0 : i32
    %0 = arith.cmpi eq, %arg0, %c0_i32 : i32
    %1 = arith.extui %0 : i1 to i32
    %c0_i32_0 = arith.constant 0 : i32
    %2 = arith.cmpi ne, %1, %c0_i32_0 : i32
    scf.if %2 {
      %c0_20 = arith.constant 0 : index
      %33 = memref.load %arg1[%c0_20] : memref<32xi32, #tpu.memory_space<smem>>
      %c0_i32_21 = arith.constant 0 : i32
      %c0_i32_22 = arith.constant 0 : i32
      %c0_i32_23 = arith.constant 0 : i32
      %34 = tpu.memref_slice %arg2[%33, %c0_i32_23] : memref<5000x128xf32, #tpu.memory_space<any>> -> memref<1x128xf32, #tpu.memory_space<any>>
      %35 = tpu.memref_squeeze %34 : memref<1x128xf32, #tpu.memory_space<any>> -> memref<128xf32, #tpu.memory_space<any>>
      %c0_i32_24 = arith.constant 0 : i32
      %36 = tpu.memref_slice %arg6[%c0_i32_21, %c0_i32_24] : memref<32x128xf32, #tpu.memory_space<vmem>> -> memref<1x128xf32, #tpu.memory_space<vmem>>
      %37 = tpu.memref_squeeze %36 : memref<1x128xf32, #tpu.memory_space<vmem>> -> memref<128xf32, #tpu.memory_space<vmem>>
      %38 = tpu.memref_slice %arg7[%c0_i32_22] : memref<32x!tpu.dma_semaphore, #tpu.memory_space<semaphore_mem>> -> memref<1x!tpu.dma_semaphore, #tpu.memory_space<semaphore_mem>>
      %39 = tpu.memref_squeeze %38 : memref<1x!tpu.dma_semaphore, #tpu.memory_space<semaphore_mem>> -> memref<!tpu.dma_semaphore, #tpu.memory_space<semaphore_mem>>
      tpu.enqueue_dma source(%35 : memref<128xf32, #tpu.memory_space<any>>) target(%37 : memref<128xf32, #tpu.memory_space<vmem>>) target_semaphore(%39 : memref<!tpu.dma_semaphore, #tpu.memory_space<semaphore_mem>>)
      %c1 = arith.constant 1 : index
      %40 = memref.load %arg1[%c1] : memref<32xi32, #tpu.memory_space<smem>>
      %c1_i32 = arith.constant 1 : i32
      %c1_i32_25 = arith.constant 1 : i32
      %c0_i32_26 = arith.constant 0 : i32
      %41 = tpu.memref_slice %arg2[%40, %c0_i32_26] : memref<5000x128xf32, #tpu.memory_space<any>> -> memref<1x128xf32, #tpu.memory_space<any>>
      %42 = tpu.memref_squeeze %41 : memref<1x128xf32, #tpu.memory_space<any>> -> memref<128xf32, #tpu.memory_space<any>>
      %c0_i32_27 = arith.constant 0 : i32
      %43 = tpu.memref_slice %arg6[%c1_i32, %c0_i32_27] : memref<32x128xf32, #tpu.memory_space<vmem>> -> memref<1x128xf32, #tpu.memory_space<vmem>>
      %44 = tpu.memref_squeeze %43 : memref<1x128xf32, #tpu.memory_space<vmem>> -> memref<128xf32, #tpu.memory_space<vmem>>
      %45 = tpu.memref_slice %arg7[%c1_i32_25] : memref<32x!tpu.dma_semaphore, #tpu.memory_space<semaphore_mem>> -> memref<1x!tpu.dma_semaphore, #tpu.memory_space<semaphore_mem>>
      %46 = tpu.memref_squeeze %45 : memref<1x!tpu.dma_semaphore, #tpu.memory_space<semaphore_mem>> -> memref<!tpu.dma_semaphore, #tpu.memory_space<semaphore_mem>>
      tpu.enqueue_dma source(%42 : memref<128xf32, #tpu.memory_space<any>>) target(%44 : memref<128xf32, #tpu.memory_space<vmem>>) target_semaphore(%46 : memref<!tpu.dma_semaphore, #tpu.memory_space<semaphore_mem>>)
      %c2 = arith.constant 2 : index
      %47 = memref.load %arg1[%c2] : memref<32xi32, #tpu.memory_space<smem>>
      %c2_i32_28 = arith.constant 2 : i32
      %c2_i32_29 = arith.constant 2 : i32
      %c0_i32_30 = arith.constant 0 : i32
      %48 = tpu.memref_slice %arg2[%47, %c0_i32_30] : memref<5000x128xf32, #tpu.memory_space<any>> -> memref<1x128xf32, #tpu.memory_space<any>>
      %49 = tpu.memref_squeeze %48 : memref<1x128xf32, #tpu.memory_space<any>> -> memref<128xf32, #tpu.memory_space<any>>
      %c0_i32_31 = arith.constant 0 : i32
      %50 = tpu.memref_slice %arg6[%c2_i32_28, %c0_i32_31] : memref<32x128xf32, #tpu.memory_space<vmem>> -> memref<1x128xf32, #tpu.memory_space<vmem>>
      %51 = tpu.memref_squeeze %50 : memref<1x128xf32, #tpu.memory_space<vmem>> -> memref<128xf32, #tpu.memory_space<vmem>>
      %52 = tpu.memref_slice %arg7[%c2_i32_29] : memref<32x!tpu.dma_semaphore, #tpu.memory_space<semaphore_mem>> -> memref<1x!tpu.dma_semaphore, #tpu.memory_space<semaphore_mem>>
      %53 = tpu.memref_squeeze %52 : memref<1x!tpu.dma_semaphore, #tpu.memory_space<semaphore_mem>> -> memref<!tpu.dma_semaphore, #tpu.memory_space<semaphore_mem>>
      tpu.enqueue_dma source(%49 : memref<128xf32, #tpu.memory_space<any>>) target(%51 : memref<128xf32, #tpu.memory_space<vmem>>) target_semaphore(%53 : memref<!tpu.dma_semaphore, #tpu.memory_space<semaphore_mem>>)
      %c3 = arith.constant 3 : index
      %54 = memref.load %arg1[%c3] : memref<32xi32, #tpu.memory_space<smem>>
      %c3_i32 = arith.constant 3 : i32
      %c3_i32_32 = arith.constant 3 : i32
      %c0_i32_33 = arith.constant 0 : i32
      %55 = tpu.memref_slice %arg2[%54, %c0_i32_33] : memref<5000x128xf32, #tpu.memory_space<any>> -> memref<1x128xf32, #tpu.memory_space<any>>
      %56 = tpu.memref_squeeze %55 : memref<1x128xf32, #tpu.memory_space<any>> -> memref<128xf32, #tpu.memory_space<any>>
      %c0_i32_34 = arith.constant 0 : i32
      %57 = tpu.memref_slice %arg6[%c3_i32, %c0_i32_34] : memref<32x128xf32, #tpu.memory_space<vmem>> -> memref<1x128xf32, #tpu.memory_space<vmem>>
      %58 = tpu.memref_squeeze %57 : memref<1x128xf32, #tpu.memory_space<vmem>> -> memref<128xf32, #tpu.memory_space<vmem>>
      %59 = tpu.memref_slice %arg7[%c3_i32_32] : memref<32x!tpu.dma_semaphore, #tpu.memory_space<semaphore_mem>> -> memref<1x!tpu.dma_semaphore, #tpu.memory_space<semaphore_mem>>
      %60 = tpu.memref_squeeze %59 : memref<1x!tpu.dma_semaphore, #tpu.memory_space<semaphore_mem>> -> memref<!tpu.dma_semaphore, #tpu.memory_space<semaphore_mem>>
      tpu.enqueue_dma source(%56 : memref<128xf32, #tpu.memory_space<any>>) target(%58 : memref<128xf32, #tpu.memory_space<vmem>>) target_semaphore(%60 : memref<!tpu.dma_semaphore, #tpu.memory_space<semaphore_mem>>)
      %c4 = arith.constant 4 : index
      %61 = memref.load %arg1[%c4] : memref<32xi32, #tpu.memory_space<smem>>
      %c4_i32 = arith.constant 4 : i32
      %c4_i32_35 = arith.constant 4 : i32
      %c0_i32_36 = arith.constant 0 : i32
      %62 = tpu.memref_slice %arg2[%61, %c0_i32_36] : memref<5000x128xf32, #tpu.memory_space<any>> -> memref<1x128xf32, #tpu.memory_space<any>>
      %63 = tpu.memref_squeeze %62 : memref<1x128xf32, #tpu.memory_space<any>> -> memref<128xf32, #tpu.memory_space<any>>
      %c0_i32_37 = arith.constant 0 : i32
      %64 = tpu.memref_slice %arg6[%c4_i32, %c0_i32_37] : memref<32x128xf32, #tpu.memory_space<vmem>> -> memref<1x128xf32, #tpu.memory_space<vmem>>
      %65 = tpu.memref_squeeze %64 : memref<1x128xf32, #tpu.memory_space<vmem>> -> memref<128xf32, #tpu.memory_space<vmem>>
      %66 = tpu.memref_slice %arg7[%c4_i32_35] : memref<32x!tpu.dma_semaphore, #tpu.memory_space<semaphore_mem>> -> memref<1x!tpu.dma_semaphore, #tpu.memory_space<semaphore_mem>>
      %67 = tpu.memref_squeeze %66 : memref<1x!tpu.dma_semaphore, #tpu.memory_space<semaphore_mem>> -> memref<!tpu.dma_semaphore, #tpu.memory_space<semaphore_mem>>
      tpu.enqueue_dma source(%63 : memref<128xf32, #tpu.memory_space<any>>) target(%65 : memref<128xf32, #tpu.memory_space<vmem>>) target_semaphore(%67 : memref<!tpu.dma_semaphore, #tpu.memory_space<semaphore_mem>>)
      %c5 = arith.constant 5 : index
      %68 = memref.load %arg1[%c5] : memref<32xi32, #tpu.memory_space<smem>>
      %c5_i32 = arith.constant 5 : i32
      %c5_i32_38 = arith.constant 5 : i32
      %c0_i32_39 = arith.constant 0 : i32
      %69 = tpu.memref_slice %arg2[%68, %c0_i32_39] : memref<5000x128xf32, #tpu.memory_space<any>> -> memref<1x128xf32, #tpu.memory_space<any>>
      %70 = tpu.memref_squeeze %69 : memref<1x128xf32, #tpu.memory_space<any>> -> memref<128xf32, #tpu.memory_space<any>>
      %c0_i32_40 = arith.constant 0 : i32
      %71 = tpu.memref_slice %arg6[%c5_i32, %c0_i32_40] : memref<32x128xf32, #tpu.memory_space<vmem>> -> memref<1x128xf32, #tpu.memory_space<vmem>>
      %72 = tpu.memref_squeeze %71 : memref<1x128xf32, #tpu.memory_space<vmem>> -> memref<128xf32, #tpu.memory_space<vmem>>
      %73 = tpu.memref_slice %arg7[%c5_i32_38] : memref<32x!tpu.dma_semaphore, #tpu.memory_space<semaphore_mem>> -> memref<1x!tpu.dma_semaphore, #tpu.memory_space<semaphore_mem>>
      %74 = tpu.memref_squeeze %73 : memref<1x!tpu.dma_semaphore, #tpu.memory_space<semaphore_mem>> -> memref<!tpu.dma_semaphore, #tpu.memory_space<semaphore_mem>>
      tpu.enqueue_dma source(%70 : memref<128xf32, #tpu.memory_space<any>>) target(%72 : memref<128xf32, #tpu.memory_space<vmem>>) target_semaphore(%74 : memref<!tpu.dma_semaphore, #tpu.memory_space<semaphore_mem>>)
      %c6 = arith.constant 6 : index
      %75 = memref.load %arg1[%c6] : memref<32xi32, #tpu.memory_space<smem>>
      %c6_i32 = arith.constant 6 : i32
      %c6_i32_41 = arith.constant 6 : i32
      %c0_i32_42 = arith.constant 0 : i32
      %76 = tpu.memref_slice %arg2[%75, %c0_i32_42] : memref<5000x128xf32, #tpu.memory_space<any>> -> memref<1x128xf32, #tpu.memory_space<any>>
      %77 = tpu.memref_squeeze %76 : memref<1x128xf32, #tpu.memory_space<any>> -> memref<128xf32, #tpu.memory_space<any>>
      %c0_i32_43 = arith.constant 0 : i32
      %78 = tpu.memref_slice %arg6[%c6_i32, %c0_i32_43] : memref<32x128xf32, #tpu.memory_space<vmem>> -> memref<1x128xf32, #tpu.memory_space<vmem>>
      %79 = tpu.memref_squeeze %78 : memref<1x128xf32, #tpu.memory_space<vmem>> -> memref<128xf32, #tpu.memory_space<vmem>>
      %80 = tpu.memref_slice %arg7[%c6_i32_41] : memref<32x!tpu.dma_semaphore, #tpu.memory_space<semaphore_mem>> -> memref<1x!tpu.dma_semaphore, #tpu.memory_space<semaphore_mem>>
      %81 = tpu.memref_squeeze %80 : memref<1x!tpu.dma_semaphore, #tpu.memory_space<semaphore_mem>> -> memref<!tpu.dma_semaphore, #tpu.memory_space<semaphore_mem>>
      tpu.enqueue_dma source(%77 : memref<128xf32, #tpu.memory_space<any>>) target(%79 : memref<128xf32, #tpu.memory_space<vmem>>) target_semaphore(%81 : memref<!tpu.dma_semaphore, #tpu.memory_space<semaphore_mem>>)
      %c7 = arith.constant 7 : index
      %82 = memref.load %arg1[%c7] : memref<32xi32, #tpu.memory_space<smem>>
      %c7_i32 = arith.constant 7 : i32
      %c7_i32_44 = arith.constant 7 : i32
      %c0_i32_45 = arith.constant 0 : i32
      %83 = tpu.memref_slice %arg2[%82, %c0_i32_45] : memref<5000x128xf32, #tpu.memory_space<any>> -> memref<1x128xf32, #tpu.memory_space<any>>
      %84 = tpu.memref_squeeze %83 : memref<1x128xf32, #tpu.memory_space<any>> -> memref<128xf32, #tpu.memory_space<any>>
      %c0_i32_46 = arith.constant 0 : i32
      %85 = tpu.memref_slice %arg6[%c7_i32, %c0_i32_46] : memref<32x128xf32, #tpu.memory_space<vmem>> -> memref<1x128xf32, #tpu.memory_space<vmem>>
      %86 = tpu.memref_squeeze %85 : memref<1x128xf32, #tpu.memory_space<vmem>> -> memref<128xf32, #tpu.memory_space<vmem>>
      %87 = tpu.memref_slice %arg7[%c7_i32_44] : memref<32x!tpu.dma_semaphore, #tpu.memory_space<semaphore_mem>> -> memref<1x!tpu.dma_semaphore, #tpu.memory_space<semaphore_mem>>
      %88 = tpu.memref_squeeze %87 : memref<1x!tpu.dma_semaphore, #tpu.memory_space<semaphore_mem>> -> memref<!tpu.dma_semaphore, #tpu.memory_space<semaphore_mem>>
      tpu.enqueue_dma source(%84 : memref<128xf32, #tpu.memory_space<any>>) target(%86 : memref<128xf32, #tpu.memory_space<vmem>>) target_semaphore(%88 : memref<!tpu.dma_semaphore, #tpu.memory_space<semaphore_mem>>)
      %c8 = arith.constant 8 : index
      %89 = memref.load %arg1[%c8] : memref<32xi32, #tpu.memory_space<smem>>
      %c8_i32 = arith.constant 8 : i32
      %c8_i32_47 = arith.constant 8 : i32
      %c0_i32_48 = arith.constant 0 : i32
      %90 = tpu.memref_slice %arg2[%89, %c0_i32_48] : memref<5000x128xf32, #tpu.memory_space<any>> -> memref<1x128xf32, #tpu.memory_space<any>>
      %91 = tpu.memref_squeeze %90 : memref<1x128xf32, #tpu.memory_space<any>> -> memref<128xf32, #tpu.memory_space<any>>
      %c0_i32_49 = arith.constant 0 : i32
      %92 = tpu.memref_slice %arg6[%c8_i32, %c0_i32_49] : memref<32x128xf32, #tpu.memory_space<vmem>> -> memref<1x128xf32, #tpu.memory_space<vmem>>
      %93 = tpu.memref_squeeze %92 : memref<1x128xf32, #tpu.memory_space<vmem>> -> memref<128xf32, #tpu.memory_space<vmem>>
      %94 = tpu.memref_slice %arg7[%c8_i32_47] : memref<32x!tpu.dma_semaphore, #tpu.memory_space<semaphore_mem>> -> memref<1x!tpu.dma_semaphore, #tpu.memory_space<semaphore_mem>>
      %95 = tpu.memref_squeeze %94 : memref<1x!tpu.dma_semaphore, #tpu.memory_space<semaphore_mem>> -> memref<!tpu.dma_semaphore, #tpu.memory_space<semaphore_mem>>
      tpu.enqueue_dma source(%91 : memref<128xf32, #tpu.memory_space<any>>) target(%93 : memref<128xf32, #tpu.memory_space<vmem>>) target_semaphore(%95 : memref<!tpu.dma_semaphore, #tpu.memory_space<semaphore_mem>>)
      %c9 = arith.constant 9 : index
      %96 = memref.load %arg1[%c9] : memref<32xi32, #tpu.memory_space<smem>>
      %c9_i32 = arith.constant 9 : i32
      %c9_i32_50 = arith.constant 9 : i32
      %c0_i32_51 = arith.constant 0 : i32
      %97 = tpu.memref_slice %arg2[%96, %c0_i32_51] : memref<5000x128xf32, #tpu.memory_space<any>> -> memref<1x128xf32, #tpu.memory_space<any>>
      %98 = tpu.memref_squeeze %97 : memref<1x128xf32, #tpu.memory_space<any>> -> memref<128xf32, #tpu.memory_space<any>>
      %c0_i32_52 = arith.constant 0 : i32
      %99 = tpu.memref_slice %arg6[%c9_i32, %c0_i32_52] : memref<32x128xf32, #tpu.memory_space<vmem>> -> memref<1x128xf32, #tpu.memory_space<vmem>>
      %100 = tpu.memref_squeeze %99 : memref<1x128xf32, #tpu.memory_space<vmem>> -> memref<128xf32, #tpu.memory_space<vmem>>
      %101 = tpu.memref_slice %arg7[%c9_i32_50] : memref<32x!tpu.dma_semaphore, #tpu.memory_space<semaphore_mem>> -> memref<1x!tpu.dma_semaphore, #tpu.memory_space<semaphore_mem>>
      %102 = tpu.memref_squeeze %101 : memref<1x!tpu.dma_semaphore, #tpu.memory_space<semaphore_mem>> -> memref<!tpu.dma_semaphore, #tpu.memory_space<semaphore_mem>>
      tpu.enqueue_dma source(%98 : memref<128xf32, #tpu.memory_space<any>>) target(%100 : memref<128xf32, #tpu.memory_space<vmem>>) target_semaphore(%102 : memref<!tpu.dma_semaphore, #tpu.memory_space<semaphore_mem>>)
      %c10 = arith.constant 10 : index
      %103 = memref.load %arg1[%c10] : memref<32xi32, #tpu.memory_space<smem>>
      %c10_i32 = arith.constant 10 : i32
      %c10_i32_53 = arith.constant 10 : i32
      %c0_i32_54 = arith.constant 0 : i32
      %104 = tpu.memref_slice %arg2[%103, %c0_i32_54] : memref<5000x128xf32, #tpu.memory_space<any>> -> memref<1x128xf32, #tpu.memory_space<any>>
      %105 = tpu.memref_squeeze %104 : memref<1x128xf32, #tpu.memory_space<any>> -> memref<128xf32, #tpu.memory_space<any>>
      %c0_i32_55 = arith.constant 0 : i32
      %106 = tpu.memref_slice %arg6[%c10_i32, %c0_i32_55] : memref<32x128xf32, #tpu.memory_space<vmem>> -> memref<1x128xf32, #tpu.memory_space<vmem>>
      %107 = tpu.memref_squeeze %106 : memref<1x128xf32, #tpu.memory_space<vmem>> -> memref<128xf32, #tpu.memory_space<vmem>>
      %108 = tpu.memref_slice %arg7[%c10_i32_53] : memref<32x!tpu.dma_semaphore, #tpu.memory_space<semaphore_mem>> -> memref<1x!tpu.dma_semaphore, #tpu.memory_space<semaphore_mem>>
      %109 = tpu.memref_squeeze %108 : memref<1x!tpu.dma_semaphore, #tpu.memory_space<semaphore_mem>> -> memref<!tpu.dma_semaphore, #tpu.memory_space<semaphore_mem>>
      tpu.enqueue_dma source(%105 : memref<128xf32, #tpu.memory_space<any>>) target(%107 : memref<128xf32, #tpu.memory_space<vmem>>) target_semaphore(%109 : memref<!tpu.dma_semaphore, #tpu.memory_space<semaphore_mem>>)
      %c11 = arith.constant 11 : index
      %110 = memref.load %arg1[%c11] : memref<32xi32, #tpu.memory_space<smem>>
      %c11_i32 = arith.constant 11 : i32
      %c11_i32_56 = arith.constant 11 : i32
      %c0_i32_57 = arith.constant 0 : i32
      %111 = tpu.memref_slice %arg2[%110, %c0_i32_57] : memref<5000x128xf32, #tpu.memory_space<any>> -> memref<1x128xf32, #tpu.memory_space<any>>
      %112 = tpu.memref_squeeze %111 : memref<1x128xf32, #tpu.memory_space<any>> -> memref<128xf32, #tpu.memory_space<any>>
      %c0_i32_58 = arith.constant 0 : i32
      %113 = tpu.memref_slice %arg6[%c11_i32, %c0_i32_58] : memref<32x128xf32, #tpu.memory_space<vmem>> -> memref<1x128xf32, #tpu.memory_space<vmem>>
      %114 = tpu.memref_squeeze %113 : memref<1x128xf32, #tpu.memory_space<vmem>> -> memref<128xf32, #tpu.memory_space<vmem>>
      %115 = tpu.memref_slice %arg7[%c11_i32_56] : memref<32x!tpu.dma_semaphore, #tpu.memory_space<semaphore_mem>> -> memref<1x!tpu.dma_semaphore, #tpu.memory_space<semaphore_mem>>
      %116 = tpu.memref_squeeze %115 : memref<1x!tpu.dma_semaphore, #tpu.memory_space<semaphore_mem>> -> memref<!tpu.dma_semaphore, #tpu.memory_space<semaphore_mem>>
      tpu.enqueue_dma source(%112 : memref<128xf32, #tpu.memory_space<any>>) target(%114 : memref<128xf32, #tpu.memory_space<vmem>>) target_semaphore(%116 : memref<!tpu.dma_semaphore, #tpu.memory_space<semaphore_mem>>)
      %c12 = arith.constant 12 : index
      %117 = memref.load %arg1[%c12] : memref<32xi32, #tpu.memory_space<smem>>
      %c12_i32 = arith.constant 12 : i32
      %c12_i32_59 = arith.constant 12 : i32
      %c0_i32_60 = arith.constant 0 : i32
      %118 = tpu.memref_slice %arg2[%117, %c0_i32_60] : memref<5000x128xf32, #tpu.memory_space<any>> -> memref<1x128xf32, #tpu.memory_space<any>>
      %119 = tpu.memref_squeeze %118 : memref<1x128xf32, #tpu.memory_space<any>> -> memref<128xf32, #tpu.memory_space<any>>
      %c0_i32_61 = arith.constant 0 : i32
      %120 = tpu.memref_slice %arg6[%c12_i32, %c0_i32_61] : memref<32x128xf32, #tpu.memory_space<vmem>> -> memref<1x128xf32, #tpu.memory_space<vmem>>
      %121 = tpu.memref_squeeze %120 : memref<1x128xf32, #tpu.memory_space<vmem>> -> memref<128xf32, #tpu.memory_space<vmem>>
      %122 = tpu.memref_slice %arg7[%c12_i32_59] : memref<32x!tpu.dma_semaphore, #tpu.memory_space<semaphore_mem>> -> memref<1x!tpu.dma_semaphore, #tpu.memory_space<semaphore_mem>>
      %123 = tpu.memref_squeeze %122 : memref<1x!tpu.dma_semaphore, #tpu.memory_space<semaphore_mem>> -> memref<!tpu.dma_semaphore, #tpu.memory_space<semaphore_mem>>
      tpu.enqueue_dma source(%119 : memref<128xf32, #tpu.memory_space<any>>) target(%121 : memref<128xf32, #tpu.memory_space<vmem>>) target_semaphore(%123 : memref<!tpu.dma_semaphore, #tpu.memory_space<semaphore_mem>>)
      %c13 = arith.constant 13 : index
      %124 = memref.load %arg1[%c13] : memref<32xi32, #tpu.memory_space<smem>>
      %c13_i32 = arith.constant 13 : i32
      %c13_i32_62 = arith.constant 13 : i32
      %c0_i32_63 = arith.constant 0 : i32
      %125 = tpu.memref_slice %arg2[%124, %c0_i32_63] : memref<5000x128xf32, #tpu.memory_space<any>> -> memref<1x128xf32, #tpu.memory_space<any>>
      %126 = tpu.memref_squeeze %125 : memref<1x128xf32, #tpu.memory_space<any>> -> memref<128xf32, #tpu.memory_space<any>>
      %c0_i32_64 = arith.constant 0 : i32
      %127 = tpu.memref_slice %arg6[%c13_i32, %c0_i32_64] : memref<32x128xf32, #tpu.memory_space<vmem>> -> memref<1x128xf32, #tpu.memory_space<vmem>>
      %128 = tpu.memref_squeeze %127 : memref<1x128xf32, #tpu.memory_space<vmem>> -> memref<128xf32, #tpu.memory_space<vmem>>
      %129 = tpu.memref_slice %arg7[%c13_i32_62] : memref<32x!tpu.dma_semaphore, #tpu.memory_space<semaphore_mem>> -> memref<1x!tpu.dma_semaphore, #tpu.memory_space<semaphore_mem>>
      %130 = tpu.memref_squeeze %129 : memref<1x!tpu.dma_semaphore, #tpu.memory_space<semaphore_mem>> -> memref<!tpu.dma_semaphore, #tpu.memory_space<semaphore_mem>>
      tpu.enqueue_dma source(%126 : memref<128xf32, #tpu.memory_space<any>>) target(%128 : memref<128xf32, #tpu.memory_space<vmem>>) target_semaphore(%130 : memref<!tpu.dma_semaphore, #tpu.memory_space<semaphore_mem>>)
      %c14 = arith.constant 14 : index
      %131 = memref.load %arg1[%c14] : memref<32xi32, #tpu.memory_space<smem>>
      %c14_i32 = arith.constant 14 : i32
      %c14_i32_65 = arith.constant 14 : i32
      %c0_i32_66 = arith.constant 0 : i32
      %132 = tpu.memref_slice %arg2[%131, %c0_i32_66] : memref<5000x128xf32, #tpu.memory_space<any>> -> memref<1x128xf32, #tpu.memory_space<any>>
      %133 = tpu.memref_squeeze %132 : memref<1x128xf32, #tpu.memory_space<any>> -> memref<128xf32, #tpu.memory_space<any>>
      %c0_i32_67 = arith.constant 0 : i32
      %134 = tpu.memref_slice %arg6[%c14_i32, %c0_i32_67] : memref<32x128xf32, #tpu.memory_space<vmem>> -> memref<1x128xf32, #tpu.memory_space<vmem>>
      %135 = tpu.memref_squeeze %134 : memref<1x128xf32, #tpu.memory_space<vmem>> -> memref<128xf32, #tpu.memory_space<vmem>>
      %136 = tpu.memref_slice %arg7[%c14_i32_65] : memref<32x!tpu.dma_semaphore, #tpu.memory_space<semaphore_mem>> -> memref<1x!tpu.dma_semaphore, #tpu.memory_space<semaphore_mem>>
      %137 = tpu.memref_squeeze %136 : memref<1x!tpu.dma_semaphore, #tpu.memory_space<semaphore_mem>> -> memref<!tpu.dma_semaphore, #tpu.memory_space<semaphore_mem>>
      tpu.enqueue_dma source(%133 : memref<128xf32, #tpu.memory_space<any>>) target(%135 : memref<128xf32, #tpu.memory_space<vmem>>) target_semaphore(%137 : memref<!tpu.dma_semaphore, #tpu.memory_space<semaphore_mem>>)
      %c15 = arith.constant 15 : index
      %138 = memref.load %arg1[%c15] : memref<32xi32, #tpu.memory_space<smem>>
      %c15_i32 = arith.constant 15 : i32
      %c15_i32_68 = arith.constant 15 : i32
      %c0_i32_69 = arith.constant 0 : i32
      %139 = tpu.memref_slice %arg2[%138, %c0_i32_69] : memref<5000x128xf32, #tpu.memory_space<any>> -> memref<1x128xf32, #tpu.memory_space<any>>
      %140 = tpu.memref_squeeze %139 : memref<1x128xf32, #tpu.memory_space<any>> -> memref<128xf32, #tpu.memory_space<any>>
      %c0_i32_70 = arith.constant 0 : i32
      %141 = tpu.memref_slice %arg6[%c15_i32, %c0_i32_70] : memref<32x128xf32, #tpu.memory_space<vmem>> -> memref<1x128xf32, #tpu.memory_space<vmem>>
      %142 = tpu.memref_squeeze %141 : memref<1x128xf32, #tpu.memory_space<vmem>> -> memref<128xf32, #tpu.memory_space<vmem>>
      %143 = tpu.memref_slice %arg7[%c15_i32_68] : memref<32x!tpu.dma_semaphore, #tpu.memory_space<semaphore_mem>> -> memref<1x!tpu.dma_semaphore, #tpu.memory_space<semaphore_mem>>
      %144 = tpu.memref_squeeze %143 : memref<1x!tpu.dma_semaphore, #tpu.memory_space<semaphore_mem>> -> memref<!tpu.dma_semaphore, #tpu.memory_space<semaphore_mem>>
      tpu.enqueue_dma source(%140 : memref<128xf32, #tpu.memory_space<any>>) target(%142 : memref<128xf32, #tpu.memory_space<vmem>>) target_semaphore(%144 : memref<!tpu.dma_semaphore, #tpu.memory_space<semaphore_mem>>)
      %c16 = arith.constant 16 : index
      %145 = memref.load %arg1[%c16] : memref<32xi32, #tpu.memory_space<smem>>
      %c16_i32 = arith.constant 16 : i32
      %c16_i32_71 = arith.constant 16 : i32
      %c0_i32_72 = arith.constant 0 : i32
      %146 = tpu.memref_slice %arg2[%145, %c0_i32_72] : memref<5000x128xf32, #tpu.memory_space<any>> -> memref<1x128xf32, #tpu.memory_space<any>>
      %147 = tpu.memref_squeeze %146 : memref<1x128xf32, #tpu.memory_space<any>> -> memref<128xf32, #tpu.memory_space<any>>
      %c0_i32_73 = arith.constant 0 : i32
      %148 = tpu.memref_slice %arg6[%c16_i32, %c0_i32_73] : memref<32x128xf32, #tpu.memory_space<vmem>> -> memref<1x128xf32, #tpu.memory_space<vmem>>
      %149 = tpu.memref_squeeze %148 : memref<1x128xf32, #tpu.memory_space<vmem>> -> memref<128xf32, #tpu.memory_space<vmem>>
      %150 = tpu.memref_slice %arg7[%c16_i32_71] : memref<32x!tpu.dma_semaphore, #tpu.memory_space<semaphore_mem>> -> memref<1x!tpu.dma_semaphore, #tpu.memory_space<semaphore_mem>>
      %151 = tpu.memref_squeeze %150 : memref<1x!tpu.dma_semaphore, #tpu.memory_space<semaphore_mem>> -> memref<!tpu.dma_semaphore, #tpu.memory_space<semaphore_mem>>
      tpu.enqueue_dma source(%147 : memref<128xf32, #tpu.memory_space<any>>) target(%149 : memref<128xf32, #tpu.memory_space<vmem>>) target_semaphore(%151 : memref<!tpu.dma_semaphore, #tpu.memory_space<semaphore_mem>>)
      %c17 = arith.constant 17 : index
      %152 = memref.load %arg1[%c17] : memref<32xi32, #tpu.memory_space<smem>>
      %c17_i32 = arith.constant 17 : i32
      %c17_i32_74 = arith.constant 17 : i32
      %c0_i32_75 = arith.constant 0 : i32
      %153 = tpu.memref_slice %arg2[%152, %c0_i32_75] : memref<5000x128xf32, #tpu.memory_space<any>> -> memref<1x128xf32, #tpu.memory_space<any>>
      %154 = tpu.memref_squeeze %153 : memref<1x128xf32, #tpu.memory_space<any>> -> memref<128xf32, #tpu.memory_space<any>>
      %c0_i32_76 = arith.constant 0 : i32
      %155 = tpu.memref_slice %arg6[%c17_i32, %c0_i32_76] : memref<32x128xf32, #tpu.memory_space<vmem>> -> memref<1x128xf32, #tpu.memory_space<vmem>>
      %156 = tpu.memref_squeeze %155 : memref<1x128xf32, #tpu.memory_space<vmem>> -> memref<128xf32, #tpu.memory_space<vmem>>
      %157 = tpu.memref_slice %arg7[%c17_i32_74] : memref<32x!tpu.dma_semaphore, #tpu.memory_space<semaphore_mem>> -> memref<1x!tpu.dma_semaphore, #tpu.memory_space<semaphore_mem>>
      %158 = tpu.memref_squeeze %157 : memref<1x!tpu.dma_semaphore, #tpu.memory_space<semaphore_mem>> -> memref<!tpu.dma_semaphore, #tpu.memory_space<semaphore_mem>>
      tpu.enqueue_dma source(%154 : memref<128xf32, #tpu.memory_space<any>>) target(%156 : memref<128xf32, #tpu.memory_space<vmem>>) target_semaphore(%158 : memref<!tpu.dma_semaphore, #tpu.memory_space<semaphore_mem>>)
      %c18 = arith.constant 18 : index
      %159 = memref.load %arg1[%c18] : memref<32xi32, #tpu.memory_space<smem>>
      %c18_i32 = arith.constant 18 : i32
      %c18_i32_77 = arith.constant 18 : i32
      %c0_i32_78 = arith.constant 0 : i32
      %160 = tpu.memref_slice %arg2[%159, %c0_i32_78] : memref<5000x128xf32, #tpu.memory_space<any>> -> memref<1x128xf32, #tpu.memory_space<any>>
      %161 = tpu.memref_squeeze %160 : memref<1x128xf32, #tpu.memory_space<any>> -> memref<128xf32, #tpu.memory_space<any>>
      %c0_i32_79 = arith.constant 0 : i32
      %162 = tpu.memref_slice %arg6[%c18_i32, %c0_i32_79] : memref<32x128xf32, #tpu.memory_space<vmem>> -> memref<1x128xf32, #tpu.memory_space<vmem>>
      %163 = tpu.memref_squeeze %162 : memref<1x128xf32, #tpu.memory_space<vmem>> -> memref<128xf32, #tpu.memory_space<vmem>>
      %164 = tpu.memref_slice %arg7[%c18_i32_77] : memref<32x!tpu.dma_semaphore, #tpu.memory_space<semaphore_mem>> -> memref<1x!tpu.dma_semaphore, #tpu.memory_space<semaphore_mem>>
      %165 = tpu.memref_squeeze %164 : memref<1x!tpu.dma_semaphore, #tpu.memory_space<semaphore_mem>> -> memref<!tpu.dma_semaphore, #tpu.memory_space<semaphore_mem>>
      tpu.enqueue_dma source(%161 : memref<128xf32, #tpu.memory_space<any>>) target(%163 : memref<128xf32, #tpu.memory_space<vmem>>) target_semaphore(%165 : memref<!tpu.dma_semaphore, #tpu.memory_space<semaphore_mem>>)
      %c19 = arith.constant 19 : index
      %166 = memref.load %arg1[%c19] : memref<32xi32, #tpu.memory_space<smem>>
      %c19_i32 = arith.constant 19 : i32
      %c19_i32_80 = arith.constant 19 : i32
      %c0_i32_81 = arith.constant 0 : i32
      %167 = tpu.memref_slice %arg2[%166, %c0_i32_81] : memref<5000x128xf32, #tpu.memory_space<any>> -> memref<1x128xf32, #tpu.memory_space<any>>
      %168 = tpu.memref_squeeze %167 : memref<1x128xf32, #tpu.memory_space<any>> -> memref<128xf32, #tpu.memory_space<any>>
      %c0_i32_82 = arith.constant 0 : i32
      %169 = tpu.memref_slice %arg6[%c19_i32, %c0_i32_82] : memref<32x128xf32, #tpu.memory_space<vmem>> -> memref<1x128xf32, #tpu.memory_space<vmem>>
      %170 = tpu.memref_squeeze %169 : memref<1x128xf32, #tpu.memory_space<vmem>> -> memref<128xf32, #tpu.memory_space<vmem>>
      %171 = tpu.memref_slice %arg7[%c19_i32_80] : memref<32x!tpu.dma_semaphore, #tpu.memory_space<semaphore_mem>> -> memref<1x!tpu.dma_semaphore, #tpu.memory_space<semaphore_mem>>
      %172 = tpu.memref_squeeze %171 : memref<1x!tpu.dma_semaphore, #tpu.memory_space<semaphore_mem>> -> memref<!tpu.dma_semaphore, #tpu.memory_space<semaphore_mem>>
      tpu.enqueue_dma source(%168 : memref<128xf32, #tpu.memory_space<any>>) target(%170 : memref<128xf32, #tpu.memory_space<vmem>>) target_semaphore(%172 : memref<!tpu.dma_semaphore, #tpu.memory_space<semaphore_mem>>)
      %c20 = arith.constant 20 : index
      %173 = memref.load %arg1[%c20] : memref<32xi32, #tpu.memory_space<smem>>
      %c20_i32 = arith.constant 20 : i32
      %c20_i32_83 = arith.constant 20 : i32
      %c0_i32_84 = arith.constant 0 : i32
      %174 = tpu.memref_slice %arg2[%173, %c0_i32_84] : memref<5000x128xf32, #tpu.memory_space<any>> -> memref<1x128xf32, #tpu.memory_space<any>>
      %175 = tpu.memref_squeeze %174 : memref<1x128xf32, #tpu.memory_space<any>> -> memref<128xf32, #tpu.memory_space<any>>
      %c0_i32_85 = arith.constant 0 : i32
      %176 = tpu.memref_slice %arg6[%c20_i32, %c0_i32_85] : memref<32x128xf32, #tpu.memory_space<vmem>> -> memref<1x128xf32, #tpu.memory_space<vmem>>
      %177 = tpu.memref_squeeze %176 : memref<1x128xf32, #tpu.memory_space<vmem>> -> memref<128xf32, #tpu.memory_space<vmem>>
      %178 = tpu.memref_slice %arg7[%c20_i32_83] : memref<32x!tpu.dma_semaphore, #tpu.memory_space<semaphore_mem>> -> memref<1x!tpu.dma_semaphore, #tpu.memory_space<semaphore_mem>>
      %179 = tpu.memref_squeeze %178 : memref<1x!tpu.dma_semaphore, #tpu.memory_space<semaphore_mem>> -> memref<!tpu.dma_semaphore, #tpu.memory_space<semaphore_mem>>
      tpu.enqueue_dma source(%175 : memref<128xf32, #tpu.memory_space<any>>) target(%177 : memref<128xf32, #tpu.memory_space<vmem>>) target_semaphore(%179 : memref<!tpu.dma_semaphore, #tpu.memory_space<semaphore_mem>>)
      %c21 = arith.constant 21 : index
      %180 = memref.load %arg1[%c21] : memref<32xi32, #tpu.memory_space<smem>>
      %c21_i32 = arith.constant 21 : i32
      %c21_i32_86 = arith.constant 21 : i32
      %c0_i32_87 = arith.constant 0 : i32
      %181 = tpu.memref_slice %arg2[%180, %c0_i32_87] : memref<5000x128xf32, #tpu.memory_space<any>> -> memref<1x128xf32, #tpu.memory_space<any>>
      %182 = tpu.memref_squeeze %181 : memref<1x128xf32, #tpu.memory_space<any>> -> memref<128xf32, #tpu.memory_space<any>>
      %c0_i32_88 = arith.constant 0 : i32
      %183 = tpu.memref_slice %arg6[%c21_i32, %c0_i32_88] : memref<32x128xf32, #tpu.memory_space<vmem>> -> memref<1x128xf32, #tpu.memory_space<vmem>>
      %184 = tpu.memref_squeeze %183 : memref<1x128xf32, #tpu.memory_space<vmem>> -> memref<128xf32, #tpu.memory_space<vmem>>
      %185 = tpu.memref_slice %arg7[%c21_i32_86] : memref<32x!tpu.dma_semaphore, #tpu.memory_space<semaphore_mem>> -> memref<1x!tpu.dma_semaphore, #tpu.memory_space<semaphore_mem>>
      %186 = tpu.memref_squeeze %185 : memref<1x!tpu.dma_semaphore, #tpu.memory_space<semaphore_mem>> -> memref<!tpu.dma_semaphore, #tpu.memory_space<semaphore_mem>>
      tpu.enqueue_dma source(%182 : memref<128xf32, #tpu.memory_space<any>>) target(%184 : memref<128xf32, #tpu.memory_space<vmem>>) target_semaphore(%186 : memref<!tpu.dma_semaphore, #tpu.memory_space<semaphore_mem>>)
      %c22 = arith.constant 22 : index
      %187 = memref.load %arg1[%c22] : memref<32xi32, #tpu.memory_space<smem>>
      %c22_i32 = arith.constant 22 : i32
      %c22_i32_89 = arith.constant 22 : i32
      %c0_i32_90 = arith.constant 0 : i32
      %188 = tpu.memref_slice %arg2[%187, %c0_i32_90] : memref<5000x128xf32, #tpu.memory_space<any>> -> memref<1x128xf32, #tpu.memory_space<any>>
      %189 = tpu.memref_squeeze %188 : memref<1x128xf32, #tpu.memory_space<any>> -> memref<128xf32, #tpu.memory_space<any>>
      %c0_i32_91 = arith.constant 0 : i32
      %190 = tpu.memref_slice %arg6[%c22_i32, %c0_i32_91] : memref<32x128xf32, #tpu.memory_space<vmem>> -> memref<1x128xf32, #tpu.memory_space<vmem>>
      %191 = tpu.memref_squeeze %190 : memref<1x128xf32, #tpu.memory_space<vmem>> -> memref<128xf32, #tpu.memory_space<vmem>>
      %192 = tpu.memref_slice %arg7[%c22_i32_89] : memref<32x!tpu.dma_semaphore, #tpu.memory_space<semaphore_mem>> -> memref<1x!tpu.dma_semaphore, #tpu.memory_space<semaphore_mem>>
      %193 = tpu.memref_squeeze %192 : memref<1x!tpu.dma_semaphore, #tpu.memory_space<semaphore_mem>> -> memref<!tpu.dma_semaphore, #tpu.memory_space<semaphore_mem>>
      tpu.enqueue_dma source(%189 : memref<128xf32, #tpu.memory_space<any>>) target(%191 : memref<128xf32, #tpu.memory_space<vmem>>) target_semaphore(%193 : memref<!tpu.dma_semaphore, #tpu.memory_space<semaphore_mem>>)
      %c23 = arith.constant 23 : index
      %194 = memref.load %arg1[%c23] : memref<32xi32, #tpu.memory_space<smem>>
      %c23_i32 = arith.constant 23 : i32
      %c23_i32_92 = arith.constant 23 : i32
      %c0_i32_93 = arith.constant 0 : i32
      %195 = tpu.memref_slice %arg2[%194, %c0_i32_93] : memref<5000x128xf32, #tpu.memory_space<any>> -> memref<1x128xf32, #tpu.memory_space<any>>
      %196 = tpu.memref_squeeze %195 : memref<1x128xf32, #tpu.memory_space<any>> -> memref<128xf32, #tpu.memory_space<any>>
      %c0_i32_94 = arith.constant 0 : i32
      %197 = tpu.memref_slice %arg6[%c23_i32, %c0_i32_94] : memref<32x128xf32, #tpu.memory_space<vmem>> -> memref<1x128xf32, #tpu.memory_space<vmem>>
      %198 = tpu.memref_squeeze %197 : memref<1x128xf32, #tpu.memory_space<vmem>> -> memref<128xf32, #tpu.memory_space<vmem>>
      %199 = tpu.memref_slice %arg7[%c23_i32_92] : memref<32x!tpu.dma_semaphore, #tpu.memory_space<semaphore_mem>> -> memref<1x!tpu.dma_semaphore, #tpu.memory_space<semaphore_mem>>
      %200 = tpu.memref_squeeze %199 : memref<1x!tpu.dma_semaphore, #tpu.memory_space<semaphore_mem>> -> memref<!tpu.dma_semaphore, #tpu.memory_space<semaphore_mem>>
      tpu.enqueue_dma source(%196 : memref<128xf32, #tpu.memory_space<any>>) target(%198 : memref<128xf32, #tpu.memory_space<vmem>>) target_semaphore(%200 : memref<!tpu.dma_semaphore, #tpu.memory_space<semaphore_mem>>)
      %c24 = arith.constant 24 : index
      %201 = memref.load %arg1[%c24] : memref<32xi32, #tpu.memory_space<smem>>
      %c24_i32 = arith.constant 24 : i32
      %c24_i32_95 = arith.constant 24 : i32
      %c0_i32_96 = arith.constant 0 : i32
      %202 = tpu.memref_slice %arg2[%201, %c0_i32_96] : memref<5000x128xf32, #tpu.memory_space<any>> -> memref<1x128xf32, #tpu.memory_space<any>>
      %203 = tpu.memref_squeeze %202 : memref<1x128xf32, #tpu.memory_space<any>> -> memref<128xf32, #tpu.memory_space<any>>
      %c0_i32_97 = arith.constant 0 : i32
      %204 = tpu.memref_slice %arg6[%c24_i32, %c0_i32_97] : memref<32x128xf32, #tpu.memory_space<vmem>> -> memref<1x128xf32, #tpu.memory_space<vmem>>
      %205 = tpu.memref_squeeze %204 : memref<1x128xf32, #tpu.memory_space<vmem>> -> memref<128xf32, #tpu.memory_space<vmem>>
      %206 = tpu.memref_slice %arg7[%c24_i32_95] : memref<32x!tpu.dma_semaphore, #tpu.memory_space<semaphore_mem>> -> memref<1x!tpu.dma_semaphore, #tpu.memory_space<semaphore_mem>>
      %207 = tpu.memref_squeeze %206 : memref<1x!tpu.dma_semaphore, #tpu.memory_space<semaphore_mem>> -> memref<!tpu.dma_semaphore, #tpu.memory_space<semaphore_mem>>
      tpu.enqueue_dma source(%203 : memref<128xf32, #tpu.memory_space<any>>) target(%205 : memref<128xf32, #tpu.memory_space<vmem>>) target_semaphore(%207 : memref<!tpu.dma_semaphore, #tpu.memory_space<semaphore_mem>>)
      %c25 = arith.constant 25 : index
      %208 = memref.load %arg1[%c25] : memref<32xi32, #tpu.memory_space<smem>>
      %c25_i32 = arith.constant 25 : i32
      %c25_i32_98 = arith.constant 25 : i32
      %c0_i32_99 = arith.constant 0 : i32
      %209 = tpu.memref_slice %arg2[%208, %c0_i32_99] : memref<5000x128xf32, #tpu.memory_space<any>> -> memref<1x128xf32, #tpu.memory_space<any>>
      %210 = tpu.memref_squeeze %209 : memref<1x128xf32, #tpu.memory_space<any>> -> memref<128xf32, #tpu.memory_space<any>>
      %c0_i32_100 = arith.constant 0 : i32
      %211 = tpu.memref_slice %arg6[%c25_i32, %c0_i32_100] : memref<32x128xf32, #tpu.memory_space<vmem>> -> memref<1x128xf32, #tpu.memory_space<vmem>>
      %212 = tpu.memref_squeeze %211 : memref<1x128xf32, #tpu.memory_space<vmem>> -> memref<128xf32, #tpu.memory_space<vmem>>
      %213 = tpu.memref_slice %arg7[%c25_i32_98] : memref<32x!tpu.dma_semaphore, #tpu.memory_space<semaphore_mem>> -> memref<1x!tpu.dma_semaphore, #tpu.memory_space<semaphore_mem>>
      %214 = tpu.memref_squeeze %213 : memref<1x!tpu.dma_semaphore, #tpu.memory_space<semaphore_mem>> -> memref<!tpu.dma_semaphore, #tpu.memory_space<semaphore_mem>>
      tpu.enqueue_dma source(%210 : memref<128xf32, #tpu.memory_space<any>>) target(%212 : memref<128xf32, #tpu.memory_space<vmem>>) target_semaphore(%214 : memref<!tpu.dma_semaphore, #tpu.memory_space<semaphore_mem>>)
      %c26 = arith.constant 26 : index
      %215 = memref.load %arg1[%c26] : memref<32xi32, #tpu.memory_space<smem>>
      %c26_i32 = arith.constant 26 : i32
      %c26_i32_101 = arith.constant 26 : i32
      %c0_i32_102 = arith.constant 0 : i32
      %216 = tpu.memref_slice %arg2[%215, %c0_i32_102] : memref<5000x128xf32, #tpu.memory_space<any>> -> memref<1x128xf32, #tpu.memory_space<any>>
      %217 = tpu.memref_squeeze %216 : memref<1x128xf32, #tpu.memory_space<any>> -> memref<128xf32, #tpu.memory_space<any>>
      %c0_i32_103 = arith.constant 0 : i32
      %218 = tpu.memref_slice %arg6[%c26_i32, %c0_i32_103] : memref<32x128xf32, #tpu.memory_space<vmem>> -> memref<1x128xf32, #tpu.memory_space<vmem>>
      %219 = tpu.memref_squeeze %218 : memref<1x128xf32, #tpu.memory_space<vmem>> -> memref<128xf32, #tpu.memory_space<vmem>>
      %220 = tpu.memref_slice %arg7[%c26_i32_101] : memref<32x!tpu.dma_semaphore, #tpu.memory_space<semaphore_mem>> -> memref<1x!tpu.dma_semaphore, #tpu.memory_space<semaphore_mem>>
      %221 = tpu.memref_squeeze %220 : memref<1x!tpu.dma_semaphore, #tpu.memory_space<semaphore_mem>> -> memref<!tpu.dma_semaphore, #tpu.memory_space<semaphore_mem>>
      tpu.enqueue_dma source(%217 : memref<128xf32, #tpu.memory_space<any>>) target(%219 : memref<128xf32, #tpu.memory_space<vmem>>) target_semaphore(%221 : memref<!tpu.dma_semaphore, #tpu.memory_space<semaphore_mem>>)
      %c27 = arith.constant 27 : index
      %222 = memref.load %arg1[%c27] : memref<32xi32, #tpu.memory_space<smem>>
      %c27_i32 = arith.constant 27 : i32
      %c27_i32_104 = arith.constant 27 : i32
      %c0_i32_105 = arith.constant 0 : i32
      %223 = tpu.memref_slice %arg2[%222, %c0_i32_105] : memref<5000x128xf32, #tpu.memory_space<any>> -> memref<1x128xf32, #tpu.memory_space<any>>
      %224 = tpu.memref_squeeze %223 : memref<1x128xf32, #tpu.memory_space<any>> -> memref<128xf32, #tpu.memory_space<any>>
      %c0_i32_106 = arith.constant 0 : i32
      %225 = tpu.memref_slice %arg6[%c27_i32, %c0_i32_106] : memref<32x128xf32, #tpu.memory_space<vmem>> -> memref<1x128xf32, #tpu.memory_space<vmem>>
      %226 = tpu.memref_squeeze %225 : memref<1x128xf32, #tpu.memory_space<vmem>> -> memref<128xf32, #tpu.memory_space<vmem>>
      %227 = tpu.memref_slice %arg7[%c27_i32_104] : memref<32x!tpu.dma_semaphore, #tpu.memory_space<semaphore_mem>> -> memref<1x!tpu.dma_semaphore, #tpu.memory_space<semaphore_mem>>
      %228 = tpu.memref_squeeze %227 : memref<1x!tpu.dma_semaphore, #tpu.memory_space<semaphore_mem>> -> memref<!tpu.dma_semaphore, #tpu.memory_space<semaphore_mem>>
      tpu.enqueue_dma source(%224 : memref<128xf32, #tpu.memory_space<any>>) target(%226 : memref<128xf32, #tpu.memory_space<vmem>>) target_semaphore(%228 : memref<!tpu.dma_semaphore, #tpu.memory_space<semaphore_mem>>)
      %c28 = arith.constant 28 : index
      %229 = memref.load %arg1[%c28] : memref<32xi32, #tpu.memory_space<smem>>
      %c28_i32 = arith.constant 28 : i32
      %c28_i32_107 = arith.constant 28 : i32
      %c0_i32_108 = arith.constant 0 : i32
      %230 = tpu.memref_slice %arg2[%229, %c0_i32_108] : memref<5000x128xf32, #tpu.memory_space<any>> -> memref<1x128xf32, #tpu.memory_space<any>>
      %231 = tpu.memref_squeeze %230 : memref<1x128xf32, #tpu.memory_space<any>> -> memref<128xf32, #tpu.memory_space<any>>
      %c0_i32_109 = arith.constant 0 : i32
      %232 = tpu.memref_slice %arg6[%c28_i32, %c0_i32_109] : memref<32x128xf32, #tpu.memory_space<vmem>> -> memref<1x128xf32, #tpu.memory_space<vmem>>
      %233 = tpu.memref_squeeze %232 : memref<1x128xf32, #tpu.memory_space<vmem>> -> memref<128xf32, #tpu.memory_space<vmem>>
      %234 = tpu.memref_slice %arg7[%c28_i32_107] : memref<32x!tpu.dma_semaphore, #tpu.memory_space<semaphore_mem>> -> memref<1x!tpu.dma_semaphore, #tpu.memory_space<semaphore_mem>>
      %235 = tpu.memref_squeeze %234 : memref<1x!tpu.dma_semaphore, #tpu.memory_space<semaphore_mem>> -> memref<!tpu.dma_semaphore, #tpu.memory_space<semaphore_mem>>
      tpu.enqueue_dma source(%231 : memref<128xf32, #tpu.memory_space<any>>) target(%233 : memref<128xf32, #tpu.memory_space<vmem>>) target_semaphore(%235 : memref<!tpu.dma_semaphore, #tpu.memory_space<semaphore_mem>>)
      %c29 = arith.constant 29 : index
      %236 = memref.load %arg1[%c29] : memref<32xi32, #tpu.memory_space<smem>>
      %c29_i32 = arith.constant 29 : i32
      %c29_i32_110 = arith.constant 29 : i32
      %c0_i32_111 = arith.constant 0 : i32
      %237 = tpu.memref_slice %arg2[%236, %c0_i32_111] : memref<5000x128xf32, #tpu.memory_space<any>> -> memref<1x128xf32, #tpu.memory_space<any>>
      %238 = tpu.memref_squeeze %237 : memref<1x128xf32, #tpu.memory_space<any>> -> memref<128xf32, #tpu.memory_space<any>>
      %c0_i32_112 = arith.constant 0 : i32
      %239 = tpu.memref_slice %arg6[%c29_i32, %c0_i32_112] : memref<32x128xf32, #tpu.memory_space<vmem>> -> memref<1x128xf32, #tpu.memory_space<vmem>>
      %240 = tpu.memref_squeeze %239 : memref<1x128xf32, #tpu.memory_space<vmem>> -> memref<128xf32, #tpu.memory_space<vmem>>
      %241 = tpu.memref_slice %arg7[%c29_i32_110] : memref<32x!tpu.dma_semaphore, #tpu.memory_space<semaphore_mem>> -> memref<1x!tpu.dma_semaphore, #tpu.memory_space<semaphore_mem>>
      %242 = tpu.memref_squeeze %241 : memref<1x!tpu.dma_semaphore, #tpu.memory_space<semaphore_mem>> -> memref<!tpu.dma_semaphore, #tpu.memory_space<semaphore_mem>>
      tpu.enqueue_dma source(%238 : memref<128xf32, #tpu.memory_space<any>>) target(%240 : memref<128xf32, #tpu.memory_space<vmem>>) target_semaphore(%242 : memref<!tpu.dma_semaphore, #tpu.memory_space<semaphore_mem>>)
      %c30 = arith.constant 30 : index
      %243 = memref.load %arg1[%c30] : memref<32xi32, #tpu.memory_space<smem>>
      %c30_i32 = arith.constant 30 : i32
      %c30_i32_113 = arith.constant 30 : i32
      %c0_i32_114 = arith.constant 0 : i32
      %244 = tpu.memref_slice %arg2[%243, %c0_i32_114] : memref<5000x128xf32, #tpu.memory_space<any>> -> memref<1x128xf32, #tpu.memory_space<any>>
      %245 = tpu.memref_squeeze %244 : memref<1x128xf32, #tpu.memory_space<any>> -> memref<128xf32, #tpu.memory_space<any>>
      %c0_i32_115 = arith.constant 0 : i32
      %246 = tpu.memref_slice %arg6[%c30_i32, %c0_i32_115] : memref<32x128xf32, #tpu.memory_space<vmem>> -> memref<1x128xf32, #tpu.memory_space<vmem>>
      %247 = tpu.memref_squeeze %246 : memref<1x128xf32, #tpu.memory_space<vmem>> -> memref<128xf32, #tpu.memory_space<vmem>>
      %248 = tpu.memref_slice %arg7[%c30_i32_113] : memref<32x!tpu.dma_semaphore, #tpu.memory_space<semaphore_mem>> -> memref<1x!tpu.dma_semaphore, #tpu.memory_space<semaphore_mem>>
      %249 = tpu.memref_squeeze %248 : memref<1x!tpu.dma_semaphore, #tpu.memory_space<semaphore_mem>> -> memref<!tpu.dma_semaphore, #tpu.memory_space<semaphore_mem>>
      tpu.enqueue_dma source(%245 : memref<128xf32, #tpu.memory_space<any>>) target(%247 : memref<128xf32, #tpu.memory_space<vmem>>) target_semaphore(%249 : memref<!tpu.dma_semaphore, #tpu.memory_space<semaphore_mem>>)
      %c31 = arith.constant 31 : index
      %250 = memref.load %arg1[%c31] : memref<32xi32, #tpu.memory_space<smem>>
      %c31_i32 = arith.constant 31 : i32
      %c31_i32_116 = arith.constant 31 : i32
      %c0_i32_117 = arith.constant 0 : i32
      %251 = tpu.memref_slice %arg2[%250, %c0_i32_117] : memref<5000x128xf32, #tpu.memory_space<any>> -> memref<1x128xf32, #tpu.memory_space<any>>
      %252 = tpu.memref_squeeze %251 : memref<1x128xf32, #tpu.memory_space<any>> -> memref<128xf32, #tpu.memory_space<any>>
      %c0_i32_118 = arith.constant 0 : i32
      %253 = tpu.memref_slice %arg6[%c31_i32, %c0_i32_118] : memref<32x128xf32, #tpu.memory_space<vmem>> -> memref<1x128xf32, #tpu.memory_space<vmem>>
      %254 = tpu.memref_squeeze %253 : memref<1x128xf32, #tpu.memory_space<vmem>> -> memref<128xf32, #tpu.memory_space<vmem>>
      %255 = tpu.memref_slice %arg7[%c31_i32_116] : memref<32x!tpu.dma_semaphore, #tpu.memory_space<semaphore_mem>> -> memref<1x!tpu.dma_semaphore, #tpu.memory_space<semaphore_mem>>
      %256 = tpu.memref_squeeze %255 : memref<1x!tpu.dma_semaphore, #tpu.memory_space<semaphore_mem>> -> memref<!tpu.dma_semaphore, #tpu.memory_space<semaphore_mem>>
      tpu.enqueue_dma source(%252 : memref<128xf32, #tpu.memory_space<any>>) target(%254 : memref<128xf32, #tpu.memory_space<vmem>>) target_semaphore(%256 : memref<!tpu.dma_semaphore, #tpu.memory_space<semaphore_mem>>)
      %c0_119 = arith.constant 0 : index
      %257 = memref.load %arg1[%c0_119] : memref<32xi32, #tpu.memory_space<smem>>
      %c0_i32_120 = arith.constant 0 : i32
      %c0_i32_121 = arith.constant 0 : i32
      %c0_i32_122 = arith.constant 0 : i32
      %258 = tpu.memref_slice %arg2[%257, %c0_i32_122] : memref<5000x128xf32, #tpu.memory_space<any>> -> memref<1x128xf32, #tpu.memory_space<any>>
      %259 = tpu.memref_squeeze %258 : memref<1x128xf32, #tpu.memory_space<any>> -> memref<128xf32, #tpu.memory_space<any>>
      %c0_i32_123 = arith.constant 0 : i32
      %260 = tpu.memref_slice %arg6[%c0_i32_120, %c0_i32_123] : memref<32x128xf32, #tpu.memory_space<vmem>> -> memref<1x128xf32, #tpu.memory_space<vmem>>
      %261 = tpu.memref_squeeze %260 : memref<1x128xf32, #tpu.memory_space<vmem>> -> memref<128xf32, #tpu.memory_space<vmem>>
      %262 = tpu.memref_slice %arg7[%c0_i32_121] : memref<32x!tpu.dma_semaphore, #tpu.memory_space<semaphore_mem>> -> memref<1x!tpu.dma_semaphore, #tpu.memory_space<semaphore_mem>>
      %263 = tpu.memref_squeeze %262 : memref<1x!tpu.dma_semaphore, #tpu.memory_space<semaphore_mem>> -> memref<!tpu.dma_semaphore, #tpu.memory_space<semaphore_mem>>
      tpu.wait_dma2 semaphore(%263 : memref<!tpu.dma_semaphore, #tpu.memory_space<semaphore_mem>>) src(%259 : memref<128xf32, #tpu.memory_space<any>>) dst(%261 : memref<128xf32, #tpu.memory_space<vmem>>)
      %c1_124 = arith.constant 1 : index
      %264 = memref.load %arg1[%c1_124] : memref<32xi32, #tpu.memory_space<smem>>
      %c1_i32_125 = arith.constant 1 : i32
      %c1_i32_126 = arith.constant 1 : i32
      %c0_i32_127 = arith.constant 0 : i32
      %265 = tpu.memref_slice %arg2[%264, %c0_i32_127] : memref<5000x128xf32, #tpu.memory_space<any>> -> memref<1x128xf32, #tpu.memory_space<any>>
      %266 = tpu.memref_squeeze %265 : memref<1x128xf32, #tpu.memory_space<any>> -> memref<128xf32, #tpu.memory_space<any>>
      %c0_i32_128 = arith.constant 0 : i32
      %267 = tpu.memref_slice %arg6[%c1_i32_125, %c0_i32_128] : memref<32x128xf32, #tpu.memory_space<vmem>> -> memref<1x128xf32, #tpu.memory_space<vmem>>
      %268 = tpu.memref_squeeze %267 : memref<1x128xf32, #tpu.memory_space<vmem>> -> memref<128xf32, #tpu.memory_space<vmem>>
      %269 = tpu.memref_slice %arg7[%c1_i32_126] : memref<32x!tpu.dma_semaphore, #tpu.memory_space<semaphore_mem>> -> memref<1x!tpu.dma_semaphore, #tpu.memory_space<semaphore_mem>>
      %270 = tpu.memref_squeeze %269 : memref<1x!tpu.dma_semaphore, #tpu.memory_space<semaphore_mem>> -> memref<!tpu.dma_semaphore, #tpu.memory_space<semaphore_mem>>
      tpu.wait_dma2 semaphore(%270 : memref<!tpu.dma_semaphore, #tpu.memory_space<semaphore_mem>>) src(%266 : memref<128xf32, #tpu.memory_space<any>>) dst(%268 : memref<128xf32, #tpu.memory_space<vmem>>)
      %c2_129 = arith.constant 2 : index
      %271 = memref.load %arg1[%c2_129] : memref<32xi32, #tpu.memory_space<smem>>
      %c2_i32_130 = arith.constant 2 : i32
      %c2_i32_131 = arith.constant 2 : i32
      %c0_i32_132 = arith.constant 0 : i32
      %272 = tpu.memref_slice %arg2[%271, %c0_i32_132] : memref<5000x128xf32, #tpu.memory_space<any>> -> memref<1x128xf32, #tpu.memory_space<any>>
      %273 = tpu.memref_squeeze %272 : memref<1x128xf32, #tpu.memory_space<any>> -> memref<128xf32, #tpu.memory_space<any>>
      %c0_i32_133 = arith.constant 0 : i32
      %274 = tpu.memref_slice %arg6[%c2_i32_130, %c0_i32_133] : memref<32x128xf32, #tpu.memory_space<vmem>> -> memref<1x128xf32, #tpu.memory_space<vmem>>
      %275 = tpu.memref_squeeze %274 : memref<1x128xf32, #tpu.memory_space<vmem>> -> memref<128xf32, #tpu.memory_space<vmem>>
      %276 = tpu.memref_slice %arg7[%c2_i32_131] : memref<32x!tpu.dma_semaphore, #tpu.memory_space<semaphore_mem>> -> memref<1x!tpu.dma_semaphore, #tpu.memory_space<semaphore_mem>>
      %277 = tpu.memref_squeeze %276 : memref<1x!tpu.dma_semaphore, #tpu.memory_space<semaphore_mem>> -> memref<!tpu.dma_semaphore, #tpu.memory_space<semaphore_mem>>
      tpu.wait_dma2 semaphore(%277 : memref<!tpu.dma_semaphore, #tpu.memory_space<semaphore_mem>>) src(%273 : memref<128xf32, #tpu.memory_space<any>>) dst(%275 : memref<128xf32, #tpu.memory_space<vmem>>)
      %c3_134 = arith.constant 3 : index
      %278 = memref.load %arg1[%c3_134] : memref<32xi32, #tpu.memory_space<smem>>
      %c3_i32_135 = arith.constant 3 : i32
      %c3_i32_136 = arith.constant 3 : i32
      %c0_i32_137 = arith.constant 0 : i32
      %279 = tpu.memref_slice %arg2[%278, %c0_i32_137] : memref<5000x128xf32, #tpu.memory_space<any>> -> memref<1x128xf32, #tpu.memory_space<any>>
      %280 = tpu.memref_squeeze %279 : memref<1x128xf32, #tpu.memory_space<any>> -> memref<128xf32, #tpu.memory_space<any>>
      %c0_i32_138 = arith.constant 0 : i32
      %281 = tpu.memref_slice %arg6[%c3_i32_135, %c0_i32_138] : memref<32x128xf32, #tpu.memory_space<vmem>> -> memref<1x128xf32, #tpu.memory_space<vmem>>
      %282 = tpu.memref_squeeze %281 : memref<1x128xf32, #tpu.memory_space<vmem>> -> memref<128xf32, #tpu.memory_space<vmem>>
      %283 = tpu.memref_slice %arg7[%c3_i32_136] : memref<32x!tpu.dma_semaphore, #tpu.memory_space<semaphore_mem>> -> memref<1x!tpu.dma_semaphore, #tpu.memory_space<semaphore_mem>>
      %284 = tpu.memref_squeeze %283 : memref<1x!tpu.dma_semaphore, #tpu.memory_space<semaphore_mem>> -> memref<!tpu.dma_semaphore, #tpu.memory_space<semaphore_mem>>
      tpu.wait_dma2 semaphore(%284 : memref<!tpu.dma_semaphore, #tpu.memory_space<semaphore_mem>>) src(%280 : memref<128xf32, #tpu.memory_space<any>>) dst(%282 : memref<128xf32, #tpu.memory_space<vmem>>)
      %c4_139 = arith.constant 4 : index
      %285 = memref.load %arg1[%c4_139] : memref<32xi32, #tpu.memory_space<smem>>
      %c4_i32_140 = arith.constant 4 : i32
      %c4_i32_141 = arith.constant 4 : i32
      %c0_i32_142 = arith.constant 0 : i32
      %286 = tpu.memref_slice %arg2[%285, %c0_i32_142] : memref<5000x128xf32, #tpu.memory_space<any>> -> memref<1x128xf32, #tpu.memory_space<any>>
      %287 = tpu.memref_squeeze %286 : memref<1x128xf32, #tpu.memory_space<any>> -> memref<128xf32, #tpu.memory_space<any>>
      %c0_i32_143 = arith.constant 0 : i32
      %288 = tpu.memref_slice %arg6[%c4_i32_140, %c0_i32_143] : memref<32x128xf32, #tpu.memory_space<vmem>> -> memref<1x128xf32, #tpu.memory_space<vmem>>
      %289 = tpu.memref_squeeze %288 : memref<1x128xf32, #tpu.memory_space<vmem>> -> memref<128xf32, #tpu.memory_space<vmem>>
      %290 = tpu.memref_slice %arg7[%c4_i32_141] : memref<32x!tpu.dma_semaphore, #tpu.memory_space<semaphore_mem>> -> memref<1x!tpu.dma_semaphore, #tpu.memory_space<semaphore_mem>>
      %291 = tpu.memref_squeeze %290 : memref<1x!tpu.dma_semaphore, #tpu.memory_space<semaphore_mem>> -> memref<!tpu.dma_semaphore, #tpu.memory_space<semaphore_mem>>
      tpu.wait_dma2 semaphore(%291 : memref<!tpu.dma_semaphore, #tpu.memory_space<semaphore_mem>>) src(%287 : memref<128xf32, #tpu.memory_space<any>>) dst(%289 : memref<128xf32, #tpu.memory_space<vmem>>)
      %c5_144 = arith.constant 5 : index
      %292 = memref.load %arg1[%c5_144] : memref<32xi32, #tpu.memory_space<smem>>
      %c5_i32_145 = arith.constant 5 : i32
      %c5_i32_146 = arith.constant 5 : i32
      %c0_i32_147 = arith.constant 0 : i32
      %293 = tpu.memref_slice %arg2[%292, %c0_i32_147] : memref<5000x128xf32, #tpu.memory_space<any>> -> memref<1x128xf32, #tpu.memory_space<any>>
      %294 = tpu.memref_squeeze %293 : memref<1x128xf32, #tpu.memory_space<any>> -> memref<128xf32, #tpu.memory_space<any>>
      %c0_i32_148 = arith.constant 0 : i32
      %295 = tpu.memref_slice %arg6[%c5_i32_145, %c0_i32_148] : memref<32x128xf32, #tpu.memory_space<vmem>> -> memref<1x128xf32, #tpu.memory_space<vmem>>
      %296 = tpu.memref_squeeze %295 : memref<1x128xf32, #tpu.memory_space<vmem>> -> memref<128xf32, #tpu.memory_space<vmem>>
      %297 = tpu.memref_slice %arg7[%c5_i32_146] : memref<32x!tpu.dma_semaphore, #tpu.memory_space<semaphore_mem>> -> memref<1x!tpu.dma_semaphore, #tpu.memory_space<semaphore_mem>>
      %298 = tpu.memref_squeeze %297 : memref<1x!tpu.dma_semaphore, #tpu.memory_space<semaphore_mem>> -> memref<!tpu.dma_semaphore, #tpu.memory_space<semaphore_mem>>
      tpu.wait_dma2 semaphore(%298 : memref<!tpu.dma_semaphore, #tpu.memory_space<semaphore_mem>>) src(%294 : memref<128xf32, #tpu.memory_space<any>>) dst(%296 : memref<128xf32, #tpu.memory_space<vmem>>)
      %c6_149 = arith.constant 6 : index
      %299 = memref.load %arg1[%c6_149] : memref<32xi32, #tpu.memory_space<smem>>
      %c6_i32_150 = arith.constant 6 : i32
      %c6_i32_151 = arith.constant 6 : i32
      %c0_i32_152 = arith.constant 0 : i32
      %300 = tpu.memref_slice %arg2[%299, %c0_i32_152] : memref<5000x128xf32, #tpu.memory_space<any>> -> memref<1x128xf32, #tpu.memory_space<any>>
      %301 = tpu.memref_squeeze %300 : memref<1x128xf32, #tpu.memory_space<any>> -> memref<128xf32, #tpu.memory_space<any>>
      %c0_i32_153 = arith.constant 0 : i32
      %302 = tpu.memref_slice %arg6[%c6_i32_150, %c0_i32_153] : memref<32x128xf32, #tpu.memory_space<vmem>> -> memref<1x128xf32, #tpu.memory_space<vmem>>
      %303 = tpu.memref_squeeze %302 : memref<1x128xf32, #tpu.memory_space<vmem>> -> memref<128xf32, #tpu.memory_space<vmem>>
      %304 = tpu.memref_slice %arg7[%c6_i32_151] : memref<32x!tpu.dma_semaphore, #tpu.memory_space<semaphore_mem>> -> memref<1x!tpu.dma_semaphore, #tpu.memory_space<semaphore_mem>>
      %305 = tpu.memref_squeeze %304 : memref<1x!tpu.dma_semaphore, #tpu.memory_space<semaphore_mem>> -> memref<!tpu.dma_semaphore, #tpu.memory_space<semaphore_mem>>
      tpu.wait_dma2 semaphore(%305 : memref<!tpu.dma_semaphore, #tpu.memory_space<semaphore_mem>>) src(%301 : memref<128xf32, #tpu.memory_space<any>>) dst(%303 : memref<128xf32, #tpu.memory_space<vmem>>)
      %c7_154 = arith.constant 7 : index
      %306 = memref.load %arg1[%c7_154] : memref<32xi32, #tpu.memory_space<smem>>
      %c7_i32_155 = arith.constant 7 : i32
      %c7_i32_156 = arith.constant 7 : i32
      %c0_i32_157 = arith.constant 0 : i32
      %307 = tpu.memref_slice %arg2[%306, %c0_i32_157] : memref<5000x128xf32, #tpu.memory_space<any>> -> memref<1x128xf32, #tpu.memory_space<any>>
      %308 = tpu.memref_squeeze %307 : memref<1x128xf32, #tpu.memory_space<any>> -> memref<128xf32, #tpu.memory_space<any>>
      %c0_i32_158 = arith.constant 0 : i32
      %309 = tpu.memref_slice %arg6[%c7_i32_155, %c0_i32_158] : memref<32x128xf32, #tpu.memory_space<vmem>> -> memref<1x128xf32, #tpu.memory_space<vmem>>
      %310 = tpu.memref_squeeze %309 : memref<1x128xf32, #tpu.memory_space<vmem>> -> memref<128xf32, #tpu.memory_space<vmem>>
      %311 = tpu.memref_slice %arg7[%c7_i32_156] : memref<32x!tpu.dma_semaphore, #tpu.memory_space<semaphore_mem>> -> memref<1x!tpu.dma_semaphore, #tpu.memory_space<semaphore_mem>>
      %312 = tpu.memref_squeeze %311 : memref<1x!tpu.dma_semaphore, #tpu.memory_space<semaphore_mem>> -> memref<!tpu.dma_semaphore, #tpu.memory_space<semaphore_mem>>
      tpu.wait_dma2 semaphore(%312 : memref<!tpu.dma_semaphore, #tpu.memory_space<semaphore_mem>>) src(%308 : memref<128xf32, #tpu.memory_space<any>>) dst(%310 : memref<128xf32, #tpu.memory_space<vmem>>)
      %c8_159 = arith.constant 8 : index
      %313 = memref.load %arg1[%c8_159] : memref<32xi32, #tpu.memory_space<smem>>
      %c8_i32_160 = arith.constant 8 : i32
      %c8_i32_161 = arith.constant 8 : i32
      %c0_i32_162 = arith.constant 0 : i32
      %314 = tpu.memref_slice %arg2[%313, %c0_i32_162] : memref<5000x128xf32, #tpu.memory_space<any>> -> memref<1x128xf32, #tpu.memory_space<any>>
      %315 = tpu.memref_squeeze %314 : memref<1x128xf32, #tpu.memory_space<any>> -> memref<128xf32, #tpu.memory_space<any>>
      %c0_i32_163 = arith.constant 0 : i32
      %316 = tpu.memref_slice %arg6[%c8_i32_160, %c0_i32_163] : memref<32x128xf32, #tpu.memory_space<vmem>> -> memref<1x128xf32, #tpu.memory_space<vmem>>
      %317 = tpu.memref_squeeze %316 : memref<1x128xf32, #tpu.memory_space<vmem>> -> memref<128xf32, #tpu.memory_space<vmem>>
      %318 = tpu.memref_slice %arg7[%c8_i32_161] : memref<32x!tpu.dma_semaphore, #tpu.memory_space<semaphore_mem>> -> memref<1x!tpu.dma_semaphore, #tpu.memory_space<semaphore_mem>>
      %319 = tpu.memref_squeeze %318 : memref<1x!tpu.dma_semaphore, #tpu.memory_space<semaphore_mem>> -> memref<!tpu.dma_semaphore, #tpu.memory_space<semaphore_mem>>
      tpu.wait_dma2 semaphore(%319 : memref<!tpu.dma_semaphore, #tpu.memory_space<semaphore_mem>>) src(%315 : memref<128xf32, #tpu.memory_space<any>>) dst(%317 : memref<128xf32, #tpu.memory_space<vmem>>)
      %c9_164 = arith.constant 9 : index
      %320 = memref.load %arg1[%c9_164] : memref<32xi32, #tpu.memory_space<smem>>
      %c9_i32_165 = arith.constant 9 : i32
      %c9_i32_166 = arith.constant 9 : i32
      %c0_i32_167 = arith.constant 0 : i32
      %321 = tpu.memref_slice %arg2[%320, %c0_i32_167] : memref<5000x128xf32, #tpu.memory_space<any>> -> memref<1x128xf32, #tpu.memory_space<any>>
      %322 = tpu.memref_squeeze %321 : memref<1x128xf32, #tpu.memory_space<any>> -> memref<128xf32, #tpu.memory_space<any>>
      %c0_i32_168 = arith.constant 0 : i32
      %323 = tpu.memref_slice %arg6[%c9_i32_165, %c0_i32_168] : memref<32x128xf32, #tpu.memory_space<vmem>> -> memref<1x128xf32, #tpu.memory_space<vmem>>
      %324 = tpu.memref_squeeze %323 : memref<1x128xf32, #tpu.memory_space<vmem>> -> memref<128xf32, #tpu.memory_space<vmem>>
      %325 = tpu.memref_slice %arg7[%c9_i32_166] : memref<32x!tpu.dma_semaphore, #tpu.memory_space<semaphore_mem>> -> memref<1x!tpu.dma_semaphore, #tpu.memory_space<semaphore_mem>>
      %326 = tpu.memref_squeeze %325 : memref<1x!tpu.dma_semaphore, #tpu.memory_space<semaphore_mem>> -> memref<!tpu.dma_semaphore, #tpu.memory_space<semaphore_mem>>
      tpu.wait_dma2 semaphore(%326 : memref<!tpu.dma_semaphore, #tpu.memory_space<semaphore_mem>>) src(%322 : memref<128xf32, #tpu.memory_space<any>>) dst(%324 : memref<128xf32, #tpu.memory_space<vmem>>)
      %c10_169 = arith.constant 10 : index
      %327 = memref.load %arg1[%c10_169] : memref<32xi32, #tpu.memory_space<smem>>
      %c10_i32_170 = arith.constant 10 : i32
      %c10_i32_171 = arith.constant 10 : i32
      %c0_i32_172 = arith.constant 0 : i32
      %328 = tpu.memref_slice %arg2[%327, %c0_i32_172] : memref<5000x128xf32, #tpu.memory_space<any>> -> memref<1x128xf32, #tpu.memory_space<any>>
      %329 = tpu.memref_squeeze %328 : memref<1x128xf32, #tpu.memory_space<any>> -> memref<128xf32, #tpu.memory_space<any>>
      %c0_i32_173 = arith.constant 0 : i32
      %330 = tpu.memref_slice %arg6[%c10_i32_170, %c0_i32_173] : memref<32x128xf32, #tpu.memory_space<vmem>> -> memref<1x128xf32, #tpu.memory_space<vmem>>
      %331 = tpu.memref_squeeze %330 : memref<1x128xf32, #tpu.memory_space<vmem>> -> memref<128xf32, #tpu.memory_space<vmem>>
      %332 = tpu.memref_slice %arg7[%c10_i32_171] : memref<32x!tpu.dma_semaphore, #tpu.memory_space<semaphore_mem>> -> memref<1x!tpu.dma_semaphore, #tpu.memory_space<semaphore_mem>>
      %333 = tpu.memref_squeeze %332 : memref<1x!tpu.dma_semaphore, #tpu.memory_space<semaphore_mem>> -> memref<!tpu.dma_semaphore, #tpu.memory_space<semaphore_mem>>
      tpu.wait_dma2 semaphore(%333 : memref<!tpu.dma_semaphore, #tpu.memory_space<semaphore_mem>>) src(%329 : memref<128xf32, #tpu.memory_space<any>>) dst(%331 : memref<128xf32, #tpu.memory_space<vmem>>)
      %c11_174 = arith.constant 11 : index
      %334 = memref.load %arg1[%c11_174] : memref<32xi32, #tpu.memory_space<smem>>
      %c11_i32_175 = arith.constant 11 : i32
      %c11_i32_176 = arith.constant 11 : i32
      %c0_i32_177 = arith.constant 0 : i32
      %335 = tpu.memref_slice %arg2[%334, %c0_i32_177] : memref<5000x128xf32, #tpu.memory_space<any>> -> memref<1x128xf32, #tpu.memory_space<any>>
      %336 = tpu.memref_squeeze %335 : memref<1x128xf32, #tpu.memory_space<any>> -> memref<128xf32, #tpu.memory_space<any>>
      %c0_i32_178 = arith.constant 0 : i32
      %337 = tpu.memref_slice %arg6[%c11_i32_175, %c0_i32_178] : memref<32x128xf32, #tpu.memory_space<vmem>> -> memref<1x128xf32, #tpu.memory_space<vmem>>
      %338 = tpu.memref_squeeze %337 : memref<1x128xf32, #tpu.memory_space<vmem>> -> memref<128xf32, #tpu.memory_space<vmem>>
      %339 = tpu.memref_slice %arg7[%c11_i32_176] : memref<32x!tpu.dma_semaphore, #tpu.memory_space<semaphore_mem>> -> memref<1x!tpu.dma_semaphore, #tpu.memory_space<semaphore_mem>>
      %340 = tpu.memref_squeeze %339 : memref<1x!tpu.dma_semaphore, #tpu.memory_space<semaphore_mem>> -> memref<!tpu.dma_semaphore, #tpu.memory_space<semaphore_mem>>
      tpu.wait_dma2 semaphore(%340 : memref<!tpu.dma_semaphore, #tpu.memory_space<semaphore_mem>>) src(%336 : memref<128xf32, #tpu.memory_space<any>>) dst(%338 : memref<128xf32, #tpu.memory_space<vmem>>)
      %c12_179 = arith.constant 12 : index
      %341 = memref.load %arg1[%c12_179] : memref<32xi32, #tpu.memory_space<smem>>
      %c12_i32_180 = arith.constant 12 : i32
      %c12_i32_181 = arith.constant 12 : i32
      %c0_i32_182 = arith.constant 0 : i32
      %342 = tpu.memref_slice %arg2[%341, %c0_i32_182] : memref<5000x128xf32, #tpu.memory_space<any>> -> memref<1x128xf32, #tpu.memory_space<any>>
      %343 = tpu.memref_squeeze %342 : memref<1x128xf32, #tpu.memory_space<any>> -> memref<128xf32, #tpu.memory_space<any>>
      %c0_i32_183 = arith.constant 0 : i32
      %344 = tpu.memref_slice %arg6[%c12_i32_180, %c0_i32_183] : memref<32x128xf32, #tpu.memory_space<vmem>> -> memref<1x128xf32, #tpu.memory_space<vmem>>
      %345 = tpu.memref_squeeze %344 : memref<1x128xf32, #tpu.memory_space<vmem>> -> memref<128xf32, #tpu.memory_space<vmem>>
      %346 = tpu.memref_slice %arg7[%c12_i32_181] : memref<32x!tpu.dma_semaphore, #tpu.memory_space<semaphore_mem>> -> memref<1x!tpu.dma_semaphore, #tpu.memory_space<semaphore_mem>>
      %347 = tpu.memref_squeeze %346 : memref<1x!tpu.dma_semaphore, #tpu.memory_space<semaphore_mem>> -> memref<!tpu.dma_semaphore, #tpu.memory_space<semaphore_mem>>
      tpu.wait_dma2 semaphore(%347 : memref<!tpu.dma_semaphore, #tpu.memory_space<semaphore_mem>>) src(%343 : memref<128xf32, #tpu.memory_space<any>>) dst(%345 : memref<128xf32, #tpu.memory_space<vmem>>)
      %c13_184 = arith.constant 13 : index
      %348 = memref.load %arg1[%c13_184] : memref<32xi32, #tpu.memory_space<smem>>
      %c13_i32_185 = arith.constant 13 : i32
      %c13_i32_186 = arith.constant 13 : i32
      %c0_i32_187 = arith.constant 0 : i32
      %349 = tpu.memref_slice %arg2[%348, %c0_i32_187] : memref<5000x128xf32, #tpu.memory_space<any>> -> memref<1x128xf32, #tpu.memory_space<any>>
      %350 = tpu.memref_squeeze %349 : memref<1x128xf32, #tpu.memory_space<any>> -> memref<128xf32, #tpu.memory_space<any>>
      %c0_i32_188 = arith.constant 0 : i32
      %351 = tpu.memref_slice %arg6[%c13_i32_185, %c0_i32_188] : memref<32x128xf32, #tpu.memory_space<vmem>> -> memref<1x128xf32, #tpu.memory_space<vmem>>
      %352 = tpu.memref_squeeze %351 : memref<1x128xf32, #tpu.memory_space<vmem>> -> memref<128xf32, #tpu.memory_space<vmem>>
      %353 = tpu.memref_slice %arg7[%c13_i32_186] : memref<32x!tpu.dma_semaphore, #tpu.memory_space<semaphore_mem>> -> memref<1x!tpu.dma_semaphore, #tpu.memory_space<semaphore_mem>>
      %354 = tpu.memref_squeeze %353 : memref<1x!tpu.dma_semaphore, #tpu.memory_space<semaphore_mem>> -> memref<!tpu.dma_semaphore, #tpu.memory_space<semaphore_mem>>
      tpu.wait_dma2 semaphore(%354 : memref<!tpu.dma_semaphore, #tpu.memory_space<semaphore_mem>>) src(%350 : memref<128xf32, #tpu.memory_space<any>>) dst(%352 : memref<128xf32, #tpu.memory_space<vmem>>)
      %c14_189 = arith.constant 14 : index
      %355 = memref.load %arg1[%c14_189] : memref<32xi32, #tpu.memory_space<smem>>
      %c14_i32_190 = arith.constant 14 : i32
      %c14_i32_191 = arith.constant 14 : i32
      %c0_i32_192 = arith.constant 0 : i32
      %356 = tpu.memref_slice %arg2[%355, %c0_i32_192] : memref<5000x128xf32, #tpu.memory_space<any>> -> memref<1x128xf32, #tpu.memory_space<any>>
      %357 = tpu.memref_squeeze %356 : memref<1x128xf32, #tpu.memory_space<any>> -> memref<128xf32, #tpu.memory_space<any>>
      %c0_i32_193 = arith.constant 0 : i32
      %358 = tpu.memref_slice %arg6[%c14_i32_190, %c0_i32_193] : memref<32x128xf32, #tpu.memory_space<vmem>> -> memref<1x128xf32, #tpu.memory_space<vmem>>
      %359 = tpu.memref_squeeze %358 : memref<1x128xf32, #tpu.memory_space<vmem>> -> memref<128xf32, #tpu.memory_space<vmem>>
      %360 = tpu.memref_slice %arg7[%c14_i32_191] : memref<32x!tpu.dma_semaphore, #tpu.memory_space<semaphore_mem>> -> memref<1x!tpu.dma_semaphore, #tpu.memory_space<semaphore_mem>>
      %361 = tpu.memref_squeeze %360 : memref<1x!tpu.dma_semaphore, #tpu.memory_space<semaphore_mem>> -> memref<!tpu.dma_semaphore, #tpu.memory_space<semaphore_mem>>
      tpu.wait_dma2 semaphore(%361 : memref<!tpu.dma_semaphore, #tpu.memory_space<semaphore_mem>>) src(%357 : memref<128xf32, #tpu.memory_space<any>>) dst(%359 : memref<128xf32, #tpu.memory_space<vmem>>)
      %c15_194 = arith.constant 15 : index
      %362 = memref.load %arg1[%c15_194] : memref<32xi32, #tpu.memory_space<smem>>
      %c15_i32_195 = arith.constant 15 : i32
      %c15_i32_196 = arith.constant 15 : i32
      %c0_i32_197 = arith.constant 0 : i32
      %363 = tpu.memref_slice %arg2[%362, %c0_i32_197] : memref<5000x128xf32, #tpu.memory_space<any>> -> memref<1x128xf32, #tpu.memory_space<any>>
      %364 = tpu.memref_squeeze %363 : memref<1x128xf32, #tpu.memory_space<any>> -> memref<128xf32, #tpu.memory_space<any>>
      %c0_i32_198 = arith.constant 0 : i32
      %365 = tpu.memref_slice %arg6[%c15_i32_195, %c0_i32_198] : memref<32x128xf32, #tpu.memory_space<vmem>> -> memref<1x128xf32, #tpu.memory_space<vmem>>
      %366 = tpu.memref_squeeze %365 : memref<1x128xf32, #tpu.memory_space<vmem>> -> memref<128xf32, #tpu.memory_space<vmem>>
      %367 = tpu.memref_slice %arg7[%c15_i32_196] : memref<32x!tpu.dma_semaphore, #tpu.memory_space<semaphore_mem>> -> memref<1x!tpu.dma_semaphore, #tpu.memory_space<semaphore_mem>>
      %368 = tpu.memref_squeeze %367 : memref<1x!tpu.dma_semaphore, #tpu.memory_space<semaphore_mem>> -> memref<!tpu.dma_semaphore, #tpu.memory_space<semaphore_mem>>
      tpu.wait_dma2 semaphore(%368 : memref<!tpu.dma_semaphore, #tpu.memory_space<semaphore_mem>>) src(%364 : memref<128xf32, #tpu.memory_space<any>>) dst(%366 : memref<128xf32, #tpu.memory_space<vmem>>)
      %c16_199 = arith.constant 16 : index
      %369 = memref.load %arg1[%c16_199] : memref<32xi32, #tpu.memory_space<smem>>
      %c16_i32_200 = arith.constant 16 : i32
      %c16_i32_201 = arith.constant 16 : i32
      %c0_i32_202 = arith.constant 0 : i32
      %370 = tpu.memref_slice %arg2[%369, %c0_i32_202] : memref<5000x128xf32, #tpu.memory_space<any>> -> memref<1x128xf32, #tpu.memory_space<any>>
      %371 = tpu.memref_squeeze %370 : memref<1x128xf32, #tpu.memory_space<any>> -> memref<128xf32, #tpu.memory_space<any>>
      %c0_i32_203 = arith.constant 0 : i32
      %372 = tpu.memref_slice %arg6[%c16_i32_200, %c0_i32_203] : memref<32x128xf32, #tpu.memory_space<vmem>> -> memref<1x128xf32, #tpu.memory_space<vmem>>
      %373 = tpu.memref_squeeze %372 : memref<1x128xf32, #tpu.memory_space<vmem>> -> memref<128xf32, #tpu.memory_space<vmem>>
      %374 = tpu.memref_slice %arg7[%c16_i32_201] : memref<32x!tpu.dma_semaphore, #tpu.memory_space<semaphore_mem>> -> memref<1x!tpu.dma_semaphore, #tpu.memory_space<semaphore_mem>>
      %375 = tpu.memref_squeeze %374 : memref<1x!tpu.dma_semaphore, #tpu.memory_space<semaphore_mem>> -> memref<!tpu.dma_semaphore, #tpu.memory_space<semaphore_mem>>
      tpu.wait_dma2 semaphore(%375 : memref<!tpu.dma_semaphore, #tpu.memory_space<semaphore_mem>>) src(%371 : memref<128xf32, #tpu.memory_space<any>>) dst(%373 : memref<128xf32, #tpu.memory_space<vmem>>)
      %c17_204 = arith.constant 17 : index
      %376 = memref.load %arg1[%c17_204] : memref<32xi32, #tpu.memory_space<smem>>
      %c17_i32_205 = arith.constant 17 : i32
      %c17_i32_206 = arith.constant 17 : i32
      %c0_i32_207 = arith.constant 0 : i32
      %377 = tpu.memref_slice %arg2[%376, %c0_i32_207] : memref<5000x128xf32, #tpu.memory_space<any>> -> memref<1x128xf32, #tpu.memory_space<any>>
      %378 = tpu.memref_squeeze %377 : memref<1x128xf32, #tpu.memory_space<any>> -> memref<128xf32, #tpu.memory_space<any>>
      %c0_i32_208 = arith.constant 0 : i32
      %379 = tpu.memref_slice %arg6[%c17_i32_205, %c0_i32_208] : memref<32x128xf32, #tpu.memory_space<vmem>> -> memref<1x128xf32, #tpu.memory_space<vmem>>
      %380 = tpu.memref_squeeze %379 : memref<1x128xf32, #tpu.memory_space<vmem>> -> memref<128xf32, #tpu.memory_space<vmem>>
      %381 = tpu.memref_slice %arg7[%c17_i32_206] : memref<32x!tpu.dma_semaphore, #tpu.memory_space<semaphore_mem>> -> memref<1x!tpu.dma_semaphore, #tpu.memory_space<semaphore_mem>>
      %382 = tpu.memref_squeeze %381 : memref<1x!tpu.dma_semaphore, #tpu.memory_space<semaphore_mem>> -> memref<!tpu.dma_semaphore, #tpu.memory_space<semaphore_mem>>
      tpu.wait_dma2 semaphore(%382 : memref<!tpu.dma_semaphore, #tpu.memory_space<semaphore_mem>>) src(%378 : memref<128xf32, #tpu.memory_space<any>>) dst(%380 : memref<128xf32, #tpu.memory_space<vmem>>)
      %c18_209 = arith.constant 18 : index
      %383 = memref.load %arg1[%c18_209] : memref<32xi32, #tpu.memory_space<smem>>
      %c18_i32_210 = arith.constant 18 : i32
      %c18_i32_211 = arith.constant 18 : i32
      %c0_i32_212 = arith.constant 0 : i32
      %384 = tpu.memref_slice %arg2[%383, %c0_i32_212] : memref<5000x128xf32, #tpu.memory_space<any>> -> memref<1x128xf32, #tpu.memory_space<any>>
      %385 = tpu.memref_squeeze %384 : memref<1x128xf32, #tpu.memory_space<any>> -> memref<128xf32, #tpu.memory_space<any>>
      %c0_i32_213 = arith.constant 0 : i32
      %386 = tpu.memref_slice %arg6[%c18_i32_210, %c0_i32_213] : memref<32x128xf32, #tpu.memory_space<vmem>> -> memref<1x128xf32, #tpu.memory_space<vmem>>
      %387 = tpu.memref_squeeze %386 : memref<1x128xf32, #tpu.memory_space<vmem>> -> memref<128xf32, #tpu.memory_space<vmem>>
      %388 = tpu.memref_slice %arg7[%c18_i32_211] : memref<32x!tpu.dma_semaphore, #tpu.memory_space<semaphore_mem>> -> memref<1x!tpu.dma_semaphore, #tpu.memory_space<semaphore_mem>>
      %389 = tpu.memref_squeeze %388 : memref<1x!tpu.dma_semaphore, #tpu.memory_space<semaphore_mem>> -> memref<!tpu.dma_semaphore, #tpu.memory_space<semaphore_mem>>
      tpu.wait_dma2 semaphore(%389 : memref<!tpu.dma_semaphore, #tpu.memory_space<semaphore_mem>>) src(%385 : memref<128xf32, #tpu.memory_space<any>>) dst(%387 : memref<128xf32, #tpu.memory_space<vmem>>)
      %c19_214 = arith.constant 19 : index
      %390 = memref.load %arg1[%c19_214] : memref<32xi32, #tpu.memory_space<smem>>
      %c19_i32_215 = arith.constant 19 : i32
      %c19_i32_216 = arith.constant 19 : i32
      %c0_i32_217 = arith.constant 0 : i32
      %391 = tpu.memref_slice %arg2[%390, %c0_i32_217] : memref<5000x128xf32, #tpu.memory_space<any>> -> memref<1x128xf32, #tpu.memory_space<any>>
      %392 = tpu.memref_squeeze %391 : memref<1x128xf32, #tpu.memory_space<any>> -> memref<128xf32, #tpu.memory_space<any>>
      %c0_i32_218 = arith.constant 0 : i32
      %393 = tpu.memref_slice %arg6[%c19_i32_215, %c0_i32_218] : memref<32x128xf32, #tpu.memory_space<vmem>> -> memref<1x128xf32, #tpu.memory_space<vmem>>
      %394 = tpu.memref_squeeze %393 : memref<1x128xf32, #tpu.memory_space<vmem>> -> memref<128xf32, #tpu.memory_space<vmem>>
      %395 = tpu.memref_slice %arg7[%c19_i32_216] : memref<32x!tpu.dma_semaphore, #tpu.memory_space<semaphore_mem>> -> memref<1x!tpu.dma_semaphore, #tpu.memory_space<semaphore_mem>>
      %396 = tpu.memref_squeeze %395 : memref<1x!tpu.dma_semaphore, #tpu.memory_space<semaphore_mem>> -> memref<!tpu.dma_semaphore, #tpu.memory_space<semaphore_mem>>
      tpu.wait_dma2 semaphore(%396 : memref<!tpu.dma_semaphore, #tpu.memory_space<semaphore_mem>>) src(%392 : memref<128xf32, #tpu.memory_space<any>>) dst(%394 : memref<128xf32, #tpu.memory_space<vmem>>)
      %c20_219 = arith.constant 20 : index
      %397 = memref.load %arg1[%c20_219] : memref<32xi32, #tpu.memory_space<smem>>
      %c20_i32_220 = arith.constant 20 : i32
      %c20_i32_221 = arith.constant 20 : i32
      %c0_i32_222 = arith.constant 0 : i32
      %398 = tpu.memref_slice %arg2[%397, %c0_i32_222] : memref<5000x128xf32, #tpu.memory_space<any>> -> memref<1x128xf32, #tpu.memory_space<any>>
      %399 = tpu.memref_squeeze %398 : memref<1x128xf32, #tpu.memory_space<any>> -> memref<128xf32, #tpu.memory_space<any>>
      %c0_i32_223 = arith.constant 0 : i32
      %400 = tpu.memref_slice %arg6[%c20_i32_220, %c0_i32_223] : memref<32x128xf32, #tpu.memory_space<vmem>> -> memref<1x128xf32, #tpu.memory_space<vmem>>
      %401 = tpu.memref_squeeze %400 : memref<1x128xf32, #tpu.memory_space<vmem>> -> memref<128xf32, #tpu.memory_space<vmem>>
      %402 = tpu.memref_slice %arg7[%c20_i32_221] : memref<32x!tpu.dma_semaphore, #tpu.memory_space<semaphore_mem>> -> memref<1x!tpu.dma_semaphore, #tpu.memory_space<semaphore_mem>>
      %403 = tpu.memref_squeeze %402 : memref<1x!tpu.dma_semaphore, #tpu.memory_space<semaphore_mem>> -> memref<!tpu.dma_semaphore, #tpu.memory_space<semaphore_mem>>
      tpu.wait_dma2 semaphore(%403 : memref<!tpu.dma_semaphore, #tpu.memory_space<semaphore_mem>>) src(%399 : memref<128xf32, #tpu.memory_space<any>>) dst(%401 : memref<128xf32, #tpu.memory_space<vmem>>)
      %c21_224 = arith.constant 21 : index
      %404 = memref.load %arg1[%c21_224] : memref<32xi32, #tpu.memory_space<smem>>
      %c21_i32_225 = arith.constant 21 : i32
      %c21_i32_226 = arith.constant 21 : i32
      %c0_i32_227 = arith.constant 0 : i32
      %405 = tpu.memref_slice %arg2[%404, %c0_i32_227] : memref<5000x128xf32, #tpu.memory_space<any>> -> memref<1x128xf32, #tpu.memory_space<any>>
      %406 = tpu.memref_squeeze %405 : memref<1x128xf32, #tpu.memory_space<any>> -> memref<128xf32, #tpu.memory_space<any>>
      %c0_i32_228 = arith.constant 0 : i32
      %407 = tpu.memref_slice %arg6[%c21_i32_225, %c0_i32_228] : memref<32x128xf32, #tpu.memory_space<vmem>> -> memref<1x128xf32, #tpu.memory_space<vmem>>
      %408 = tpu.memref_squeeze %407 : memref<1x128xf32, #tpu.memory_space<vmem>> -> memref<128xf32, #tpu.memory_space<vmem>>
      %409 = tpu.memref_slice %arg7[%c21_i32_226] : memref<32x!tpu.dma_semaphore, #tpu.memory_space<semaphore_mem>> -> memref<1x!tpu.dma_semaphore, #tpu.memory_space<semaphore_mem>>
      %410 = tpu.memref_squeeze %409 : memref<1x!tpu.dma_semaphore, #tpu.memory_space<semaphore_mem>> -> memref<!tpu.dma_semaphore, #tpu.memory_space<semaphore_mem>>
      tpu.wait_dma2 semaphore(%410 : memref<!tpu.dma_semaphore, #tpu.memory_space<semaphore_mem>>) src(%406 : memref<128xf32, #tpu.memory_space<any>>) dst(%408 : memref<128xf32, #tpu.memory_space<vmem>>)
      %c22_229 = arith.constant 22 : index
      %411 = memref.load %arg1[%c22_229] : memref<32xi32, #tpu.memory_space<smem>>
      %c22_i32_230 = arith.constant 22 : i32
      %c22_i32_231 = arith.constant 22 : i32
      %c0_i32_232 = arith.constant 0 : i32
      %412 = tpu.memref_slice %arg2[%411, %c0_i32_232] : memref<5000x128xf32, #tpu.memory_space<any>> -> memref<1x128xf32, #tpu.memory_space<any>>
      %413 = tpu.memref_squeeze %412 : memref<1x128xf32, #tpu.memory_space<any>> -> memref<128xf32, #tpu.memory_space<any>>
      %c0_i32_233 = arith.constant 0 : i32
      %414 = tpu.memref_slice %arg6[%c22_i32_230, %c0_i32_233] : memref<32x128xf32, #tpu.memory_space<vmem>> -> memref<1x128xf32, #tpu.memory_space<vmem>>
      %415 = tpu.memref_squeeze %414 : memref<1x128xf32, #tpu.memory_space<vmem>> -> memref<128xf32, #tpu.memory_space<vmem>>
      %416 = tpu.memref_slice %arg7[%c22_i32_231] : memref<32x!tpu.dma_semaphore, #tpu.memory_space<semaphore_mem>> -> memref<1x!tpu.dma_semaphore, #tpu.memory_space<semaphore_mem>>
      %417 = tpu.memref_squeeze %416 : memref<1x!tpu.dma_semaphore, #tpu.memory_space<semaphore_mem>> -> memref<!tpu.dma_semaphore, #tpu.memory_space<semaphore_mem>>
      tpu.wait_dma2 semaphore(%417 : memref<!tpu.dma_semaphore, #tpu.memory_space<semaphore_mem>>) src(%413 : memref<128xf32, #tpu.memory_space<any>>) dst(%415 : memref<128xf32, #tpu.memory_space<vmem>>)
      %c23_234 = arith.constant 23 : index
      %418 = memref.load %arg1[%c23_234] : memref<32xi32, #tpu.memory_space<smem>>
      %c23_i32_235 = arith.constant 23 : i32
      %c23_i32_236 = arith.constant 23 : i32
      %c0_i32_237 = arith.constant 0 : i32
      %419 = tpu.memref_slice %arg2[%418, %c0_i32_237] : memref<5000x128xf32, #tpu.memory_space<any>> -> memref<1x128xf32, #tpu.memory_space<any>>
      %420 = tpu.memref_squeeze %419 : memref<1x128xf32, #tpu.memory_space<any>> -> memref<128xf32, #tpu.memory_space<any>>
      %c0_i32_238 = arith.constant 0 : i32
      %421 = tpu.memref_slice %arg6[%c23_i32_235, %c0_i32_238] : memref<32x128xf32, #tpu.memory_space<vmem>> -> memref<1x128xf32, #tpu.memory_space<vmem>>
      %422 = tpu.memref_squeeze %421 : memref<1x128xf32, #tpu.memory_space<vmem>> -> memref<128xf32, #tpu.memory_space<vmem>>
      %423 = tpu.memref_slice %arg7[%c23_i32_236] : memref<32x!tpu.dma_semaphore, #tpu.memory_space<semaphore_mem>> -> memref<1x!tpu.dma_semaphore, #tpu.memory_space<semaphore_mem>>
      %424 = tpu.memref_squeeze %423 : memref<1x!tpu.dma_semaphore, #tpu.memory_space<semaphore_mem>> -> memref<!tpu.dma_semaphore, #tpu.memory_space<semaphore_mem>>
      tpu.wait_dma2 semaphore(%424 : memref<!tpu.dma_semaphore, #tpu.memory_space<semaphore_mem>>) src(%420 : memref<128xf32, #tpu.memory_space<any>>) dst(%422 : memref<128xf32, #tpu.memory_space<vmem>>)
      %c24_239 = arith.constant 24 : index
      %425 = memref.load %arg1[%c24_239] : memref<32xi32, #tpu.memory_space<smem>>
      %c24_i32_240 = arith.constant 24 : i32
      %c24_i32_241 = arith.constant 24 : i32
      %c0_i32_242 = arith.constant 0 : i32
      %426 = tpu.memref_slice %arg2[%425, %c0_i32_242] : memref<5000x128xf32, #tpu.memory_space<any>> -> memref<1x128xf32, #tpu.memory_space<any>>
      %427 = tpu.memref_squeeze %426 : memref<1x128xf32, #tpu.memory_space<any>> -> memref<128xf32, #tpu.memory_space<any>>
      %c0_i32_243 = arith.constant 0 : i32
      %428 = tpu.memref_slice %arg6[%c24_i32_240, %c0_i32_243] : memref<32x128xf32, #tpu.memory_space<vmem>> -> memref<1x128xf32, #tpu.memory_space<vmem>>
      %429 = tpu.memref_squeeze %428 : memref<1x128xf32, #tpu.memory_space<vmem>> -> memref<128xf32, #tpu.memory_space<vmem>>
      %430 = tpu.memref_slice %arg7[%c24_i32_241] : memref<32x!tpu.dma_semaphore, #tpu.memory_space<semaphore_mem>> -> memref<1x!tpu.dma_semaphore, #tpu.memory_space<semaphore_mem>>
      %431 = tpu.memref_squeeze %430 : memref<1x!tpu.dma_semaphore, #tpu.memory_space<semaphore_mem>> -> memref<!tpu.dma_semaphore, #tpu.memory_space<semaphore_mem>>
      tpu.wait_dma2 semaphore(%431 : memref<!tpu.dma_semaphore, #tpu.memory_space<semaphore_mem>>) src(%427 : memref<128xf32, #tpu.memory_space<any>>) dst(%429 : memref<128xf32, #tpu.memory_space<vmem>>)
      %c25_244 = arith.constant 25 : index
      %432 = memref.load %arg1[%c25_244] : memref<32xi32, #tpu.memory_space<smem>>
      %c25_i32_245 = arith.constant 25 : i32
      %c25_i32_246 = arith.constant 25 : i32
      %c0_i32_247 = arith.constant 0 : i32
      %433 = tpu.memref_slice %arg2[%432, %c0_i32_247] : memref<5000x128xf32, #tpu.memory_space<any>> -> memref<1x128xf32, #tpu.memory_space<any>>
      %434 = tpu.memref_squeeze %433 : memref<1x128xf32, #tpu.memory_space<any>> -> memref<128xf32, #tpu.memory_space<any>>
      %c0_i32_248 = arith.constant 0 : i32
      %435 = tpu.memref_slice %arg6[%c25_i32_245, %c0_i32_248] : memref<32x128xf32, #tpu.memory_space<vmem>> -> memref<1x128xf32, #tpu.memory_space<vmem>>
      %436 = tpu.memref_squeeze %435 : memref<1x128xf32, #tpu.memory_space<vmem>> -> memref<128xf32, #tpu.memory_space<vmem>>
      %437 = tpu.memref_slice %arg7[%c25_i32_246] : memref<32x!tpu.dma_semaphore, #tpu.memory_space<semaphore_mem>> -> memref<1x!tpu.dma_semaphore, #tpu.memory_space<semaphore_mem>>
      %438 = tpu.memref_squeeze %437 : memref<1x!tpu.dma_semaphore, #tpu.memory_space<semaphore_mem>> -> memref<!tpu.dma_semaphore, #tpu.memory_space<semaphore_mem>>
      tpu.wait_dma2 semaphore(%438 : memref<!tpu.dma_semaphore, #tpu.memory_space<semaphore_mem>>) src(%434 : memref<128xf32, #tpu.memory_space<any>>) dst(%436 : memref<128xf32, #tpu.memory_space<vmem>>)
      %c26_249 = arith.constant 26 : index
      %439 = memref.load %arg1[%c26_249] : memref<32xi32, #tpu.memory_space<smem>>
      %c26_i32_250 = arith.constant 26 : i32
      %c26_i32_251 = arith.constant 26 : i32
      %c0_i32_252 = arith.constant 0 : i32
      %440 = tpu.memref_slice %arg2[%439, %c0_i32_252] : memref<5000x128xf32, #tpu.memory_space<any>> -> memref<1x128xf32, #tpu.memory_space<any>>
      %441 = tpu.memref_squeeze %440 : memref<1x128xf32, #tpu.memory_space<any>> -> memref<128xf32, #tpu.memory_space<any>>
      %c0_i32_253 = arith.constant 0 : i32
      %442 = tpu.memref_slice %arg6[%c26_i32_250, %c0_i32_253] : memref<32x128xf32, #tpu.memory_space<vmem>> -> memref<1x128xf32, #tpu.memory_space<vmem>>
      %443 = tpu.memref_squeeze %442 : memref<1x128xf32, #tpu.memory_space<vmem>> -> memref<128xf32, #tpu.memory_space<vmem>>
      %444 = tpu.memref_slice %arg7[%c26_i32_251] : memref<32x!tpu.dma_semaphore, #tpu.memory_space<semaphore_mem>> -> memref<1x!tpu.dma_semaphore, #tpu.memory_space<semaphore_mem>>
      %445 = tpu.memref_squeeze %444 : memref<1x!tpu.dma_semaphore, #tpu.memory_space<semaphore_mem>> -> memref<!tpu.dma_semaphore, #tpu.memory_space<semaphore_mem>>
      tpu.wait_dma2 semaphore(%445 : memref<!tpu.dma_semaphore, #tpu.memory_space<semaphore_mem>>) src(%441 : memref<128xf32, #tpu.memory_space<any>>) dst(%443 : memref<128xf32, #tpu.memory_space<vmem>>)
      %c27_254 = arith.constant 27 : index
      %446 = memref.load %arg1[%c27_254] : memref<32xi32, #tpu.memory_space<smem>>
      %c27_i32_255 = arith.constant 27 : i32
      %c27_i32_256 = arith.constant 27 : i32
      %c0_i32_257 = arith.constant 0 : i32
      %447 = tpu.memref_slice %arg2[%446, %c0_i32_257] : memref<5000x128xf32, #tpu.memory_space<any>> -> memref<1x128xf32, #tpu.memory_space<any>>
      %448 = tpu.memref_squeeze %447 : memref<1x128xf32, #tpu.memory_space<any>> -> memref<128xf32, #tpu.memory_space<any>>
      %c0_i32_258 = arith.constant 0 : i32
      %449 = tpu.memref_slice %arg6[%c27_i32_255, %c0_i32_258] : memref<32x128xf32, #tpu.memory_space<vmem>> -> memref<1x128xf32, #tpu.memory_space<vmem>>
      %450 = tpu.memref_squeeze %449 : memref<1x128xf32, #tpu.memory_space<vmem>> -> memref<128xf32, #tpu.memory_space<vmem>>
      %451 = tpu.memref_slice %arg7[%c27_i32_256] : memref<32x!tpu.dma_semaphore, #tpu.memory_space<semaphore_mem>> -> memref<1x!tpu.dma_semaphore, #tpu.memory_space<semaphore_mem>>
      %452 = tpu.memref_squeeze %451 : memref<1x!tpu.dma_semaphore, #tpu.memory_space<semaphore_mem>> -> memref<!tpu.dma_semaphore, #tpu.memory_space<semaphore_mem>>
      tpu.wait_dma2 semaphore(%452 : memref<!tpu.dma_semaphore, #tpu.memory_space<semaphore_mem>>) src(%448 : memref<128xf32, #tpu.memory_space<any>>) dst(%450 : memref<128xf32, #tpu.memory_space<vmem>>)
      %c28_259 = arith.constant 28 : index
      %453 = memref.load %arg1[%c28_259] : memref<32xi32, #tpu.memory_space<smem>>
      %c28_i32_260 = arith.constant 28 : i32
      %c28_i32_261 = arith.constant 28 : i32
      %c0_i32_262 = arith.constant 0 : i32
      %454 = tpu.memref_slice %arg2[%453, %c0_i32_262] : memref<5000x128xf32, #tpu.memory_space<any>> -> memref<1x128xf32, #tpu.memory_space<any>>
      %455 = tpu.memref_squeeze %454 : memref<1x128xf32, #tpu.memory_space<any>> -> memref<128xf32, #tpu.memory_space<any>>
      %c0_i32_263 = arith.constant 0 : i32
      %456 = tpu.memref_slice %arg6[%c28_i32_260, %c0_i32_263] : memref<32x128xf32, #tpu.memory_space<vmem>> -> memref<1x128xf32, #tpu.memory_space<vmem>>
      %457 = tpu.memref_squeeze %456 : memref<1x128xf32, #tpu.memory_space<vmem>> -> memref<128xf32, #tpu.memory_space<vmem>>
      %458 = tpu.memref_slice %arg7[%c28_i32_261] : memref<32x!tpu.dma_semaphore, #tpu.memory_space<semaphore_mem>> -> memref<1x!tpu.dma_semaphore, #tpu.memory_space<semaphore_mem>>
      %459 = tpu.memref_squeeze %458 : memref<1x!tpu.dma_semaphore, #tpu.memory_space<semaphore_mem>> -> memref<!tpu.dma_semaphore, #tpu.memory_space<semaphore_mem>>
      tpu.wait_dma2 semaphore(%459 : memref<!tpu.dma_semaphore, #tpu.memory_space<semaphore_mem>>) src(%455 : memref<128xf32, #tpu.memory_space<any>>) dst(%457 : memref<128xf32, #tpu.memory_space<vmem>>)
      %c29_264 = arith.constant 29 : index
      %460 = memref.load %arg1[%c29_264] : memref<32xi32, #tpu.memory_space<smem>>
      %c29_i32_265 = arith.constant 29 : i32
      %c29_i32_266 = arith.constant 29 : i32
      %c0_i32_267 = arith.constant 0 : i32
      %461 = tpu.memref_slice %arg2[%460, %c0_i32_267] : memref<5000x128xf32, #tpu.memory_space<any>> -> memref<1x128xf32, #tpu.memory_space<any>>
      %462 = tpu.memref_squeeze %461 : memref<1x128xf32, #tpu.memory_space<any>> -> memref<128xf32, #tpu.memory_space<any>>
      %c0_i32_268 = arith.constant 0 : i32
      %463 = tpu.memref_slice %arg6[%c29_i32_265, %c0_i32_268] : memref<32x128xf32, #tpu.memory_space<vmem>> -> memref<1x128xf32, #tpu.memory_space<vmem>>
      %464 = tpu.memref_squeeze %463 : memref<1x128xf32, #tpu.memory_space<vmem>> -> memref<128xf32, #tpu.memory_space<vmem>>
      %465 = tpu.memref_slice %arg7[%c29_i32_266] : memref<32x!tpu.dma_semaphore, #tpu.memory_space<semaphore_mem>> -> memref<1x!tpu.dma_semaphore, #tpu.memory_space<semaphore_mem>>
      %466 = tpu.memref_squeeze %465 : memref<1x!tpu.dma_semaphore, #tpu.memory_space<semaphore_mem>> -> memref<!tpu.dma_semaphore, #tpu.memory_space<semaphore_mem>>
      tpu.wait_dma2 semaphore(%466 : memref<!tpu.dma_semaphore, #tpu.memory_space<semaphore_mem>>) src(%462 : memref<128xf32, #tpu.memory_space<any>>) dst(%464 : memref<128xf32, #tpu.memory_space<vmem>>)
      %c30_269 = arith.constant 30 : index
      %467 = memref.load %arg1[%c30_269] : memref<32xi32, #tpu.memory_space<smem>>
      %c30_i32_270 = arith.constant 30 : i32
      %c30_i32_271 = arith.constant 30 : i32
      %c0_i32_272 = arith.constant 0 : i32
      %468 = tpu.memref_slice %arg2[%467, %c0_i32_272] : memref<5000x128xf32, #tpu.memory_space<any>> -> memref<1x128xf32, #tpu.memory_space<any>>
      %469 = tpu.memref_squeeze %468 : memref<1x128xf32, #tpu.memory_space<any>> -> memref<128xf32, #tpu.memory_space<any>>
      %c0_i32_273 = arith.constant 0 : i32
      %470 = tpu.memref_slice %arg6[%c30_i32_270, %c0_i32_273] : memref<32x128xf32, #tpu.memory_space<vmem>> -> memref<1x128xf32, #tpu.memory_space<vmem>>
      %471 = tpu.memref_squeeze %470 : memref<1x128xf32, #tpu.memory_space<vmem>> -> memref<128xf32, #tpu.memory_space<vmem>>
      %472 = tpu.memref_slice %arg7[%c30_i32_271] : memref<32x!tpu.dma_semaphore, #tpu.memory_space<semaphore_mem>> -> memref<1x!tpu.dma_semaphore, #tpu.memory_space<semaphore_mem>>
      %473 = tpu.memref_squeeze %472 : memref<1x!tpu.dma_semaphore, #tpu.memory_space<semaphore_mem>> -> memref<!tpu.dma_semaphore, #tpu.memory_space<semaphore_mem>>
      tpu.wait_dma2 semaphore(%473 : memref<!tpu.dma_semaphore, #tpu.memory_space<semaphore_mem>>) src(%469 : memref<128xf32, #tpu.memory_space<any>>) dst(%471 : memref<128xf32, #tpu.memory_space<vmem>>)
      %c31_274 = arith.constant 31 : index
      %474 = memref.load %arg1[%c31_274] : memref<32xi32, #tpu.memory_space<smem>>
      %c31_i32_275 = arith.constant 31 : i32
      %c31_i32_276 = arith.constant 31 : i32
      %c0_i32_277 = arith.constant 0 : i32
      %475 = tpu.memref_slice %arg2[%474, %c0_i32_277] : memref<5000x128xf32, #tpu.memory_space<any>> -> memref<1x128xf32, #tpu.memory_space<any>>
      %476 = tpu.memref_squeeze %475 : memref<1x128xf32, #tpu.memory_space<any>> -> memref<128xf32, #tpu.memory_space<any>>
      %c0_i32_278 = arith.constant 0 : i32
      %477 = tpu.memref_slice %arg6[%c31_i32_275, %c0_i32_278] : memref<32x128xf32, #tpu.memory_space<vmem>> -> memref<1x128xf32, #tpu.memory_space<vmem>>
      %478 = tpu.memref_squeeze %477 : memref<1x128xf32, #tpu.memory_space<vmem>> -> memref<128xf32, #tpu.memory_space<vmem>>
      %479 = tpu.memref_slice %arg7[%c31_i32_276] : memref<32x!tpu.dma_semaphore, #tpu.memory_space<semaphore_mem>> -> memref<1x!tpu.dma_semaphore, #tpu.memory_space<semaphore_mem>>
      %480 = tpu.memref_squeeze %479 : memref<1x!tpu.dma_semaphore, #tpu.memory_space<semaphore_mem>> -> memref<!tpu.dma_semaphore, #tpu.memory_space<semaphore_mem>>
      tpu.wait_dma2 semaphore(%480 : memref<!tpu.dma_semaphore, #tpu.memory_space<semaphore_mem>>) src(%476 : memref<128xf32, #tpu.memory_space<any>>) dst(%478 : memref<128xf32, #tpu.memory_space<vmem>>)
      %c0_279 = arith.constant 0 : index
      %c0_280 = arith.constant 0 : index
      %481 = vector.load %arg6[%c0_279, %c0_280] : memref<32x128xf32, #tpu.memory_space<vmem>>, vector<4x128xf32>
      %cst_281 = arith.constant dense<0.000000e+00> : vector<128xf32>
      %482 = vector.multi_reduction <add>, %481, %cst_281 [0] : vector<4x128xf32> to vector<128xf32>
      %483 = vector.shape_cast %482 : vector<128xf32> to vector<1x128xf32>
      %cst_282 = arith.constant 2.500000e-01 : f32
      %484 = vector.broadcast %cst_282 : f32 to vector<1x128xf32>
      %485 = arith.mulf %483, %484 : vector<1x128xf32>
      %c0_283 = arith.constant 0 : index
      %c0_284 = arith.constant 0 : index
      %486 = vector.load %arg8[%c0_283, %c0_284] : memref<8x128xf32, #tpu.memory_space<vmem>>, vector<1x128xf32>
      tpu.vector_store %arg8[%c0_283, %c0_284], %485 {strides = array<i32>} : memref<8x128xf32, #tpu.memory_space<vmem>>, vector<1x128xf32>,
      %c4_285 = arith.constant 4 : index
      %c0_286 = arith.constant 0 : index
      %487 = vector.load %arg6[%c4_285, %c0_286] : memref<32x128xf32, #tpu.memory_space<vmem>>, vector<4x128xf32>
      %cst_287 = arith.constant dense<0.000000e+00> : vector<128xf32>
      %488 = vector.multi_reduction <add>, %487, %cst_287 [0] : vector<4x128xf32> to vector<128xf32>
      %489 = vector.shape_cast %488 : vector<128xf32> to vector<1x128xf32>
      %cst_288 = arith.constant 2.500000e-01 : f32
      %490 = vector.broadcast %cst_288 : f32 to vector<1x128xf32>
      %491 = arith.mulf %489, %490 : vector<1x128xf32>
      %c1_289 = arith.constant 1 : index
      %c0_290 = arith.constant 0 : index
      %492 = vector.load %arg8[%c1_289, %c0_290] : memref<8x128xf32, #tpu.memory_space<vmem>>, vector<1x128xf32>
      tpu.vector_store %arg8[%c1_289, %c0_290], %491 {strides = array<i32>} : memref<8x128xf32, #tpu.memory_space<vmem>>, vector<1x128xf32>,
      %c8_291 = arith.constant 8 : index
      %c0_292 = arith.constant 0 : index
      %493 = vector.load %arg6[%c8_291, %c0_292] : memref<32x128xf32, #tpu.memory_space<vmem>>, vector<4x128xf32>
      %cst_293 = arith.constant dense<0.000000e+00> : vector<128xf32>
      %494 = vector.multi_reduction <add>, %493, %cst_293 [0] : vector<4x128xf32> to vector<128xf32>
      %495 = vector.shape_cast %494 : vector<128xf32> to vector<1x128xf32>
      %cst_294 = arith.constant 2.500000e-01 : f32
      %496 = vector.broadcast %cst_294 : f32 to vector<1x128xf32>
      %497 = arith.mulf %495, %496 : vector<1x128xf32>
      %c2_295 = arith.constant 2 : index
      %c0_296 = arith.constant 0 : index
      %498 = vector.load %arg8[%c2_295, %c0_296] : memref<8x128xf32, #tpu.memory_space<vmem>>, vector<1x128xf32>
      tpu.vector_store %arg8[%c2_295, %c0_296], %497 {strides = array<i32>} : memref<8x128xf32, #tpu.memory_space<vmem>>, vector<1x128xf32>,
      %c12_297 = arith.constant 12 : index
      %c0_298 = arith.constant 0 : index
      %499 = vector.load %arg6[%c12_297, %c0_298] : memref<32x128xf32, #tpu.memory_space<vmem>>, vector<4x128xf32>
      %cst_299 = arith.constant dense<0.000000e+00> : vector<128xf32>
      %500 = vector.multi_reduction <add>, %499, %cst_299 [0] : vector<4x128xf32> to vector<128xf32>
      %501 = vector.shape_cast %500 : vector<128xf32> to vector<1x128xf32>
      %cst_300 = arith.constant 2.500000e-01 : f32
      %502 = vector.broadcast %cst_300 : f32 to vector<1x128xf32>
      %503 = arith.mulf %501, %502 : vector<1x128xf32>
      %c3_301 = arith.constant 3 : index
      %c0_302 = arith.constant 0 : index
      %504 = vector.load %arg8[%c3_301, %c0_302] : memref<8x128xf32, #tpu.memory_space<vmem>>, vector<1x128xf32>
      tpu.vector_store %arg8[%c3_301, %c0_302], %503 {strides = array<i32>} : memref<8x128xf32, #tpu.memory_space<vmem>>, vector<1x128xf32>,
      %c16_303 = arith.constant 16 : index
      %c0_304 = arith.constant 0 : index
      %505 = vector.load %arg6[%c16_303, %c0_304] : memref<32x128xf32, #tpu.memory_space<vmem>>, vector<4x128xf32>
      %cst_305 = arith.constant dense<0.000000e+00> : vector<128xf32>
      %506 = vector.multi_reduction <add>, %505, %cst_305 [0] : vector<4x128xf32> to vector<128xf32>
      %507 = vector.shape_cast %506 : vector<128xf32> to vector<1x128xf32>
      %cst_306 = arith.constant 2.500000e-01 : f32
      %508 = vector.broadcast %cst_306 : f32 to vector<1x128xf32>
      %509 = arith.mulf %507, %508 : vector<1x128xf32>
      %c4_307 = arith.constant 4 : index
      %c0_308 = arith.constant 0 : index
      %510 = vector.load %arg8[%c4_307, %c0_308] : memref<8x128xf32, #tpu.memory_space<vmem>>, vector<1x128xf32>
      tpu.vector_store %arg8[%c4_307, %c0_308], %509 {strides = array<i32>} : memref<8x128xf32, #tpu.memory_space<vmem>>, vector<1x128xf32>,
      %c20_309 = arith.constant 20 : index
      %c0_310 = arith.constant 0 : index
      %511 = vector.load %arg6[%c20_309, %c0_310] : memref<32x128xf32, #tpu.memory_space<vmem>>, vector<4x128xf32>
      %cst_311 = arith.constant dense<0.000000e+00> : vector<128xf32>
      %512 = vector.multi_reduction <add>, %511, %cst_311 [0] : vector<4x128xf32> to vector<128xf32>
      %513 = vector.shape_cast %512 : vector<128xf32> to vector<1x128xf32>
      %cst_312 = arith.constant 2.500000e-01 : f32
      %514 = vector.broadcast %cst_312 : f32 to vector<1x128xf32>
      %515 = arith.mulf %513, %514 : vector<1x128xf32>
      %c5_313 = arith.constant 5 : index
      %c0_314 = arith.constant 0 : index
      %516 = vector.load %arg8[%c5_313, %c0_314] : memref<8x128xf32, #tpu.memory_space<vmem>>, vector<1x128xf32>
      tpu.vector_store %arg8[%c5_313, %c0_314], %515 {strides = array<i32>} : memref<8x128xf32, #tpu.memory_space<vmem>>, vector<1x128xf32>,
      %c24_315 = arith.constant 24 : index
      %c0_316 = arith.constant 0 : index
      %517 = vector.load %arg6[%c24_315, %c0_316] : memref<32x128xf32, #tpu.memory_space<vmem>>, vector<4x128xf32>
      %cst_317 = arith.constant dense<0.000000e+00> : vector<128xf32>
      %518 = vector.multi_reduction <add>, %517, %cst_317 [0] : vector<4x128xf32> to vector<128xf32>
      %519 = vector.shape_cast %518 : vector<128xf32> to vector<1x128xf32>
      %cst_318 = arith.constant 2.500000e-01 : f32
      %520 = vector.broadcast %cst_318 : f32 to vector<1x128xf32>
      %521 = arith.mulf %519, %520 : vector<1x128xf32>
      %c6_319 = arith.constant 6 : index
      %c0_320 = arith.constant 0 : index
      %522 = vector.load %arg8[%c6_319, %c0_320] : memref<8x128xf32, #tpu.memory_space<vmem>>, vector<1x128xf32>
      tpu.vector_store %arg8[%c6_319, %c0_320], %521 {strides = array<i32>} : memref<8x128xf32, #tpu.memory_space<vmem>>, vector<1x128xf32>,
      %c28_321 = arith.constant 28 : index
      %c0_322 = arith.constant 0 : index
      %523 = vector.load %arg6[%c28_321, %c0_322] : memref<32x128xf32, #tpu.memory_space<vmem>>, vector<4x128xf32>
      %cst_323 = arith.constant dense<0.000000e+00> : vector<128xf32>
      %524 = vector.multi_reduction <add>, %523, %cst_323 [0] : vector<4x128xf32> to vector<128xf32>
      %525 = vector.shape_cast %524 : vector<128xf32> to vector<1x128xf32>
      %cst_324 = arith.constant 2.500000e-01 : f32
      %526 = vector.broadcast %cst_324 : f32 to vector<1x128xf32>
      %527 = arith.mulf %525, %526 : vector<1x128xf32>
      %c7_325 = arith.constant 7 : index
      %c0_326 = arith.constant 0 : index
      %528 = vector.load %arg8[%c7_325, %c0_326] : memref<8x128xf32, #tpu.memory_space<vmem>>, vector<1x128xf32>
      tpu.vector_store %arg8[%c7_325, %c0_326], %527 {strides = array<i32>} : memref<8x128xf32, #tpu.memory_space<vmem>>, vector<1x128xf32>,
      %c0_327 = arith.constant 0 : index
      %c0_328 = arith.constant 0 : index
      %529 = vector.load %arg8[%c0_327, %c0_328] : memref<8x128xf32, #tpu.memory_space<vmem>>, vector<8x128xf32>
      %530 = arith.truncf %529 : vector<8x128xf32> to vector<8x128xbf16>
      %c0_329 = arith.constant 0 : index
      %c0_330 = arith.constant 0 : index
      %531 = vector.load %arg9[%c0_329, %c0_330] : memref<8x128xbf16, #tpu.memory_space<vmem>>, vector<8x128xbf16>
      tpu.vector_store %arg9[%c0_329, %c0_330], %530 {strides = array<i32>} : memref<8x128xbf16, #tpu.memory_space<vmem>>, vector<8x128xbf16>,
      %cst_331 = arith.constant 0xFF800000 : f32
      %532 = vector.broadcast %cst_331 : f32 to vector<8x1xf32>
      %c0_332 = arith.constant 0 : index
      %c0_333 = arith.constant 0 : index
      %533 = vector.load %arg10[%c0_332, %c0_333] : memref<8x1xf32, #tpu.memory_space<vmem>>, vector<8x1xf32>
      tpu.vector_store %arg10[%c0_332, %c0_333], %532 {strides = array<i32>} : memref<8x1xf32, #tpu.memory_space<vmem>>, vector<8x1xf32>,
      %cst_334 = arith.constant 0.000000e+00 : f32
      %534 = vector.broadcast %cst_334 : f32 to vector<8x1xf32>
      %c0_335 = arith.constant 0 : index
      %c0_336 = arith.constant 0 : index
      %535 = vector.load %arg11[%c0_335, %c0_336] : memref<8x1xf32, #tpu.memory_space<vmem>>, vector<8x1xf32>
      tpu.vector_store %arg11[%c0_335, %c0_336], %534 {strides = array<i32>} : memref<8x1xf32, #tpu.memory_space<vmem>>, vector<8x1xf32>,
    } else {
    }
    %c0 = arith.constant 0 : index
    %c0_1 = arith.constant 0 : index
    %3 = vector.load %arg9[%c0, %c0_1] : memref<8x128xbf16, #tpu.memory_space<vmem>>, vector<8x128xbf16>
    %c0_2 = arith.constant 0 : index
    %c0_3 = arith.constant 0 : index
    %4 = vector.load %arg3[%c0_2, %c0_3] : memref<128x2048xbf16, #tpu.memory_space<vmem>>, vector<128x2048xbf16>
    %cst = arith.constant dense<0.000000e+00> : vector<8x2048xf32>
    %5 = tpu.matmul %3, %4, %cst {dimension_numbers = #tpu.dot_dimension_numbers<[1], [0], [0], [1], [0, 0, 1, 1], [], []>} : vector<8x128xbf16>, vector<128x2048xbf16>, vector<8x2048xf32> -> vector<8x2048xf32>
    %c0_4 = arith.constant 0 : index
    %c0_5 = arith.constant 0 : index
    %6 = vector.load %arg4[%c0_4, %c0_5] : memref<1x2048xf32, #tpu.memory_space<vmem>>, vector<1x2048xf32>
    %7 = vector.broadcast %6 : vector<1x2048xf32> to vector<8x2048xf32>
    %8 = arith.addf %5, %7 : vector<8x2048xf32>
    %c2048_i32 = arith.constant 2048 : i32
    %9 = arith.muli %arg0, %c2048_i32 : i32
    %10 = tpu.assume_multiple %9, 2048 : i32
    %c0_6 = arith.constant 0 : index
    %11 = arith.index_cast %10 : i32 to index
    %12 = vector.load %arg5[%c0_6, %11] : memref<8x6144xf32, #tpu.memory_space<vmem>>, vector<8x2048xf32>
    tpu.vector_store %arg5[%c0_6, %11], %8 {strides = array<i32>} : memref<8x6144xf32, #tpu.memory_space<vmem>>, vector<8x2048xf32>,
    %cst_7 = arith.constant dense<0xFF800000> : vector<8xf32>
    %13 = vector.multi_reduction <maximumf>, %8, %cst_7 [1] : vector<8x2048xf32> to vector<8xf32>
    %14 = vector.shape_cast %13 : vector<8xf32> to vector<8x1xf32>
    %c0_8 = arith.constant 0 : index
    %c0_9 = arith.constant 0 : index
    %15 = vector.load %arg10[%c0_8, %c0_9] : memref<8x1xf32, #tpu.memory_space<vmem>>, vector<8x1xf32>
    %16 = arith.maximumf %15, %14 : vector<8x1xf32>
    %c0_10 = arith.constant 0 : index
    %c0_11 = arith.constant 0 : index
    %17 = vector.load %arg11[%c0_10, %c0_11] : memref<8x1xf32, #tpu.memory_space<vmem>>, vector<8x1xf32>
    %c0_12 = arith.constant 0 : index
    %c0_13 = arith.constant 0 : index
    %18 = vector.load %arg10[%c0_12, %c0_13] : memref<8x1xf32, #tpu.memory_space<vmem>>, vector<8x1xf32>
    %19 = arith.subf %18, %16 : vector<8x1xf32>
    %20 = math.exp %19 : vector<8x1xf32>
    %21 = arith.mulf %17, %20 : vector<8x1xf32>
    %22 = vector.broadcast %16 : vector<8x1xf32> to vector<8x2048xf32>
    %23 = arith.subf %8, %22 : vector<8x2048xf32>
    %24 = math.exp %23 : vector<8x2048xf32>
    %cst_14 = arith.constant dense<0.000000e+00> : vector<8xf32>
    %25 = vector.multi_reduction <add>, %24, %cst_14 [1] : vector<8x2048xf32> to vector<8xf32>
    %26 = vector.shape_cast %25 : vector<8xf32> to vector<8x1xf32>
    %27 = arith.addf %21, %26 : vector<8x1xf32>
    %c0_15 = arith.constant 0 : index
    %c0_16 = arith.constant 0 : index
    %28 = vector.load %arg11[%c0_15, %c0_16] : memref<8x1xf32, #tpu.memory_space<vmem>>, vector<8x1xf32>
    tpu.vector_store %arg11[%c0_15, %c0_16], %27 {strides = array<i32>} : memref<8x1xf32, #tpu.memory_space<vmem>>, vector<8x1xf32>,
    %c0_17 = arith.constant 0 : index
    %c0_18 = arith.constant 0 : index
    %29 = vector.load %arg10[%c0_17, %c0_18] : memref<8x1xf32, #tpu.memory_space<vmem>>, vector<8x1xf32>
    tpu.vector_store %arg10[%c0_17, %c0_18], %16 {strides = array<i32>} : memref<8x1xf32, #tpu.memory_space<vmem>>, vector<8x1xf32>,
    %c2_i32 = arith.constant 2 : i32
    %30 = arith.cmpi eq, %arg0, %c2_i32 : i32
    %31 = arith.extui %30 : i1 to i32
    %c0_i32_19 = arith.constant 0 : i32
    %32 = arith.cmpi ne, %31, %c0_i32_19 : i32
    scf.if %32 {
      %c0_20 = arith.constant 0 : index
      %c0_21 = arith.constant 0 : index
      %33 = vector.load %arg5[%c0_20, %c0_21] : memref<8x6144xf32, #tpu.memory_space<vmem>>, vector<8x6144xf32>
      %c0_22 = arith.constant 0 : index
      %c0_23 = arith.constant 0 : index
      %34 = vector.load %arg10[%c0_22, %c0_23] : memref<8x1xf32, #tpu.memory_space<vmem>>, vector<8x1xf32>
      %c0_24 = arith.constant 0 : index
      %c0_25 = arith.constant 0 : index
      %35 = vector.load %arg11[%c0_24, %c0_25] : memref<8x1xf32, #tpu.memory_space<vmem>>, vector<8x1xf32>
      %36 = math.log %35 : vector<8x1xf32>
      %37 = arith.addf %34, %36 : vector<8x1xf32>
      %38 = vector.broadcast %37 : vector<8x1xf32> to vector<8x6144xf32>
      %39 = arith.subf %33, %38 : vector<8x6144xf32>
      %c0_26 = arith.constant 0 : index
      %c0_27 = arith.constant 0 : index
      %40 = vector.load %arg5[%c0_26, %c0_27] : memref<8x6144xf32, #tpu.memory_space<vmem>>, vector<8x6144xf32>
      tpu.vector_store %arg5[%c0_26, %c0_27], %39 {strides = array<i32>} : memref<8x6144xf32, #tpu.memory_space<vmem>>, vector<8x6144xf32>,
    } else {
    }
    return
  }
  func.func @transform_1(%arg0: i32, %arg1: memref<32xi32, #tpu.memory_space<smem>>) -> (i32, i32) {
    %c0_i32 = arith.constant 0 : i32
    %c0_i32_0 = arith.constant 0 : i32
    return %c0_i32, %arg0 : i32, i32
  }
  func.func @transform_2(%arg0: i32, %arg1: memref<32xi32, #tpu.memory_space<smem>>) -> (i32, i32) {
    %c0_i32 = arith.constant 0 : i32
    %c0_i32_0 = arith.constant 0 : i32
    return %c0_i32, %arg0 : i32, i32
  }
  func.func @transform_3(%arg0: i32, %arg1: memref<32xi32, #tpu.memory_space<smem>>) -> (i32, i32) {
    %c0_i32 = arith.constant 0 : i32
    %c0_i32_0 = arith.constant 0 : i32
    %c0_i32_1 = arith.constant 0 : i32
    return %c0_i32, %c0_i32_0 : i32, i32
  }
}

</mosaic_0001>

<llo_original>
// kernel: tpu_custom_call.1
$region0: #{tpu_custom_call.1}
  #allocation0 [shape = 'u32[]', space=smem, size = 0x4, offset = 0x4, fixed_abs, tag = 'smem constant byte address 0x4 - core index']
  #allocation1 [shape = 'u32[144,128]{1,0:T(1,128)}', space=vmem, size = 0x12000, scoped, tag = 'internal scratch']
  #allocation2 [shape = 'f32[32,128]{1,0:T(8,128)}', space=vmem, size = 0x4000, scoped, tag = 'scratch operand']
  #allocation3 [shape = 's32[32]{0}', space=sflag, size = 0x80, scoped, tag = 'scratch operand']
  #allocation4 [shape = 'f32[8,128]{1,0:T(8,128)}', space=vmem, size = 0x1000, scoped, tag = 'scratch operand']
  #allocation5 [shape = 'bf16[8,128]{1,0:T(8,128)(2,1)}', space=vmem, size = 0x800, scoped, tag = 'scratch operand']
  #allocation6 [shape = 'f32[8,1]{1,0:T(8,128)}', space=vmem, size = 0x1000, scoped, tag = 'scratch operand']
  #allocation7 [shape = 'f32[8,1]{1,0:T(8,128)}', space=vmem, size = 0x1000, scoped, tag = 'scratch operand']
  #allocation8 [shape = 's32[1]{0}', space=sflag, size = 0x4, scoped, tag = 'scoped memory for tpu_custom_call.1']
  #allocation9 [shape = 'u8[512]{0}', space=smem, size = 0x200, scoped, tag = 'prefetched SMEM operand 0']
  #allocation16 [shape = 's32[]', space=sflag, size = 0x4, offset = 0, fixed_abs, tag = 'sflag constant byte address 0x0 - dummy sync flag']
  #allocation17 [shape = 's32[]', space=sflag, size = 0x4, offset = 0, fixed_abs, tag = 'sflag constant byte address 0x0 - dummy sync flag']
  #allocation18 [shape = 'u32[]', space=smem, size = 0x4, offset = 0x44, fixed_abs, tag = 'smem constant byte address 0x44 - assertion arg 0']
  #allocation19 [shape = 'u32[]', space=smem, size = 0x4, offset = 0x48, fixed_abs, tag = 'smem constant byte address 0x48 - assertion arg 1']
  #allocation20 [shape = 's32[]', space=sflag, size = 0x4, offset = 0, fixed_abs, tag = 'sflag constant byte address 0x0 - dummy sync flag']
  #allocation21 [shape = 's32[]', space=sflag, size = 0x4, offset = 0, fixed_abs, tag = 'sflag constant byte address 0x0 - dummy sync flag']
  #allocation22 [shape = 's32[]', space=sflag, size = 0x4, offset = 0, fixed_abs, tag = 'sflag constant byte address 0x0 - dummy sync flag']
  #allocation23 [shape = 's32[]', space=sflag, size = 0x4, offset = 0, fixed_abs, tag = 'sflag constant byte address 0x0 - dummy sync flag']
  #allocation24 [shape = 's32[]', space=sflag, size = 0x4, offset = 0, fixed_abs, tag = 'sflag constant byte address 0x0 - dummy sync flag']
  #allocation25 [shape = 's32[]', space=sflag, size = 0x4, offset = 0, fixed_abs, tag = 'sflag constant byte address 0x0 - dummy sync flag']
  #allocation26 [shape = 's32[]', space=sflag, size = 0x4, offset = 0, fixed_abs, tag = 'sflag constant byte address 0x0 - dummy sync flag']
  #allocation27 [shape = 's32[]', space=sflag, size = 0x4, offset = 0, fixed_abs, tag = 'sflag constant byte address 0x0 - dummy sync flag']
  #allocation28 [shape = 's32[]', space=sflag, size = 0x4, offset = 0, fixed_abs, tag = 'sflag constant byte address 0x0 - dummy sync flag']
  #allocation29 [shape = 's32[]', space=sflag, size = 0x4, offset = 0, fixed_abs, tag = 'sflag constant byte address 0x0 - dummy sync flag']
  #allocation30 [shape = 's32[]', space=sflag, size = 0x4, offset = 0, fixed_abs, tag = 'sflag constant byte address 0x0 - dummy sync flag']
  #allocation31 [shape = 's32[]', space=sflag, size = 0x4, offset = 0, fixed_abs, tag = 'sflag constant byte address 0x0 - dummy sync flag']
  #allocation32 [shape = 's32[]', space=sflag, size = 0x4, offset = 0, fixed_abs, tag = 'sflag constant byte address 0x0 - dummy sync flag']
  #allocation33 [shape = 's32[]', space=sflag, size = 0x4, offset = 0, fixed_abs, tag = 'sflag constant byte address 0x0 - dummy sync flag']
  #allocation34 [shape = 's32[]', space=sflag, size = 0x4, offset = 0, fixed_abs, tag = 'sflag constant byte address 0x0 - dummy sync flag']
  #allocation35 [shape = 's32[]', space=sflag, size = 0x4, offset = 0, fixed_abs, tag = 'sflag constant byte address 0x0 - dummy sync flag']
  #allocation36 [shape = 's32[]', space=sflag, size = 0x4, offset = 0, fixed_abs, tag = 'sflag constant byte address 0x0 - dummy sync flag']
  #allocation37 [shape = 's32[]', space=sflag, size = 0x4, offset = 0, fixed_abs, tag = 'sflag constant byte address 0x0 - dummy sync flag']
  #allocation38 [shape = 's32[]', space=sflag, size = 0x4, offset = 0, fixed_abs, tag = 'sflag constant byte address 0x0 - dummy sync flag']
  #allocation39 [shape = 's32[]', space=sflag, size = 0x4, offset = 0, fixed_abs, tag = 'sflag constant byte address 0x0 - dummy sync flag']
  #allocation40 [shape = 's32[]', space=sflag, size = 0x4, offset = 0, fixed_abs, tag = 'sflag constant byte address 0x0 - dummy sync flag']
  #allocation41 [shape = 's32[]', space=sflag, size = 0x4, offset = 0, fixed_abs, tag = 'sflag constant byte address 0x0 - dummy sync flag']
  #allocation42 [shape = 's32[]', space=sflag, size = 0x4, offset = 0, fixed_abs, tag = 'sflag constant byte address 0x0 - dummy sync flag']
  #allocation43 [shape = 's32[]', space=sflag, size = 0x4, offset = 0, fixed_abs, tag = 'sflag constant byte address 0x0 - dummy sync flag']
  #allocation44 [shape = 's32[]', space=sflag, size = 0x4, offset = 0, fixed_abs, tag = 'sflag constant byte address 0x0 - dummy sync flag']
  #allocation45 [shape = 's32[]', space=sflag, size = 0x4, offset = 0, fixed_abs, tag = 'sflag constant byte address 0x0 - dummy sync flag']
  #allocation46 [shape = 's32[]', space=sflag, size = 0x4, offset = 0, fixed_abs, tag = 'sflag constant byte address 0x0 - dummy sync flag']
  #allocation47 [shape = 's32[]', space=sflag, size = 0x4, offset = 0, fixed_abs, tag = 'sflag constant byte address 0x0 - dummy sync flag']
  #allocation48 [shape = 's32[]', space=sflag, size = 0x4, offset = 0, fixed_abs, tag = 'sflag constant byte address 0x0 - dummy sync flag']
  #allocation49 [shape = 's32[]', space=sflag, size = 0x4, offset = 0, fixed_abs, tag = 'sflag constant byte address 0x0 - dummy sync flag']
  #allocation50 [shape = 's32[]', space=sflag, size = 0x4, offset = 0, fixed_abs, tag = 'sflag constant byte address 0x0 - dummy sync flag']
  #allocation51 [shape = 's32[]', space=sflag, size = 0x4, offset = 0, fixed_abs, tag = 'sflag constant byte address 0x0 - dummy sync flag']
  #allocation52 [shape = 's32[]', space=sflag, size = 0x4, offset = 0, fixed_abs, tag = 'sflag constant byte address 0x0 - dummy sync flag']
  #allocation53 [shape = 's32[]', space=sflag, size = 0x4, offset = 0, fixed_abs, tag = 'sflag constant byte address 0x0 - dummy sync flag']
  #allocation54 [shape = 's32[]', space=sflag, size = 0x4, offset = 0, fixed_abs, tag = 'sflag constant byte address 0x0 - dummy sync flag']
  #allocation55 [shape = 's32[]', space=sflag, size = 0x4, offset = 0, fixed_abs, tag = 'sflag constant byte address 0x0 - dummy sync flag']
  #allocation56 [shape = 's32[]', space=sflag, size = 0x4, offset = 0, fixed_abs, tag = 'sflag constant byte address 0x0 - dummy sync flag']
  #allocation57 [shape = 's32[]', space=sflag, size = 0x4, offset = 0, fixed_abs, tag = 'sflag constant byte address 0x0 - dummy sync flag']
  #allocation58 [shape = 's32[]', space=sflag, size = 0x4, offset = 0, fixed_abs, tag = 'sflag constant byte address 0x0 - dummy sync flag']
  #allocation59 [shape = 's32[]', space=sflag, size = 0x4, offset = 0, fixed_abs, tag = 'sflag constant byte address 0x0 - dummy sync flag']
  #allocation60 [shape = 's32[]', space=sflag, size = 0x4, offset = 0, fixed_abs, tag = 'sflag constant byte address 0x0 - dummy sync flag']
  #allocation61 [shape = 's32[]', space=sflag, size = 0x4, offset = 0, fixed_abs, tag = 'sflag constant byte address 0x0 - dummy sync flag']
  #allocation62 [shape = 's32[]', space=sflag, size = 0x4, offset = 0, fixed_abs, tag = 'sflag constant byte address 0x0 - dummy sync flag']
  #allocation63 [shape = 's32[]', space=sflag, size = 0x4, offset = 0, fixed_abs, tag = 'sflag constant byte address 0x0 - dummy sync flag']
  #allocation64 [shape = 's32[]', space=sflag, size = 0x4, offset = 0, fixed_abs, tag = 'sflag constant byte address 0x0 - dummy sync flag']
  #allocation65 [shape = 's32[]', space=sflag, size = 0x4, offset = 0, fixed_abs, tag = 'sflag constant byte address 0x0 - dummy sync flag']
  #allocation66 [shape = 's32[]', space=sflag, size = 0x4, offset = 0, fixed_abs, tag = 'sflag constant byte address 0x0 - dummy sync flag']
  #allocation67 [shape = 's32[]', space=sflag, size = 0x4, offset = 0, fixed_abs, tag = 'sflag constant byte address 0x0 - dummy sync flag']
  #allocation68 [shape = 's32[]', space=sflag, size = 0x4, offset = 0, fixed_abs, tag = 'sflag constant byte address 0x0 - dummy sync flag']
  #allocation69 [shape = 's32[]', space=sflag, size = 0x4, offset = 0, fixed_abs, tag = 'sflag constant byte address 0x0 - dummy sync flag']
  #allocation70 [shape = 's32[]', space=sflag, size = 0x4, offset = 0, fixed_abs, tag = 'sflag constant byte address 0x0 - dummy sync flag']
  #allocation71 [shape = 's32[]', space=sflag, size = 0x4, offset = 0, fixed_abs, tag = 'sflag constant byte address 0x0 - dummy sync flag']
  #allocation72 [shape = 's32[]', space=sflag, size = 0x4, offset = 0, fixed_abs, tag = 'sflag constant byte address 0x0 - dummy sync flag']
  #allocation73 [shape = 's32[]', space=sflag, size = 0x4, offset = 0, fixed_abs, tag = 'sflag constant byte address 0x0 - dummy sync flag']
  #allocation74 [shape = 's32[]', space=sflag, size = 0x4, offset = 0, fixed_abs, tag = 'sflag constant byte address 0x0 - dummy sync flag']
  #allocation75 [shape = 's32[]', space=sflag, size = 0x4, offset = 0, fixed_abs, tag = 'sflag constant byte address 0x0 - dummy sync flag']
  #allocation76 [shape = 's32[]', space=sflag, size = 0x4, offset = 0, fixed_abs, tag = 'sflag constant byte address 0x0 - dummy sync flag']
  #allocation77 [shape = 's32[]', space=sflag, size = 0x4, offset = 0, fixed_abs, tag = 'sflag constant byte address 0x0 - dummy sync flag']
  #allocation78 [shape = 's32[]', space=sflag, size = 0x4, offset = 0, fixed_abs, tag = 'sflag constant byte address 0x0 - dummy sync flag']
  #allocation79 [shape = 's32[]', space=sflag, size = 0x4, offset = 0, fixed_abs, tag = 'sflag constant byte address 0x0 - dummy sync flag']
  #allocation80 [shape = 's32[]', space=sflag, size = 0x4, offset = 0, fixed_abs, tag = 'sflag constant byte address 0x0 - dummy sync flag']
  #allocation81 [shape = 's32[]', space=sflag, size = 0x4, offset = 0, fixed_abs, tag = 'sflag constant byte address 0x0 - dummy sync flag']
  %s0 = inlined_call_operand.hbm [shape: s32[32], index: 0, kind: input, shape index: {}]
  %s1 = inlined_call_operand.hbm [shape: f32[5000,128], index: 1, kind: input, shape index: {}]
  %s2 = inlined_call_operand.hbm [shape: bf16[128,6144], index: 2, kind: input, shape index: {}]
  %s3 = inlined_call_operand.hbm [shape: f32[1,6144], index: 3, kind: input, shape index: {}]
  %s4 = inlined_call_operand.hbm [shape: f32[8,6144], index: 4, kind: output, shape index: {}]
  %s5 = sld [smem:[#allocation0]]
  $region185: #{tpu_custom_call.1} parent=0
    _
  %s7 = ssub.s32 1, %s5
  %s8 = scalar_select 0, %s7, %s5
  %10 = dma.hbm_to_smem %s0, 16, [#allocation9], [#allocation8]
  %11 = dma.done [#allocation8], 16
  %12 = sfence
  $region1: #{tpu_custom_call.1} parent=0
    #allocation10 [shape = 'u8[1048576]{0}', space=vmem, size = 0x100000, scoped, tag = 'input window, operand 2']
    #allocation11 [shape = 's32[2]{0}', space=sflag, size = 0x8, scoped, tag = 'scoped memory for tpu_custom_call.1']
    #allocation12 [shape = 's32[2]{0}', space=sflag, size = 0x8, scoped, tag = 'scoped memory for tpu_custom_call.1']
    #allocation13 [shape = 'u8[16384]{0}', space=vmem, size = 0x4000, scoped, tag = 'input window, operand 3']
    #allocation14 [shape = 's32[2]{0}', space=sflag, size = 0x8, scoped, tag = 'scoped memory for tpu_custom_call.1']
    #allocation15 [shape = 'u8[196608]{0}', space=vmem, size = 0x30000, scoped, tag = 'output window, operand 0, single buffered']
    %13 = vsyncpa [#allocation11], 0
    %s14 = scalar_lea.sflag [#allocation11], 1
    %15 = vsyncpa %s14, 0
    %16 = vsyncpa [#allocation14], 0
    %s17 = scalar_lea.sflag [#allocation14], 1
    %18 = vsyncpa %s17, 0
    %19 = vsyncpa [#allocation12], 0
    loop: start=0, step=1, limit=5
    $region2: #{tpu_custom_call.1} parent=1 // loop_pre_header
      _
    $region3: #{tpu_custom_call.1} parent=1 // loop_header
      %s21 = sphi 0, %s25
      %p22 = scmp.ge.s32.totalorder %s21, 5
      %s31 = sphi 0, %s33
      %s34 = sphi 0, %s31
      %s35 = sphi 0, %s34
      %s51 = sphi 0, %s35
      %s57 = sphi 0, %s59
      %s60 = sphi 0, %s57
      %s61 = sphi 0, %s60
      %s77 = sphi 0, %s61
      %s81 = sphi 0, %s81
      %s83 = sphi 0, %s81
      %s84 = sphi 0, %s83
      %s98 = sphi 0, %s84
    $region4: #{tpu_custom_call.1} parent=1 // loop_header_branch
      %24 = sbr.rel (%p22) target = $region8
    $region5: #{tpu_custom_call.1} parent=1 // loop_body
      %s26 = ssub.s32 %s21, 1
      %s27 = ssub.s32 %s21, 2
      %s28 = sadd.s32 %s21, 1
      %s29 = ssub.s32 %s21, %s28
      %p30 = scmp.eq.s32.totalorder %s29, 0
      %s32 = sadd.s32 %s31, 1
      %s33 = scalar_select %p30, %s31, %s32
      %p36 = pneg %p30
      %p37 = scmp.eq.s32.totalorder %s21, 2
      %p38 = por %p36, %p37
      %p39 = scmp.ne.s32.totalorder %s31, %s34
      %p40 = scmp.eq.s32.totalorder %s21, 0
      %p41 = por %p39, %p40
      %p42 = scmp.ne.s32.totalorder %s31, %s34
      %p43 = scmp.eq.s32.totalorder %s26, 2
      %p44 = por %p42, %p43
      %p45 = scmp.ne.s32.totalorder %s34, %s35
      %p46 = scmp.eq.s32.totalorder %s26, 0
      %p47 = por %p45, %p46
      %p48 = scmp.ne.s32.totalorder %s34, %s35
      %p49 = scmp.eq.s32.totalorder %s27, 2
      %p50 = por %p48, %p49
      %p52 = scmp.ne.s32.totalorder %s35, %s51
      %p53 = scmp.eq.s32.totalorder %s27, 0
      %p54 = por %p52, %p53
      %s55 = ssub.s32 %s21, %s28
      %p56 = scmp.eq.s32.totalorder %s55, 0
      %s58 = sadd.s32 %s57, 1
      %s59 = scalar_select %p56, %s57, %s58
      %p62 = pneg %p56
      %p63 = scmp.eq.s32.totalorder %s21, 2
      %p64 = por %p62, %p63
      %p65 = scmp.ne.s32.totalorder %s57, %s60
      %p66 = scmp.eq.s32.totalorder %s21, 0
      %p67 = por %p65, %p66
      %p68 = scmp.ne.s32.totalorder %s57, %s60
      %p69 = scmp.eq.s32.totalorder %s26, 2
      %p70 = por %p68, %p69
      %p71 = scmp.ne.s32.totalorder %s60, %s61
      %p72 = scmp.eq.s32.totalorder %s26, 0
      %p73 = por %p71, %p72
      %p74 = scmp.ne.s32.totalorder %s60, %s61
      %p75 = scmp.eq.s32.totalorder %s27, 2
      %p76 = por %p74, %p75
      %p78 = scmp.ne.s32.totalorder %s61, %s77
      %p79 = scmp.eq.s32.totalorder %s27, 0
      %p80 = por %p78, %p79
      %s82 = sadd.s32 %s81, 1
      %p85 = scmp.eq.s32.totalorder %s21, 2
      %p86 = scmp.ne.s32.totalorder %s81, %s83
      %p87 = scmp.eq.s32.totalorder %s21, 0
      %p88 = por %p86, %p87
      %p89 = scmp.ne.s32.totalorder %s81, %s83
      %p90 = scmp.eq.s32.totalorder %s26, 2
      %p91 = por %p89, %p90
      %p92 = scmp.ne.s32.totalorder %s83, %s84
      %p93 = scmp.eq.s32.totalorder %s26, 0
      %p94 = por %p92, %p93
      %p95 = scmp.ne.s32.totalorder %s83, %s84
      %p96 = scmp.eq.s32.totalorder %s27, 2
      %p97 = por %p95, %p96
      %p99 = scmp.ne.s32.totalorder %s84, %s98
      %p100 = scmp.eq.s32.totalorder %s27, 0
      %p101 = por %p99, %p100
      %p102 = scmp.le.s32.totalorder 1, %s21
      %p103 = scmp.lt.s32.totalorder %s21, 4
      %p104 = pnand %p102, %p103
      %p105 = pneg %p104
      // Predicated region
      $region9: #{tpu_custom_call.1} parent=5 // pred_check
        _
      $region10: #{tpu_custom_call.1} parent=5 // pred_check_branch
        %107 = sbr.rel (%p104) target = $region12
      $region11: #{tpu_custom_call.1} parent=5 // pred_region
        %s108 = ssub.s32 %s21, 1
      $region12: #{tpu_custom_call.1} parent=5 // pred_fallthru
        _
      %p109 = scmp.lt.s32.totalorder %s21, 3
      // Predicated region
      $region13: #{tpu_custom_call.1} parent=5 // pred_check
        %p110 = pneg %p109
      $region14: #{tpu_custom_call.1} parent=5 // pred_check_branch
        %112 = sbr.rel (%p110) target = $region16
      $region15: #{tpu_custom_call.1} parent=5 // pred_region
        // Predicated region
        $region17: #{tpu_custom_call.1} parent=15 // pred_check
          %p113 = pneg %p41
        $region18: #{tpu_custom_call.1} parent=15 // pred_check_branch
          %115 = sbr.rel (%p113) target = $region20
        $region19: #{tpu_custom_call.1} parent=15 // pred_region
          %s116 = sand.u32 %s31, 1
          %s117 = scalar_lea.sflag [#allocation11], %s116
          %s118 = sand.u32 %s31, 1
          %s119 = smul.addr %s118, 1024
          %s120 = scalar_lea.vmem [#allocation10], %s119
          %s121 = smul.u32 16, %s21
          %s123 = ssub.s32 16384, 16384
          %124 = vsyncadd %s117, %s123
          %s125 = smul.addr %s121, 64
          %s126 = scalar_lea.hbm %s2, %s125
          %s127 = sshll.u32 %s120, 4
          %s128 = int_to_ptr.vmem [resolvable:$true] %s127
          %133 = dma.hbm_to_vmem [thread:$0]  %s126, 16384, %s128, %s117, 3072, 1024, 64
        $region20: #{tpu_custom_call.1} parent=15 // pred_fallthru
          _
        // Predicated region
        $region21: #{tpu_custom_call.1} parent=15 // pred_check
          %p134 = pneg %p67
        $region22: #{tpu_custom_call.1} parent=15 // pred_check_branch
          %136 = sbr.rel (%p134) target = $region24
        $region23: #{tpu_custom_call.1} parent=15 // pred_region
          %s137 = sand.u32 %s57, 1
          %s138 = scalar_lea.sflag [#allocation14], %s137
          %s139 = sand.u32 %s57, 1
          %s140 = smul.addr %s139, 16
          %s141 = scalar_lea.vmem [#allocation13], %s140
          %s142 = smul.u32 16, %s21
          %s144 = ssub.s32 256, 256
          %145 = vsyncadd %s138, %s144
          %s146 = smul.addr %s142, 16
          %s147 = scalar_lea.hbm %s3, %s146
          %s149 = sshll.u32 %s141, 4
          %s150 = int_to_ptr.vmem [resolvable:$true] %s149
          %152 = dma.hbm_to_vmem [thread:$0]  %s147, 256, %s150, %s138
        $region24: #{tpu_custom_call.1} parent=15 // pred_fallthru
          _
      $region16: #{tpu_custom_call.1} parent=5 // pred_fallthru
        _
      %p153 = scmp.le.s32.totalorder 1, %s21
      %p154 = scmp.lt.s32.totalorder %s21, 4
      %p155 = pnand %p153, %p154
      %p156 = pneg %p155
      // Predicated region
      $region25: #{tpu_custom_call.1} parent=5 // pred_check
        _
      $region26: #{tpu_custom_call.1} parent=5 // pred_check_branch
        %158 = sbr.rel (%p155) target = $region28
      $region27: #{tpu_custom_call.1} parent=5 // pred_region
        %s159 = ssub.s32 %s21, 1
        %s160 = sand.u32 %s34, 1
        %s161 = scalar_lea.sflag [#allocation11], %s160
        %s162 = sand.u32 %s34, 1
        %s163 = smul.addr %s162, 1024
        %s164 = scalar_lea.vmem [#allocation10], %s163
        // Predicated region
        $region29: #{tpu_custom_call.1} parent=27 // pred_check
          %p165 = pneg %p47
        $region30: #{tpu_custom_call.1} parent=27 // pred_check_branch
          %167 = sbr.rel (%p165) target = $region32
        $region31: #{tpu_custom_call.1} parent=27 // pred_region
          %168 = dma.done %s161, 16384
        $region32: #{tpu_custom_call.1} parent=27 // pred_fallthru
          _
        %s169 = sand.u32 %s60, 1
        %s170 = scalar_lea.sflag [#allocation14], %s169
        %s171 = sand.u32 %s60, 1
        %s172 = smul.addr %s171, 16
        %s173 = scalar_lea.vmem [#allocation13], %s172
        // Predicated region
        $region33: #{tpu_custom_call.1} parent=27 // pred_check
          %p174 = pneg %p73
        $region34: #{tpu_custom_call.1} parent=27 // pred_check_branch
          %176 = sbr.rel (%p174) target = $region36
        $region35: #{tpu_custom_call.1} parent=27 // pred_region
          %177 = dma.done %s170, 256
        $region36: #{tpu_custom_call.1} parent=27 // pred_fallthru
          _
        %s178 = sand.u32 %s34, 1
        %s179 = scalar_lea.sflag [#allocation11], %s178
        %s180 = sand.u32 %s34, 1
        %s181 = smul.addr %s180, 1024
        %s182 = scalar_lea.vmem [#allocation10], %s181
        %p183 = pneg %p47
        %p184 = pneg %p44
        %s185 = sand.u32 %s60, 1
        %s186 = scalar_lea.sflag [#allocation14], %s185
        %s187 = sand.u32 %s60, 1
        %s188 = smul.addr %s187, 16
        %s189 = scalar_lea.vmem [#allocation13], %s188
        %p190 = pneg %p73
        %p191 = pneg %p70
        %p192 = pneg %p94
        %p193 = pneg %p91
        %s194 = smul.u32 16, %s26
        %s195 = smul.u32 16, %s26
        %p197 = scmp.eq.s32.totalorder %s26, 0
        // Predicated region
        $region37: #{tpu_custom_call.1} parent=27 // pred_check
          %p198 = pneg %p197
        $region38: #{tpu_custom_call.1} parent=27 // pred_check_branch
          %200 = sbr.rel (%p198) target = $region40
        $region39: #{tpu_custom_call.1} parent=27 // pred_region
          %s201 = sld [smem:[#allocation9]]
          %s202 = smul.addr %s201, 16
          %s203 = scalar_lea.hbm %s1, %s202
          // Predicated region
          $region41: #{tpu_custom_call.1} parent=39 // pred_check
            _
          $region42: #{tpu_custom_call.1} parent=39 // pred_check_branch
            %205 = sbr.rel target = $region44
          $region43: #{tpu_custom_call.1} parent=39 // pred_region
            %206 = sst [smem:[#allocation18]] [#allocation17]
            %207 = sst [smem:[#allocation19]] [#allocation16]
          $region44: #{tpu_custom_call.1} parent=39 // pred_fallthru
            _
          %209 = shalt.err (0)
          %s211 = sshll.u32 [#allocation2], 4
          %s212 = int_to_ptr.vmem [resolvable:$true] %s211
          %214 = dma.hbm_to_vmem [thread:$0]  %s203, 16, %s212, [#allocation3]
          %s215 = sld [smem:[#allocation9 + $0x1]]
          %s216 = smul.addr %s215, 16
          %s217 = scalar_lea.hbm %s1, %s216
          %s218 = scalar_lea.vmem [#allocation2], 1
          %s219 = scalar_lea.sflag [#allocation3], 1
          // Predicated region
          $region45: #{tpu_custom_call.1} parent=39 // pred_check
            _
          $region46: #{tpu_custom_call.1} parent=39 // pred_check_branch
            %221 = sbr.rel target = $region48
          $region47: #{tpu_custom_call.1} parent=39 // pred_region
            %222 = sst [smem:[#allocation18]] [#allocation21]
            %223 = sst [smem:[#allocation19]] [#allocation20]
          $region48: #{tpu_custom_call.1} parent=39 // pred_fallthru
            _
          %225 = shalt.err (0)
          %s227 = sshll.u32 %s218, 4
          %s228 = int_to_ptr.vmem [resolvable:$true] %s227
          %230 = dma.hbm_to_vmem [thread:$0]  %s217, 16, %s228, %s219
          %s231 = sld [smem:[#allocation9 + $0x2]]
          %s232 = smul.addr %s231, 16
          %s233 = scalar_lea.hbm %s1, %s232
          %s234 = scalar_lea.vmem [#allocation2], 2
          %s235 = scalar_lea.sflag [#allocation3], 2
          // Predicated region
          $region49: #{tpu_custom_call.1} parent=39 // pred_check
            _
          $region50: #{tpu_custom_call.1} parent=39 // pred_check_branch
            %237 = sbr.rel target = $region52
          $region51: #{tpu_custom_call.1} parent=39 // pred_region
            %238 = sst [smem:[#allocation18]] [#allocation23]
            %239 = sst [smem:[#allocation19]] [#allocation22]
          $region52: #{tpu_custom_call.1} parent=39 // pred_fallthru
            _
          %241 = shalt.err (0)
          %s243 = sshll.u32 %s234, 4
          %s244 = int_to_ptr.vmem [resolvable:$true] %s243
          %246 = dma.hbm_to_vmem [thread:$0]  %s233, 16, %s244, %s235
          %s247 = sld [smem:[#allocation9 + $0x3]]
          %s248 = smul.addr %s247, 16
          %s249 = scalar_lea.hbm %s1, %s248
          %s250 = scalar_lea.vmem [#allocation2], 3
          %s251 = scalar_lea.sflag [#allocation3], 3
          // Predicated region
          $region53: #{tpu_custom_call.1} parent=39 // pred_check
            _
          $region54: #{tpu_custom_call.1} parent=39 // pred_check_branch
            %253 = sbr.rel target = $region56
          $region55: #{tpu_custom_call.1} parent=39 // pred_region
            %254 = sst [smem:[#allocation18]] [#allocation25]
            %255 = sst [smem:[#allocation19]] [#allocation24]
          $region56: #{tpu_custom_call.1} parent=39 // pred_fallthru
            _
          %257 = shalt.err (0)
          %s259 = sshll.u32 %s250, 4
          %s260 = int_to_ptr.vmem [resolvable:$true] %s259
          %262 = dma.hbm_to_vmem [thread:$0]  %s249, 16, %s260, %s251
          %s263 = sld [smem:[#allocation9 + $0x4]]
          %s264 = smul.addr %s263, 16
          %s265 = scalar_lea.hbm %s1, %s264
          %s266 = scalar_lea.vmem [#allocation2], 4
          %s267 = scalar_lea.sflag [#allocation3], 4
          // Predicated region
          $region57: #{tpu_custom_call.1} parent=39 // pred_check
            _
          $region58: #{tpu_custom_call.1} parent=39 // pred_check_branch
            %269 = sbr.rel target = $region60
          $region59: #{tpu_custom_call.1} parent=39 // pred_region
            %270 = sst [smem:[#allocation18]] [#allocation27]
            %271 = sst [smem:[#allocation19]] [#allocation26]
          $region60: #{tpu_custom_call.1} parent=39 // pred_fallthru
            _
          %273 = shalt.err (0)
          %s275 = sshll.u32 %s266, 4
          %s276 = int_to_ptr.vmem [resolvable:$true] %s275
          %278 = dma.hbm_to_vmem [thread:$0]  %s265, 16, %s276, %s267
          %s279 = sld [smem:[#allocation9 + $0x5]]
          %s280 = smul.addr %s279, 16
          %s281 = scalar_lea.hbm %s1, %s280
          %s282 = scalar_lea.vmem [#allocation2], 5
          %s283 = scalar_lea.sflag [#allocation3], 5
          // Predicated region
          $region61: #{tpu_custom_call.1} parent=39 // pred_check
            _
          $region62: #{tpu_custom_call.1} parent=39 // pred_check_branch
            %285 = sbr.rel target = $region64
          $region63: #{tpu_custom_call.1} parent=39 // pred_region
            %286 = sst [smem:[#allocation18]] [#allocation29]
            %287 = sst [smem:[#allocation19]] [#allocation28]
          $region64: #{tpu_custom_call.1} parent=39 // pred_fallthru
            _
          %289 = shalt.err (0)
          %s291 = sshll.u32 %s282, 4
          %s292 = int_to_ptr.vmem [resolvable:$true] %s291
          %294 = dma.hbm_to_vmem [thread:$0]  %s281, 16, %s292, %s283
          %s295 = sld [smem:[#allocation9 + $0x6]]
          %s296 = smul.addr %s295, 16
          %s297 = scalar_lea.hbm %s1, %s296
          %s298 = scalar_lea.vmem [#allocation2], 6
          %s299 = scalar_lea.sflag [#allocation3], 6
          // Predicated region
          $region65: #{tpu_custom_call.1} parent=39 // pred_check
            _
          $region66: #{tpu_custom_call.1} parent=39 // pred_check_branch
            %301 = sbr.rel target = $region68
          $region67: #{tpu_custom_call.1} parent=39 // pred_region
            %302 = sst [smem:[#allocation18]] [#allocation31]
            %303 = sst [smem:[#allocation19]] [#allocation30]
          $region68: #{tpu_custom_call.1} parent=39 // pred_fallthru
            _
          %305 = shalt.err (0)
          %s307 = sshll.u32 %s298, 4
          %s308 = int_to_ptr.vmem [resolvable:$true] %s307
          %310 = dma.hbm_to_vmem [thread:$0]  %s297, 16, %s308, %s299
          %s311 = sld [smem:[#allocation9 + $0x7]]
          %s312 = smul.addr %s311, 16
          %s313 = scalar_lea.hbm %s1, %s312
          %s314 = scalar_lea.vmem [#allocation2], 7
          %s315 = scalar_lea.sflag [#allocation3], 7
          // Predicated region
          $region69: #{tpu_custom_call.1} parent=39 // pred_check
            _
          $region70: #{tpu_custom_call.1} parent=39 // pred_check_branch
            %317 = sbr.rel target = $region72
          $region71: #{tpu_custom_call.1} parent=39 // pred_region
            %318 = sst [smem:[#allocation18]] [#allocation33]
            %319 = sst [smem:[#allocation19]] [#allocation32]
          $region72: #{tpu_custom_call.1} parent=39 // pred_fallthru
            _
          %321 = shalt.err (0)
          %s323 = sshll.u32 %s314, 4
          %s324 = int_to_ptr.vmem [resolvable:$true] %s323
          %326 = dma.hbm_to_vmem [thread:$0]  %s313, 16, %s324, %s315
          %s327 = sld [smem:[#allocation9 + $0x8]]
          %s328 = smul.addr %s327, 16
          %s329 = scalar_lea.hbm %s1, %s328
          %s330 = scalar_lea.vmem [#allocation2], 8
          %s331 = scalar_lea.sflag [#allocation3], 8
          // Predicated region
          $region73: #{tpu_custom_call.1} parent=39 // pred_check
            _
          $region74: #{tpu_custom_call.1} parent=39 // pred_check_branch
            %333 = sbr.rel target = $region76
          $region75: #{tpu_custom_call.1} parent=39 // pred_region
            %334 = sst [smem:[#allocation18]] [#allocation35]
            %335 = sst [smem:[#allocation19]] [#allocation34]
          $region76: #{tpu_custom_call.1} parent=39 // pred_fallthru
            _
          %337 = shalt.err (0)
          %s339 = sshll.u32 %s330, 4
          %s340 = int_to_ptr.vmem [resolvable:$true] %s339
          %342 = dma.hbm_to_vmem [thread:$0]  %s329, 16, %s340, %s331
          %s343 = sld [smem:[#allocation9 + $0x9]]
          %s344 = smul.addr %s343, 16
          %s345 = scalar_lea.hbm %s1, %s344
          %s346 = scalar_lea.vmem [#allocation2], 9
          %s347 = scalar_lea.sflag [#allocation3], 9
          // Predicated region
          $region77: #{tpu_custom_call.1} parent=39 // pred_check
            _
          $region78: #{tpu_custom_call.1} parent=39 // pred_check_branch
            %349 = sbr.rel target = $region80
          $region79: #{tpu_custom_call.1} parent=39 // pred_region
            %350 = sst [smem:[#allocation18]] [#allocation37]
            %351 = sst [smem:[#allocation19]] [#allocation36]
          $region80: #{tpu_custom_call.1} parent=39 // pred_fallthru
            _
          %353 = shalt.err (0)
          %s355 = sshll.u32 %s346, 4
          %s356 = int_to_ptr.vmem [resolvable:$true] %s355
          %358 = dma.hbm_to_vmem [thread:$0]  %s345, 16, %s356, %s347
          %s359 = sld [smem:[#allocation9 + $0xa]]
          %s360 = smul.addr %s359, 16
          %s361 = scalar_lea.hbm %s1, %s360
          %s362 = scalar_lea.vmem [#allocation2], 10
          %s363 = scalar_lea.sflag [#allocation3], 10
          // Predicated region
          $region81: #{tpu_custom_call.1} parent=39 // pred_check
            _
          $region82: #{tpu_custom_call.1} parent=39 // pred_check_branch
            %365 = sbr.rel target = $region84
          $region83: #{tpu_custom_call.1} parent=39 // pred_region
            %366 = sst [smem:[#allocation18]] [#allocation39]
            %367 = sst [smem:[#allocation19]] [#allocation38]
          $region84: #{tpu_custom_call.1} parent=39 // pred_fallthru
            _
          %369 = shalt.err (0)
          %s371 = sshll.u32 %s362, 4
          %s372 = int_to_ptr.vmem [resolvable:$true] %s371
          %374 = dma.hbm_to_vmem [thread:$0]  %s361, 16, %s372, %s363
          %s375 = sld [smem:[#allocation9 + $0xb]]
          %s376 = smul.addr %s375, 16
          %s377 = scalar_lea.hbm %s1, %s376
          %s378 = scalar_lea.vmem [#allocation2], 11
          %s379 = scalar_lea.sflag [#allocation3], 11
          // Predicated region
          $region85: #{tpu_custom_call.1} parent=39 // pred_check
            _
          $region86: #{tpu_custom_call.1} parent=39 // pred_check_branch
            %381 = sbr.rel target = $region88
          $region87: #{tpu_custom_call.1} parent=39 // pred_region
            %382 = sst [smem:[#allocation18]] [#allocation41]
            %383 = sst [smem:[#allocation19]] [#allocation40]
          $region88: #{tpu_custom_call.1} parent=39 // pred_fallthru
            _
          %385 = shalt.err (0)
          %s387 = sshll.u32 %s378, 4
          %s388 = int_to_ptr.vmem [resolvable:$true] %s387
          %390 = dma.hbm_to_vmem [thread:$0]  %s377, 16, %s388, %s379
          %s391 = sld [smem:[#allocation9 + $0xc]]
          %s392 = smul.addr %s391, 16
          %s393 = scalar_lea.hbm %s1, %s392
          %s394 = scalar_lea.vmem [#allocation2], 12
          %s395 = scalar_lea.sflag [#allocation3], 12
          // Predicated region
          $region89: #{tpu_custom_call.1} parent=39 // pred_check
            _
          $region90: #{tpu_custom_call.1} parent=39 // pred_check_branch
            %397 = sbr.rel target = $region92
          $region91: #{tpu_custom_call.1} parent=39 // pred_region
            %398 = sst [smem:[#allocation18]] [#allocation43]
            %399 = sst [smem:[#allocation19]] [#allocation42]
          $region92: #{tpu_custom_call.1} parent=39 // pred_fallthru
            _
          %401 = shalt.err (0)
          %s403 = sshll.u32 %s394, 4
          %s404 = int_to_ptr.vmem [resolvable:$true] %s403
          %406 = dma.hbm_to_vmem [thread:$0]  %s393, 16, %s404, %s395
          %s407 = sld [smem:[#allocation9 + $0xd]]
          %s408 = smul.addr %s407, 16
          %s409 = scalar_lea.hbm %s1, %s408
          %s410 = scalar_lea.vmem [#allocation2], 13
          %s411 = scalar_lea.sflag [#allocation3], 13
          // Predicated region
          $region93: #{tpu_custom_call.1} parent=39 // pred_check
            _
          $region94: #{tpu_custom_call.1} parent=39 // pred_check_branch
            %413 = sbr.rel target = $region96
          $region95: #{tpu_custom_call.1} parent=39 // pred_region
            %414 = sst [smem:[#allocation18]] [#allocation45]
            %415 = sst [smem:[#allocation19]] [#allocation44]
          $region96: #{tpu_custom_call.1} parent=39 // pred_fallthru
            _
          %417 = shalt.err (0)
          %s419 = sshll.u32 %s410, 4
          %s420 = int_to_ptr.vmem [resolvable:$true] %s419
          %422 = dma.hbm_to_vmem [thread:$0]  %s409, 16, %s420, %s411
          %s423 = sld [smem:[#allocation9 + $0xe]]
          %s424 = smul.addr %s423, 16
          %s425 = scalar_lea.hbm %s1, %s424
          %s426 = scalar_lea.vmem [#allocation2], 14
          %s427 = scalar_lea.sflag [#allocation3], 14
          // Predicated region
          $region97: #{tpu_custom_call.1} parent=39 // pred_check
            _
          $region98: #{tpu_custom_call.1} parent=39 // pred_check_branch
            %429 = sbr.rel target = $region100
          $region99: #{tpu_custom_call.1} parent=39 // pred_region
            %430 = sst [smem:[#allocation18]] [#allocation47]
            %431 = sst [smem:[#allocation19]] [#allocation46]
          $region100: #{tpu_custom_call.1} parent=39 // pred_fallthru
            _
          %433 = shalt.err (0)
          %s435 = sshll.u32 %s426, 4
          %s436 = int_to_ptr.vmem [resolvable:$true] %s435
          %438 = dma.hbm_to_vmem [thread:$0]  %s425, 16, %s436, %s427
          %s439 = sld [smem:[#allocation9 + $0xf]]
          %s440 = smul.addr %s439, 16
          %s441 = scalar_lea.hbm %s1, %s440
          %s442 = scalar_lea.vmem [#allocation2], 15
          %s443 = scalar_lea.sflag [#allocation3], 15
          // Predicated region
          $region101: #{tpu_custom_call.1} parent=39 // pred_check
            _
          $region102: #{tpu_custom_call.1} parent=39 // pred_check_branch
            %445 = sbr.rel target = $region104
          $region103: #{tpu_custom_call.1} parent=39 // pred_region
            %446 = sst [smem:[#allocation18]] [#allocation49]
            %447 = sst [smem:[#allocation19]] [#allocation48]
          $region104: #{tpu_custom_call.1} parent=39 // pred_fallthru
            _
          %449 = shalt.err (0)
          %s451 = sshll.u32 %s442, 4
          %s452 = int_to_ptr.vmem [resolvable:$true] %s451
          %454 = dma.hbm_to_vmem [thread:$0]  %s441, 16, %s452, %s443
          %s455 = sld [smem:[#allocation9 + $0x10]]
          %s456 = smul.addr %s455, 16
          %s457 = scalar_lea.hbm %s1, %s456
          %s458 = scalar_lea.vmem [#allocation2], 16
          %s459 = scalar_lea.sflag [#allocation3], 16
          // Predicated region
          $region105: #{tpu_custom_call.1} parent=39 // pred_check
            _
          $region106: #{tpu_custom_call.1} parent=39 // pred_check_branch
            %461 = sbr.rel target = $region108
          $region107: #{tpu_custom_call.1} parent=39 // pred_region
            %462 = sst [smem:[#allocation18]] [#allocation51]
            %463 = sst [smem:[#allocation19]] [#allocation50]
          $region108: #{tpu_custom_call.1} parent=39 // pred_fallthru
            _
          %465 = shalt.err (0)
          %s467 = sshll.u32 %s458, 4
          %s468 = int_to_ptr.vmem [resolvable:$true] %s467
          %470 = dma.hbm_to_vmem [thread:$0]  %s457, 16, %s468, %s459
          %s471 = sld [smem:[#allocation9 + $0x11]]
          %s472 = smul.addr %s471, 16
          %s473 = scalar_lea.hbm %s1, %s472
          %s474 = scalar_lea.vmem [#allocation2], 17
          %s475 = scalar_lea.sflag [#allocation3], 17
          // Predicated region
          $region109: #{tpu_custom_call.1} parent=39 // pred_check
            _
          $region110: #{tpu_custom_call.1} parent=39 // pred_check_branch
            %477 = sbr.rel target = $region112
          $region111: #{tpu_custom_call.1} parent=39 // pred_region
            %478 = sst [smem:[#allocation18]] [#allocation53]
            %479 = sst [smem:[#allocation19]] [#allocation52]
          $region112: #{tpu_custom_call.1} parent=39 // pred_fallthru
            _
          %481 = shalt.err (0)
          %s483 = sshll.u32 %s474, 4
          %s484 = int_to_ptr.vmem [resolvable:$true] %s483
          %486 = dma.hbm_to_vmem [thread:$0]  %s473, 16, %s484, %s475
          %s487 = sld [smem:[#allocation9 + $0x12]]
          %s488 = smul.addr %s487, 16
          %s489 = scalar_lea.hbm %s1, %s488
          %s490 = scalar_lea.vmem [#allocation2], 18
          %s491 = scalar_lea.sflag [#allocation3], 18
          // Predicated region
          $region113: #{tpu_custom_call.1} parent=39 // pred_check
            _
          $region114: #{tpu_custom_call.1} parent=39 // pred_check_branch
            %493 = sbr.rel target = $region116
          $region115: #{tpu_custom_call.1} parent=39 // pred_region
            %494 = sst [smem:[#allocation18]] [#allocation55]
            %495 = sst [smem:[#allocation19]] [#allocation54]
          $region116: #{tpu_custom_call.1} parent=39 // pred_fallthru
            _
          %497 = shalt.err (0)
          %s499 = sshll.u32 %s490, 4
          %s500 = int_to_ptr.vmem [resolvable:$true] %s499
          %502 = dma.hbm_to_vmem [thread:$0]  %s489, 16, %s500, %s491
          %s503 = sld [smem:[#allocation9 + $0x13]]
          %s504 = smul.addr %s503, 16
          %s505 = scalar_lea.hbm %s1, %s504
          %s506 = scalar_lea.vmem [#allocation2], 19
          %s507 = scalar_lea.sflag [#allocation3], 19
          // Predicated region
          $region117: #{tpu_custom_call.1} parent=39 // pred_check
            _
          $region118: #{tpu_custom_call.1} parent=39 // pred_check_branch
            %509 = sbr.rel target = $region120
          $region119: #{tpu_custom_call.1} parent=39 // pred_region
            %510 = sst [smem:[#allocation18]] [#allocation57]
            %511 = sst [smem:[#allocation19]] [#allocation56]
          $region120: #{tpu_custom_call.1} parent=39 // pred_fallthru
            _
          %513 = shalt.err (0)
          %s515 = sshll.u32 %s506, 4
          %s516 = int_to_ptr.vmem [resolvable:$true] %s515
          %518 = dma.hbm_to_vmem [thread:$0]  %s505, 16, %s516, %s507
          %s519 = sld [smem:[#allocation9 + $0x14]]
          %s520 = smul.addr %s519, 16
          %s521 = scalar_lea.hbm %s1, %s520
          %s522 = scalar_lea.vmem [#allocation2], 20
          %s523 = scalar_lea.sflag [#allocation3], 20
          // Predicated region
          $region121: #{tpu_custom_call.1} parent=39 // pred_check
            _
          $region122: #{tpu_custom_call.1} parent=39 // pred_check_branch
            %525 = sbr.rel target = $region124
          $region123: #{tpu_custom_call.1} parent=39 // pred_region
            %526 = sst [smem:[#allocation18]] [#allocation59]
            %527 = sst [smem:[#allocation19]] [#allocation58]
          $region124: #{tpu_custom_call.1} parent=39 // pred_fallthru
            _
          %529 = shalt.err (0)
          %s531 = sshll.u32 %s522, 4
          %s532 = int_to_ptr.vmem [resolvable:$true] %s531
          %534 = dma.hbm_to_vmem [thread:$0]  %s521, 16, %s532, %s523
          %s535 = sld [smem:[#allocation9 + $0x15]]
          %s536 = smul.addr %s535, 16
          %s537 = scalar_lea.hbm %s1, %s536
          %s538 = scalar_lea.vmem [#allocation2], 21
          %s539 = scalar_lea.sflag [#allocation3], 21
          // Predicated region
          $region125: #{tpu_custom_call.1} parent=39 // pred_check
            _
          $region126: #{tpu_custom_call.1} parent=39 // pred_check_branch
            %541 = sbr.rel target = $region128
          $region127: #{tpu_custom_call.1} parent=39 // pred_region
            %542 = sst [smem:[#allocation18]] [#allocation61]
            %543 = sst [smem:[#allocation19]] [#allocation60]
          $region128: #{tpu_custom_call.1} parent=39 // pred_fallthru
            _
          %545 = shalt.err (0)
          %s547 = sshll.u32 %s538, 4
          %s548 = int_to_ptr.vmem [resolvable:$true] %s547
          %550 = dma.hbm_to_vmem [thread:$0]  %s537, 16, %s548, %s539
          %s551 = sld [smem:[#allocation9 + $0x16]]
          %s552 = smul.addr %s551, 16
          %s553 = scalar_lea.hbm %s1, %s552
          %s554 = scalar_lea.vmem [#allocation2], 22
          %s555 = scalar_lea.sflag [#allocation3], 22
          // Predicated region
          $region129: #{tpu_custom_call.1} parent=39 // pred_check
            _
          $region130: #{tpu_custom_call.1} parent=39 // pred_check_branch
            %557 = sbr.rel target = $region132
          $region131: #{tpu_custom_call.1} parent=39 // pred_region
            %558 = sst [smem:[#allocation18]] [#allocation63]
            %559 = sst [smem:[#allocation19]] [#allocation62]
          $region132: #{tpu_custom_call.1} parent=39 // pred_fallthru
            _
          %561 = shalt.err (0)
          %s563 = sshll.u32 %s554, 4
          %s564 = int_to_ptr.vmem [resolvable:$true] %s563
          %566 = dma.hbm_to_vmem [thread:$0]  %s553, 16, %s564, %s555
          %s567 = sld [smem:[#allocation9 + $0x17]]
          %s568 = smul.addr %s567, 16
          %s569 = scalar_lea.hbm %s1, %s568
          %s570 = scalar_lea.vmem [#allocation2], 23
          %s571 = scalar_lea.sflag [#allocation3], 23
          // Predicated region
          $region133: #{tpu_custom_call.1} parent=39 // pred_check
            _
          $region134: #{tpu_custom_call.1} parent=39 // pred_check_branch
            %573 = sbr.rel target = $region136
          $region135: #{tpu_custom_call.1} parent=39 // pred_region
            %574 = sst [smem:[#allocation18]] [#allocation65]
            %575 = sst [smem:[#allocation19]] [#allocation64]
          $region136: #{tpu_custom_call.1} parent=39 // pred_fallthru
            _
          %577 = shalt.err (0)
          %s579 = sshll.u32 %s570, 4
          %s580 = int_to_ptr.vmem [resolvable:$true] %s579
          %582 = dma.hbm_to_vmem [thread:$0]  %s569, 16, %s580, %s571
          %s583 = sld [smem:[#allocation9 + $0x18]]
          %s584 = smul.addr %s583, 16
          %s585 = scalar_lea.hbm %s1, %s584
          %s586 = scalar_lea.vmem [#allocation2], 24
          %s587 = scalar_lea.sflag [#allocation3], 24
          // Predicated region
          $region137: #{tpu_custom_call.1} parent=39 // pred_check
            _
          $region138: #{tpu_custom_call.1} parent=39 // pred_check_branch
            %589 = sbr.rel target = $region140
          $region139: #{tpu_custom_call.1} parent=39 // pred_region
            %590 = sst [smem:[#allocation18]] [#allocation67]
            %591 = sst [smem:[#allocation19]] [#allocation66]
          $region140: #{tpu_custom_call.1} parent=39 // pred_fallthru
            _
          %593 = shalt.err (0)
          %s595 = sshll.u32 %s586, 4
          %s596 = int_to_ptr.vmem [resolvable:$true] %s595
          %598 = dma.hbm_to_vmem [thread:$0]  %s585, 16, %s596, %s587
          %s599 = sld [smem:[#allocation9 + $0x19]]
          %s600 = smul.addr %s599, 16
          %s601 = scalar_lea.hbm %s1, %s600
          %s602 = scalar_lea.vmem [#allocation2], 25
          %s603 = scalar_lea.sflag [#allocation3], 25
          // Predicated region
          $region141: #{tpu_custom_call.1} parent=39 // pred_check
            _
          $region142: #{tpu_custom_call.1} parent=39 // pred_check_branch
            %605 = sbr.rel target = $region144
          $region143: #{tpu_custom_call.1} parent=39 // pred_region
            %606 = sst [smem:[#allocation18]] [#allocation69]
            %607 = sst [smem:[#allocation19]] [#allocation68]
          $region144: #{tpu_custom_call.1} parent=39 // pred_fallthru
            _
          %609 = shalt.err (0)
          %s611 = sshll.u32 %s602, 4
          %s612 = int_to_ptr.vmem [resolvable:$true] %s611
          %614 = dma.hbm_to_vmem [thread:$0]  %s601, 16, %s612, %s603
          %s615 = sld [smem:[#allocation9 + $0x1a]]
          %s616 = smul.addr %s615, 16
          %s617 = scalar_lea.hbm %s1, %s616
          %s618 = scalar_lea.vmem [#allocation2], 26
          %s619 = scalar_lea.sflag [#allocation3], 26
          // Predicated region
          $region145: #{tpu_custom_call.1} parent=39 // pred_check
            _
          $region146: #{tpu_custom_call.1} parent=39 // pred_check_branch
            %621 = sbr.rel target = $region148
          $region147: #{tpu_custom_call.1} parent=39 // pred_region
            %622 = sst [smem:[#allocation18]] [#allocation71]
            %623 = sst [smem:[#allocation19]] [#allocation70]
          $region148: #{tpu_custom_call.1} parent=39 // pred_fallthru
            _
          %625 = shalt.err (0)
          %s627 = sshll.u32 %s618, 4
          %s628 = int_to_ptr.vmem [resolvable:$true] %s627
          %630 = dma.hbm_to_vmem [thread:$0]  %s617, 16, %s628, %s619
          %s631 = sld [smem:[#allocation9 + $0x1b]]
          %s632 = smul.addr %s631, 16
          %s633 = scalar_lea.hbm %s1, %s632
          %s634 = scalar_lea.vmem [#allocation2], 27
          %s635 = scalar_lea.sflag [#allocation3], 27
          // Predicated region
          $region149: #{tpu_custom_call.1} parent=39 // pred_check
            _
          $region150: #{tpu_custom_call.1} parent=39 // pred_check_branch
            %637 = sbr.rel target = $region152
          $region151: #{tpu_custom_call.1} parent=39 // pred_region
            %638 = sst [smem:[#allocation18]] [#allocation73]
            %639 = sst [smem:[#allocation19]] [#allocation72]
          $region152: #{tpu_custom_call.1} parent=39 // pred_fallthru
            _
          %641 = shalt.err (0)
          %s643 = sshll.u32 %s634, 4
          %s644 = int_to_ptr.vmem [resolvable:$true] %s643
          %646 = dma.hbm_to_vmem [thread:$0]  %s633, 16, %s644, %s635
          %s647 = sld [smem:[#allocation9 + $0x1c]]
          %s648 = smul.addr %s647, 16
          %s649 = scalar_lea.hbm %s1, %s648
          %s650 = scalar_lea.vmem [#allocation2], 28
          %s651 = scalar_lea.sflag [#allocation3], 28
          // Predicated region
          $region153: #{tpu_custom_call.1} parent=39 // pred_check
            _
          $region154: #{tpu_custom_call.1} parent=39 // pred_check_branch
            %653 = sbr.rel target = $region156
          $region155: #{tpu_custom_call.1} parent=39 // pred_region
            %654 = sst [smem:[#allocation18]] [#allocation75]
            %655 = sst [smem:[#allocation19]] [#allocation74]
          $region156: #{tpu_custom_call.1} parent=39 // pred_fallthru
            _
          %657 = shalt.err (0)
          %s659 = sshll.u32 %s650, 4
          %s660 = int_to_ptr.vmem [resolvable:$true] %s659
          %662 = dma.hbm_to_vmem [thread:$0]  %s649, 16, %s660, %s651
          %s663 = sld [smem:[#allocation9 + $0x1d]]
          %s664 = smul.addr %s663, 16
          %s665 = scalar_lea.hbm %s1, %s664
          %s666 = scalar_lea.vmem [#allocation2], 29
          %s667 = scalar_lea.sflag [#allocation3], 29
          // Predicated region
          $region157: #{tpu_custom_call.1} parent=39 // pred_check
            _
          $region158: #{tpu_custom_call.1} parent=39 // pred_check_branch
            %669 = sbr.rel target = $region160
          $region159: #{tpu_custom_call.1} parent=39 // pred_region
            %670 = sst [smem:[#allocation18]] [#allocation77]
            %671 = sst [smem:[#allocation19]] [#allocation76]
          $region160: #{tpu_custom_call.1} parent=39 // pred_fallthru
            _
          %673 = shalt.err (0)
          %s675 = sshll.u32 %s666, 4
          %s676 = int_to_ptr.vmem [resolvable:$true] %s675
          %678 = dma.hbm_to_vmem [thread:$0]  %s665, 16, %s676, %s667
          %s679 = sld [smem:[#allocation9 + $0x1e]]
          %s680 = smul.addr %s679, 16
          %s681 = scalar_lea.hbm %s1, %s680
          %s682 = scalar_lea.vmem [#allocation2], 30
          %s683 = scalar_lea.sflag [#allocation3], 30
          // Predicated region
          $region161: #{tpu_custom_call.1} parent=39 // pred_check
            _
          $region162: #{tpu_custom_call.1} parent=39 // pred_check_branch
            %685 = sbr.rel target = $region164
          $region163: #{tpu_custom_call.1} parent=39 // pred_region
            %686 = sst [smem:[#allocation18]] [#allocation79]
            %687 = sst [smem:[#allocation19]] [#allocation78]
          $region164: #{tpu_custom_call.1} parent=39 // pred_fallthru
            _
          %689 = shalt.err (0)
          %s691 = sshll.u32 %s682, 4
          %s692 = int_to_ptr.vmem [resolvable:$true] %s691
          %694 = dma.hbm_to_vmem [thread:$0]  %s681, 16, %s692, %s683
          %s695 = sld [smem:[#allocation9 + $0x1f]]
          %s696 = smul.addr %s695, 16
          %s697 = scalar_lea.hbm %s1, %s696
          %s698 = scalar_lea.vmem [#allocation2], 31
          %s699 = scalar_lea.sflag [#allocation3], 31
          // Predicated region
          $region165: #{tpu_custom_call.1} parent=39 // pred_check
            _
          $region166: #{tpu_custom_call.1} parent=39 // pred_check_branch
            %701 = sbr.rel target = $region168
          $region167: #{tpu_custom_call.1} parent=39 // pred_region
            %702 = sst [smem:[#allocation18]] [#allocation81]
            %703 = sst [smem:[#allocation19]] [#allocation80]
          $region168: #{tpu_custom_call.1} parent=39 // pred_fallthru
            _
          %705 = shalt.err (0)
          %s707 = sshll.u32 %s698, 4
          %s708 = int_to_ptr.vmem [resolvable:$true] %s707
          %710 = dma.hbm_to_vmem [thread:$0]  %s697, 16, %s708, %s699
          %s711 = sld [smem:[#allocation9]]
          %713 = dma.done [#allocation3], 16
          %s714 = sld [smem:[#allocation9 + $0x1]]
          %716 = dma.done %s219, 16
          %s717 = sld [smem:[#allocation9 + $0x2]]
          %719 = dma.done %s235, 16
          %s720 = sld [smem:[#allocation9 + $0x3]]
          %722 = dma.done %s251, 16
          %s723 = sld [smem:[#allocation9 + $0x4]]
          %725 = dma.done %s267, 16
          %s726 = sld [smem:[#allocation9 + $0x5]]
          %728 = dma.done %s283, 16
          %s729 = sld [smem:[#allocation9 + $0x6]]
          %731 = dma.done %s299, 16
          %s732 = sld [smem:[#allocation9 + $0x7]]
          %734 = dma.done %s315, 16
          %s735 = sld [smem:[#allocation9 + $0x8]]
          %737 = dma.done %s331, 16
          %s738 = sld [smem:[#allocation9 + $0x9]]
          %740 = dma.done %s347, 16
          %s741 = sld [smem:[#allocation9 + $0xa]]
          %743 = dma.done %s363, 16
          %s744 = sld [smem:[#allocation9 + $0xb]]
          %746 = dma.done %s379, 16
          %s747 = sld [smem:[#allocation9 + $0xc]]
          %749 = dma.done %s395, 16
          %s750 = sld [smem:[#allocation9 + $0xd]]
          %752 = dma.done %s411, 16
          %s753 = sld [smem:[#allocation9 + $0xe]]
          %755 = dma.done %s427, 16
          %s756 = sld [smem:[#allocation9 + $0xf]]
          %758 = dma.done %s443, 16
          %s759 = sld [smem:[#allocation9 + $0x10]]
          %761 = dma.done %s459, 16
          %s762 = sld [smem:[#allocation9 + $0x11]]
          %764 = dma.done %s475, 16
          %s765 = sld [smem:[#allocation9 + $0x12]]
          %767 = dma.done %s491, 16
          %s768 = sld [smem:[#allocation9 + $0x13]]
          %770 = dma.done %s507, 16
          %s771 = sld [smem:[#allocation9 + $0x14]]
          %773 = dma.done %s523, 16
          %s774 = sld [smem:[#allocation9 + $0x15]]
          %776 = dma.done %s539, 16
          %s777 = sld [smem:[#allocation9 + $0x16]]
          %779 = dma.done %s555, 16
          %s780 = sld [smem:[#allocation9 + $0x17]]
          %782 = dma.done %s571, 16
          %s783 = sld [smem:[#allocation9 + $0x18]]
          %785 = dma.done %s587, 16
          %s786 = sld [smem:[#allocation9 + $0x19]]
          %788 = dma.done %s603, 16
          %s789 = sld [smem:[#allocation9 + $0x1a]]
          %791 = dma.done %s619, 16
          %s792 = sld [smem:[#allocation9 + $0x1b]]
          %794 = dma.done %s635, 16
          %s795 = sld [smem:[#allocation9 + $0x1c]]
          %797 = dma.done %s651, 16
          %s798 = sld [smem:[#allocation9 + $0x1d]]
          %800 = dma.done %s667, 16
          %s801 = sld [smem:[#allocation9 + $0x1e]]
          %803 = dma.done %s683, 16
          %s804 = sld [smem:[#allocation9 + $0x1f]]
          %806 = dma.done %s699, 16
          %v807 = vld [vmem:[#allocation2] sm:$0xf]
          %vm808 = vcmask 1043456
          %v809 = vsel %vm808, %v807, 0.0
          %v810 = vrot.slane %v809, 4
          %v811 = vadd.f32 %v809, %v810
          %v812 = vrot.slane %v811, 2
          %v813 = vadd.f32 %v811, %v812
          %v814 = vrot.slane %v813, 1
          %v815 = vadd.f32 %v813, %v814
          %v816 = vmul.f32 %v815, 0.25
          %817 = vst [vmem:[#allocation4] sm:$0x1] %v816
          %v818 = vld [vmem:[#allocation2 + $0x4] sm:$0xf]
          %v819 = vsel %vm808, %v818, 0.0
          %v820 = vrot.slane %v819, 4
          %v821 = vadd.f32 %v819, %v820
          %v822 = vrot.slane %v821, 2
          %v823 = vadd.f32 %v821, %v822
          %v824 = vrot.slane %v823, 1
          %v825 = vadd.f32 %v823, %v824
          %v826 = vmul.f32 %v825, 0.25
          %827 = vst [vmem:[#allocation4 + $0x1] sm:$0x1] %v826
          %v828 = vld [vmem:[#allocation2 + $0x8] sm:$0xf]
          %v829 = vsel %vm808, %v828, 0.0
          %v830 = vrot.slane %v829, 4
          %v831 = vadd.f32 %v829, %v830
          %v832 = vrot.slane %v831, 2
          %v833 = vadd.f32 %v831, %v832
          %v834 = vrot.slane %v833, 1
          %v835 = vadd.f32 %v833, %v834
          %v836 = vmul.f32 %v835, 0.25
          %837 = vst [vmem:[#allocation4 + $0x2] sm:$0x1] %v836
          %v838 = vld [vmem:[#allocation2 + $0xc] sm:$0xf]
          %v839 = vsel %vm808, %v838, 0.0
          %v840 = vrot.slane %v839, 4
          %v841 = vadd.f32 %v839, %v840
          %v842 = vrot.slane %v841, 2
          %v843 = vadd.f32 %v841, %v842
          %v844 = vrot.slane %v843, 1
          %v845 = vadd.f32 %v843, %v844
          %v846 = vmul.f32 %v845, 0.25
          %847 = vst [vmem:[#allocation4 + $0x3] sm:$0x1] %v846
          %v848 = vld [vmem:[#allocation2 + $0x10] sm:$0xf]
          %v849 = vsel %vm808, %v848, 0.0
          %v850 = vrot.slane %v849, 4
          %v851 = vadd.f32 %v849, %v850
          %v852 = vrot.slane %v851, 2
          %v853 = vadd.f32 %v851, %v852
          %v854 = vrot.slane %v853, 1
          %v855 = vadd.f32 %v853, %v854
          %v856 = vmul.f32 %v855, 0.25
          %857 = vst [vmem:[#allocation4 + $0x4] sm:$0x1] %v856
          %v858 = vld [vmem:[#allocation2 + $0x14] sm:$0xf]
          %v859 = vsel %vm808, %v858, 0.0
          %v860 = vrot.slane %v859, 4
          %v861 = vadd.f32 %v859, %v860
          %v862 = vrot.slane %v861, 2
          %v863 = vadd.f32 %v861, %v862
          %v864 = vrot.slane %v863, 1
          %v865 = vadd.f32 %v863, %v864
          %v866 = vmul.f32 %v865, 0.25
          %867 = vst [vmem:[#allocation4 + $0x5] sm:$0x1] %v866
          %v868 = vld [vmem:[#allocation2 + $0x18] sm:$0xf]
          %v869 = vsel %vm808, %v868, 0.0
          %v870 = vrot.slane %v869, 4
          %v871 = vadd.f32 %v869, %v870
          %v872 = vrot.slane %v871, 2
          %v873 = vadd.f32 %v871, %v872
          %v874 = vrot.slane %v873, 1
          %v875 = vadd.f32 %v873, %v874
          %v876 = vmul.f32 %v875, 0.25
          %877 = vst [vmem:[#allocation4 + $0x6] sm:$0x1] %v876
          %v878 = vld [vmem:[#allocation2 + $0x1c] sm:$0xf]
          %v879 = vsel %vm808, %v878, 0.0
          %v880 = vrot.slane %v879, 4
          %v881 = vadd.f32 %v879, %v880
          %v882 = vrot.slane %v881, 2
          %v883 = vadd.f32 %v881, %v882
          %v884 = vrot.slane %v883, 1
          %v885 = vadd.f32 %v883, %v884
          %v886 = vmul.f32 %v885, 0.25
          %887 = vst [vmem:[#allocation4 + $0x7] sm:$0x1] %v886
          %v888 = vld [vmem:[#allocation4] sm:$0xff]
          %v889 = vpack.c.bf16 %v888, %v888
          %890 = vst [vmem:[#allocation5] sm:$0xf] %v889
          %vm891 = vcmask 7168
          %892 = vst.msk [vmem:[#allocation6] sm:$0xff] %vm891, -inf
          %893 = vst.msk [vmem:[#allocation7] sm:$0xff] %vm891, 0.0
        $region40: #{tpu_custom_call.1} parent=27 // pred_fallthru
          _
        %v894 = vld [vmem:[#allocation5] sm:$0xf]
        %v895 = vld [vmem:[%s164] sm:$0xff]
        %v896 = vld [vmem:[%s164 + $0x8] sm:$0xff]
        %v897 = vld [vmem:[%s164 + $0x10] sm:$0xff]
        %v898 = vld [vmem:[%s164 + $0x18] sm:$0xff]
        %v899 = vld [vmem:[%s164 + $0x20] sm:$0xff]
        %v900 = vld [vmem:[%s164 + $0x28] sm:$0xff]
        %v901 = vld [vmem:[%s164 + $0x30] sm:$0xff]
        %v902 = vld [vmem:[%s164 + $0x38] sm:$0xff]
        %v903 = vld [vmem:[%s164 + $0x40] sm:$0xff]
        %v904 = vld [vmem:[%s164 + $0x48] sm:$0xff]
        %v905 = vld [vmem:[%s164 + $0x50] sm:$0xff]
        %v906 = vld [vmem:[%s164 + $0x58] sm:$0xff]
        %v907 = vld [vmem:[%s164 + $0x60] sm:$0xff]
        %v908 = vld [vmem:[%s164 + $0x68] sm:$0xff]
        %v909 = vld [vmem:[%s164 + $0x70] sm:$0xff]
        %v910 = vld [vmem:[%s164 + $0x78] sm:$0xff]
        %v911 = vld [vmem:[%s164 + $0x80] sm:$0xff]
        %v912 = vld [vmem:[%s164 + $0x88] sm:$0xff]
        %v913 = vld [vmem:[%s164 + $0x90] sm:$0xff]
        %v914 = vld [vmem:[%s164 + $0x98] sm:$0xff]
        %v915 = vld [vmem:[%s164 + $0xa0] sm:$0xff]
        %v916 = vld [vmem:[%s164 + $0xa8] sm:$0xff]
        %v917 = vld [vmem:[%s164 + $0xb0] sm:$0xff]
        %v918 = vld [vmem:[%s164 + $0xb8] sm:$0xff]
        %v919 = vld [vmem:[%s164 + $0xc0] sm:$0xff]
        %v920 = vld [vmem:[%s164 + $0xc8] sm:$0xff]
        %v921 = vld [vmem:[%s164 + $0xd0] sm:$0xff]
        %v922 = vld [vmem:[%s164 + $0xd8] sm:$0xff]
        %v923 = vld [vmem:[%s164 + $0xe0] sm:$0xff]
        %v924 = vld [vmem:[%s164 + $0xe8] sm:$0xff]
        %v925 = vld [vmem:[%s164 + $0xf0] sm:$0xff]
        %v926 = vld [vmem:[%s164 + $0xf8] sm:$0xff]
        %v927 = vld [vmem:[%s164 + $0x100] sm:$0xff]
        %v928 = vld [vmem:[%s164 + $0x108] sm:$0xff]
        %v929 = vld [vmem:[%s164 + $0x110] sm:$0xff]
        %v930 = vld [vmem:[%s164 + $0x118] sm:$0xff]
        %v931 = vld [vmem:[%s164 + $0x120] sm:$0xff]
        %v932 = vld [vmem:[%s164 + $0x128] sm:$0xff]
        %v933 = vld [vmem:[%s164 + $0x130] sm:$0xff]
        %v934 = vld [vmem:[%s164 + $0x138] sm:$0xff]
        %v935 = vld [vmem:[%s164 + $0x140] sm:$0xff]
        %v936 = vld [vmem:[%s164 + $0x148] sm:$0xff]
        %v937 = vld [vmem:[%s164 + $0x150] sm:$0xff]
        %v938 = vld [vmem:[%s164 + $0x158] sm:$0xff]
        %v939 = vld [vmem:[%s164 + $0x160] sm:$0xff]
        %v940 = vld [vmem:[%s164 + $0x168] sm:$0xff]
        %v941 = vld [vmem:[%s164 + $0x170] sm:$0xff]
        %v942 = vld [vmem:[%s164 + $0x178] sm:$0xff]
        %v943 = vld [vmem:[%s164 + $0x180] sm:$0xff]
        %v944 = vld [vmem:[%s164 + $0x188] sm:$0xff]
        %v945 = vld [vmem:[%s164 + $0x190] sm:$0xff]
        %v946 = vld [vmem:[%s164 + $0x198] sm:$0xff]
        %v947 = vld [vmem:[%s164 + $0x1a0] sm:$0xff]
        %v948 = vld [vmem:[%s164 + $0x1a8] sm:$0xff]
        %v949 = vld [vmem:[%s164 + $0x1b0] sm:$0xff]
        %v950 = vld [vmem:[%s164 + $0x1b8] sm:$0xff]
        %v951 = vld [vmem:[%s164 + $0x1c0] sm:$0xff]
        %v952 = vld [vmem:[%s164 + $0x1c8] sm:$0xff]
        %v953 = vld [vmem:[%s164 + $0x1d0] sm:$0xff]
        %v954 = vld [vmem:[%s164 + $0x1d8] sm:$0xff]
        %v955 = vld [vmem:[%s164 + $0x1e0] sm:$0xff]
        %v956 = vld [vmem:[%s164 + $0x1e8] sm:$0xff]
        %v957 = vld [vmem:[%s164 + $0x1f0] sm:$0xff]
        %v958 = vld [vmem:[%s164 + $0x1f8] sm:$0xff]
        %v959 = vld [vmem:[%s164 + $0x200] sm:$0xff]
        %v960 = vld [vmem:[%s164 + $0x208] sm:$0xff]
        %v961 = vld [vmem:[%s164 + $0x210] sm:$0xff]
        %v962 = vld [vmem:[%s164 + $0x218] sm:$0xff]
        %v963 = vld [vmem:[%s164 + $0x220] sm:$0xff]
        %v964 = vld [vmem:[%s164 + $0x228] sm:$0xff]
        %v965 = vld [vmem:[%s164 + $0x230] sm:$0xff]
        %v966 = vld [vmem:[%s164 + $0x238] sm:$0xff]
        %v967 = vld [vmem:[%s164 + $0x240] sm:$0xff]
        %v968 = vld [vmem:[%s164 + $0x248] sm:$0xff]
        %v969 = vld [vmem:[%s164 + $0x250] sm:$0xff]
        %v970 = vld [vmem:[%s164 + $0x258] sm:$0xff]
        %v971 = vld [vmem:[%s164 + $0x260] sm:$0xff]
        %v972 = vld [vmem:[%s164 + $0x268] sm:$0xff]
        %v973 = vld [vmem:[%s164 + $0x270] sm:$0xff]
        %v974 = vld [vmem:[%s164 + $0x278] sm:$0xff]
        %v975 = vld [vmem:[%s164 + $0x280] sm:$0xff]
        %v976 = vld [vmem:[%s164 + $0x288] sm:$0xff]
        %v977 = vld [vmem:[%s164 + $0x290] sm:$0xff]
        %v978 = vld [vmem:[%s164 + $0x298] sm:$0xff]
        %v979 = vld [vmem:[%s164 + $0x2a0] sm:$0xff]
        %v980 = vld [vmem:[%s164 + $0x2a8] sm:$0xff]
        %v981 = vld [vmem:[%s164 + $0x2b0] sm:$0xff]
        %v982 = vld [vmem:[%s164 + $0x2b8] sm:$0xff]
        %v983 = vld [vmem:[%s164 + $0x2c0] sm:$0xff]
        %v984 = vld [vmem:[%s164 + $0x2c8] sm:$0xff]
        %v985 = vld [vmem:[%s164 + $0x2d0] sm:$0xff]
        %v986 = vld [vmem:[%s164 + $0x2d8] sm:$0xff]
        %v987 = vld [vmem:[%s164 + $0x2e0] sm:$0xff]
        %v988 = vld [vmem:[%s164 + $0x2e8] sm:$0xff]
        %v989 = vld [vmem:[%s164 + $0x2f0] sm:$0xff]
        %v990 = vld [vmem:[%s164 + $0x2f8] sm:$0xff]
        %v991 = vld [vmem:[%s164 + $0x300] sm:$0xff]
        %v992 = vld [vmem:[%s164 + $0x308] sm:$0xff]
        %v993 = vld [vmem:[%s164 + $0x310] sm:$0xff]
        %v994 = vld [vmem:[%s164 + $0x318] sm:$0xff]
        %v995 = vld [vmem:[%s164 + $0x320] sm:$0xff]
        %v996 = vld [vmem:[%s164 + $0x328] sm:$0xff]
        %v997 = vld [vmem:[%s164 + $0x330] sm:$0xff]
        %v998 = vld [vmem:[%s164 + $0x338] sm:$0xff]
        %v999 = vld [vmem:[%s164 + $0x340] sm:$0xff]
        %v1000 = vld [vmem:[%s164 + $0x348] sm:$0xff]
        %v1001 = vld [vmem:[%s164 + $0x350] sm:$0xff]
        %v1002 = vld [vmem:[%s164 + $0x358] sm:$0xff]
        %v1003 = vld [vmem:[%s164 + $0x360] sm:$0xff]
        %v1004 = vld [vmem:[%s164 + $0x368] sm:$0xff]
        %v1005 = vld [vmem:[%s164 + $0x370] sm:$0xff]
        %v1006 = vld [vmem:[%s164 + $0x378] sm:$0xff]
        %v1007 = vld [vmem:[%s164 + $0x380] sm:$0xff]
        %v1008 = vld [vmem:[%s164 + $0x388] sm:$0xff]
        %v1009 = vld [vmem:[%s164 + $0x390] sm:$0xff]
        %v1010 = vld [vmem:[%s164 + $0x398] sm:$0xff]
        %v1011 = vld [vmem:[%s164 + $0x3a0] sm:$0xff]
        %v1012 = vld [vmem:[%s164 + $0x3a8] sm:$0xff]
        %v1013 = vld [vmem:[%s164 + $0x3b0] sm:$0xff]
        %v1014 = vld [vmem:[%s164 + $0x3b8] sm:$0xff]
        %v1015 = vld [vmem:[%s164 + $0x3c0] sm:$0xff]
        %v1016 = vld [vmem:[%s164 + $0x3c8] sm:$0xff]
        %v1017 = vld [vmem:[%s164 + $0x3d0] sm:$0xff]
        %v1018 = vld [vmem:[%s164 + $0x3d8] sm:$0xff]
        %v1019 = vld [vmem:[%s164 + $0x3e0] sm:$0xff]
        %v1020 = vld [vmem:[%s164 + $0x3e8] sm:$0xff]
        %v1021 = vld [vmem:[%s164 + $0x3f0] sm:$0xff]
        %v1022 = vld [vmem:[%s164 + $0x3f8] sm:$0xff]
        %v1023 = vld [vmem:[%s173] sm:$0xff]
        %v1024 = vld [vmem:[%s173 + $0x8] sm:$0xff]
        %v1027 = vlaneseq
        %v1028 = vshrl.u32 %v1027, 7
        %v1029 = vsub.s32 0, %v1028
        %v1030 = vrot.slane %v1023, %v1029
        %v1031 = vlaneseq
        %v1032 = vshrl.u32 %v1031, 7
        %v1033 = vsub.s32 1, %v1032
        %v1034 = vrot.slane %v1023, %v1033
        %v1035 = vlaneseq
        %v1036 = vshrl.u32 %v1035, 7
        %v1037 = vsub.s32 2, %v1036
        %v1038 = vrot.slane %v1023, %v1037
        %v1039 = vlaneseq
        %v1040 = vshrl.u32 %v1039, 7
        %v1041 = vsub.s32 3, %v1040
        %v1042 = vrot.slane %v1023, %v1041
        %v1043 = vlaneseq
        %v1044 = vshrl.u32 %v1043, 7
        %v1045 = vsub.s32 4, %v1044
        %v1046 = vrot.slane %v1023, %v1045
        %v1047 = vlaneseq
        %v1048 = vshrl.u32 %v1047, 7
        %v1049 = vsub.s32 5, %v1048
        %v1050 = vrot.slane %v1023, %v1049
        %v1051 = vlaneseq
        %v1052 = vshrl.u32 %v1051, 7
        %v1053 = vsub.s32 6, %v1052
        %v1054 = vrot.slane %v1023, %v1053
        %v1055 = vlaneseq
        %v1056 = vshrl.u32 %v1055, 7
        %v1057 = vsub.s32 7, %v1056
        %v1058 = vrot.slane %v1023, %v1057
        %v1059 = vlaneseq
        %v1060 = vshrl.u32 %v1059, 7
        %v1061 = vsub.s32 0, %v1060
        %v1062 = vrot.slane %v1024, %v1061
        %v1063 = vlaneseq
        %v1064 = vshrl.u32 %v1063, 7
        %v1065 = vsub.s32 1, %v1064
        %v1066 = vrot.slane %v1024, %v1065
        %v1067 = vlaneseq
        %v1068 = vshrl.u32 %v1067, 7
        %v1069 = vsub.s32 2, %v1068
        %v1070 = vrot.slane %v1024, %v1069
        %v1071 = vlaneseq
        %v1072 = vshrl.u32 %v1071, 7
        %v1073 = vsub.s32 3, %v1072
        %v1074 = vrot.slane %v1024, %v1073
        %v1075 = vlaneseq
        %v1076 = vshrl.u32 %v1075, 7
        %v1077 = vsub.s32 4, %v1076
        %v1078 = vrot.slane %v1024, %v1077
        %v1079 = vlaneseq
        %v1080 = vshrl.u32 %v1079, 7
        %v1081 = vsub.s32 5, %v1080
        %v1082 = vrot.slane %v1024, %v1081
        %v1083 = vlaneseq
        %v1084 = vshrl.u32 %v1083, 7
        %v1085 = vsub.s32 6, %v1084
        %v1086 = vrot.slane %v1024, %v1085
        %v1087 = vlaneseq
        %v1088 = vshrl.u32 %v1087, 7
        %v1089 = vsub.s32 7, %v1088
        %v1090 = vrot.slane %v1024, %v1089
        %v1235 = vunpack.c.l.b16 %v895
        %v1236 = vunpack.c.h.b16 %v895
        %v1237 = vunpack.c.l.b16 %v896
        %v1238 = vunpack.c.h.b16 %v896
        %v1239 = vunpack.c.l.b16 %v897
        %v1240 = vunpack.c.h.b16 %v897
        %v1241 = vunpack.c.l.b16 %v898
        %v1242 = vunpack.c.h.b16 %v898
        %v1243 = vunpack.c.l.b16 %v899
        %v1244 = vunpack.c.h.b16 %v899
        %v1245 = vunpack.c.l.b16 %v900
        %v1246 = vunpack.c.h.b16 %v900
        %v1247 = vunpack.c.l.b16 %v901
        %v1248 = vunpack.c.h.b16 %v901
        %v1249 = vunpack.c.l.b16 %v902
        %v1250 = vunpack.c.h.b16 %v902
        %v1251 = vunpack.c.l.b16 %v903
        %v1252 = vunpack.c.h.b16 %v903
        %v1253 = vunpack.c.l.b16 %v904
        %v1254 = vunpack.c.h.b16 %v904
        %v1255 = vunpack.c.l.b16 %v905
        %v1256 = vunpack.c.h.b16 %v905
        %v1257 = vunpack.c.l.b16 %v906
        %v1258 = vunpack.c.h.b16 %v906
        %v1259 = vunpack.c.l.b16 %v907
        %v1260 = vunpack.c.h.b16 %v907
        %v1261 = vunpack.c.l.b16 %v908
        %v1262 = vunpack.c.h.b16 %v908
        %v1263 = vunpack.c.l.b16 %v909
        %v1264 = vunpack.c.h.b16 %v909
        %v1265 = vunpack.c.l.b16 %v910
        %v1266 = vunpack.c.h.b16 %v910
        %v1267 = vunpack.c.l.b16 %v911
        %v1268 = vunpack.c.h.b16 %v911
        %v1269 = vunpack.c.l.b16 %v912
        %v1270 = vunpack.c.h.b16 %v912
        %v1271 = vunpack.c.l.b16 %v913
        %v1272 = vunpack.c.h.b16 %v913
        %v1273 = vunpack.c.l.b16 %v914
        %v1274 = vunpack.c.h.b16 %v914
        %v1275 = vunpack.c.l.b16 %v915
        %v1276 = vunpack.c.h.b16 %v915
        %v1277 = vunpack.c.l.b16 %v916
        %v1278 = vunpack.c.h.b16 %v916
        %v1279 = vunpack.c.l.b16 %v917
        %v1280 = vunpack.c.h.b16 %v917
        %v1281 = vunpack.c.l.b16 %v918
        %v1282 = vunpack.c.h.b16 %v918
        %v1283 = vunpack.c.l.b16 %v919
        %v1284 = vunpack.c.h.b16 %v919
        %v1285 = vunpack.c.l.b16 %v920
        %v1286 = vunpack.c.h.b16 %v920
        %v1287 = vunpack.c.l.b16 %v921
        %v1288 = vunpack.c.h.b16 %v921
        %v1289 = vunpack.c.l.b16 %v922
        %v1290 = vunpack.c.h.b16 %v922
        %v1291 = vunpack.c.l.b16 %v923
        %v1292 = vunpack.c.h.b16 %v923
        %v1293 = vunpack.c.l.b16 %v924
        %v1294 = vunpack.c.h.b16 %v924
        %v1295 = vunpack.c.l.b16 %v925
        %v1296 = vunpack.c.h.b16 %v925
        %v1297 = vunpack.c.l.b16 %v926
        %v1298 = vunpack.c.h.b16 %v926
        %v1299 = vunpack.c.l.b16 %v927
        %v1300 = vunpack.c.h.b16 %v927
        %v1301 = vunpack.c.l.b16 %v928
        %v1302 = vunpack.c.h.b16 %v928
        %v1303 = vunpack.c.l.b16 %v929
        %v1304 = vunpack.c.h.b16 %v929
        %v1305 = vunpack.c.l.b16 %v930
        %v1306 = vunpack.c.h.b16 %v930
        %v1307 = vunpack.c.l.b16 %v931
        %v1308 = vunpack.c.h.b16 %v931
        %v1309 = vunpack.c.l.b16 %v932
        %v1310 = vunpack.c.h.b16 %v932
        %v1311 = vunpack.c.l.b16 %v933
        %v1312 = vunpack.c.h.b16 %v933
        %v1313 = vunpack.c.l.b16 %v934
        %v1314 = vunpack.c.h.b16 %v934
        %v1315 = vunpack.c.l.b16 %v935
        %v1316 = vunpack.c.h.b16 %v935
        %v1317 = vunpack.c.l.b16 %v936
        %v1318 = vunpack.c.h.b16 %v936
        %v1319 = vunpack.c.l.b16 %v937
        %v1320 = vunpack.c.h.b16 %v937
        %v1321 = vunpack.c.l.b16 %v938
        %v1322 = vunpack.c.h.b16 %v938
        %v1323 = vunpack.c.l.b16 %v939
        %v1324 = vunpack.c.h.b16 %v939
        %v1325 = vunpack.c.l.b16 %v940
        %v1326 = vunpack.c.h.b16 %v940
        %v1327 = vunpack.c.l.b16 %v941
        %v1328 = vunpack.c.h.b16 %v941
        %v1329 = vunpack.c.l.b16 %v942
        %v1330 = vunpack.c.h.b16 %v942
        %v1331 = vunpack.c.l.b16 %v943
        %v1332 = vunpack.c.h.b16 %v943
        %v1333 = vunpack.c.l.b16 %v944
        %v1334 = vunpack.c.h.b16 %v944
        %v1335 = vunpack.c.l.b16 %v945
        %v1336 = vunpack.c.h.b16 %v945
        %v1337 = vunpack.c.l.b16 %v946
        %v1338 = vunpack.c.h.b16 %v946
        %v1339 = vunpack.c.l.b16 %v947
        %v1340 = vunpack.c.h.b16 %v947
        %v1341 = vunpack.c.l.b16 %v948
        %v1342 = vunpack.c.h.b16 %v948
        %v1343 = vunpack.c.l.b16 %v949
        %v1344 = vunpack.c.h.b16 %v949
        %v1345 = vunpack.c.l.b16 %v950
        %v1346 = vunpack.c.h.b16 %v950
        %v1347 = vunpack.c.l.b16 %v951
        %v1348 = vunpack.c.h.b16 %v951
        %v1349 = vunpack.c.l.b16 %v952
        %v1350 = vunpack.c.h.b16 %v952
        %v1351 = vunpack.c.l.b16 %v953
        %v1352 = vunpack.c.h.b16 %v953
        %v1353 = vunpack.c.l.b16 %v954
        %v1354 = vunpack.c.h.b16 %v954
        %v1355 = vunpack.c.l.b16 %v955
        %v1356 = vunpack.c.h.b16 %v955
        %v1357 = vunpack.c.l.b16 %v956
        %v1358 = vunpack.c.h.b16 %v956
        %v1359 = vunpack.c.l.b16 %v957
        %v1360 = vunpack.c.h.b16 %v957
        %v1361 = vunpack.c.l.b16 %v958
        %v1362 = vunpack.c.h.b16 %v958
        %v1363 = vunpack.c.l.b16 %v959
        %v1364 = vunpack.c.h.b16 %v959
        %v1365 = vunpack.c.l.b16 %v960
        %v1366 = vunpack.c.h.b16 %v960
        %v1367 = vunpack.c.l.b16 %v961
        %v1368 = vunpack.c.h.b16 %v961
        %v1369 = vunpack.c.l.b16 %v962
        %v1370 = vunpack.c.h.b16 %v962
        %v1371 = vunpack.c.l.b16 %v963
        %v1372 = vunpack.c.h.b16 %v963
        %v1373 = vunpack.c.l.b16 %v964
        %v1374 = vunpack.c.h.b16 %v964
        %v1375 = vunpack.c.l.b16 %v965
        %v1376 = vunpack.c.h.b16 %v965
        %v1377 = vunpack.c.l.b16 %v966
        %v1378 = vunpack.c.h.b16 %v966
        %v1379 = vunpack.c.l.b16 %v967
        %v1380 = vunpack.c.h.b16 %v967
        %v1381 = vunpack.c.l.b16 %v968
        %v1382 = vunpack.c.h.b16 %v968
        %v1383 = vunpack.c.l.b16 %v969
        %v1384 = vunpack.c.h.b16 %v969
        %v1385 = vunpack.c.l.b16 %v970
        %v1386 = vunpack.c.h.b16 %v970
        %v1387 = vunpack.c.l.b16 %v971
        %v1388 = vunpack.c.h.b16 %v971
        %v1389 = vunpack.c.l.b16 %v972
        %v1390 = vunpack.c.h.b16 %v972
        %v1391 = vunpack.c.l.b16 %v973
        %v1392 = vunpack.c.h.b16 %v973
        %v1393 = vunpack.c.l.b16 %v974
        %v1394 = vunpack.c.h.b16 %v974
        %v1395 = vunpack.c.l.b16 %v975
        %v1396 = vunpack.c.h.b16 %v975
        %v1397 = vunpack.c.l.b16 %v976
        %v1398 = vunpack.c.h.b16 %v976
        %v1399 = vunpack.c.l.b16 %v977
        %v1400 = vunpack.c.h.b16 %v977
        %v1401 = vunpack.c.l.b16 %v978
        %v1402 = vunpack.c.h.b16 %v978
        %v1403 = vunpack.c.l.b16 %v979
        %v1404 = vunpack.c.h.b16 %v979
        %v1405 = vunpack.c.l.b16 %v980
        %v1406 = vunpack.c.h.b16 %v980
        %v1407 = vunpack.c.l.b16 %v981
        %v1408 = vunpack.c.h.b16 %v981
        %v1409 = vunpack.c.l.b16 %v982
        %v1410 = vunpack.c.h.b16 %v982
        %v1411 = vunpack.c.l.b16 %v983
        %v1412 = vunpack.c.h.b16 %v983
        %v1413 = vunpack.c.l.b16 %v984
        %v1414 = vunpack.c.h.b16 %v984
        %v1415 = vunpack.c.l.b16 %v985
        %v1416 = vunpack.c.h.b16 %v985
        %v1417 = vunpack.c.l.b16 %v986
        %v1418 = vunpack.c.h.b16 %v986
        %v1419 = vunpack.c.l.b16 %v987
        %v1420 = vunpack.c.h.b16 %v987
        %v1421 = vunpack.c.l.b16 %v988
        %v1422 = vunpack.c.h.b16 %v988
        %v1423 = vunpack.c.l.b16 %v989
        %v1424 = vunpack.c.h.b16 %v989
        %v1425 = vunpack.c.l.b16 %v990
        %v1426 = vunpack.c.h.b16 %v990
        %v1427 = vunpack.c.l.b16 %v991
        %v1428 = vunpack.c.h.b16 %v991
        %v1429 = vunpack.c.l.b16 %v992
        %v1430 = vunpack.c.h.b16 %v992
        %v1431 = vunpack.c.l.b16 %v993
        %v1432 = vunpack.c.h.b16 %v993
        %v1433 = vunpack.c.l.b16 %v994
        %v1434 = vunpack.c.h.b16 %v994
        %v1435 = vunpack.c.l.b16 %v995
        %v1436 = vunpack.c.h.b16 %v995
        %v1437 = vunpack.c.l.b16 %v996
        %v1438 = vunpack.c.h.b16 %v996
        %v1439 = vunpack.c.l.b16 %v997
        %v1440 = vunpack.c.h.b16 %v997
        %v1441 = vunpack.c.l.b16 %v998
        %v1442 = vunpack.c.h.b16 %v998
        %v1443 = vunpack.c.l.b16 %v999
        %v1444 = vunpack.c.h.b16 %v999
        %v1445 = vunpack.c.l.b16 %v1000
        %v1446 = vunpack.c.h.b16 %v1000
        %v1447 = vunpack.c.l.b16 %v1001
        %v1448 = vunpack.c.h.b16 %v1001
        %v1449 = vunpack.c.l.b16 %v1002
        %v1450 = vunpack.c.h.b16 %v1002
        %v1451 = vunpack.c.l.b16 %v1003
        %v1452 = vunpack.c.h.b16 %v1003
        %v1453 = vunpack.c.l.b16 %v1004
        %v1454 = vunpack.c.h.b16 %v1004
        %v1455 = vunpack.c.l.b16 %v1005
        %v1456 = vunpack.c.h.b16 %v1005
        %v1457 = vunpack.c.l.b16 %v1006
        %v1458 = vunpack.c.h.b16 %v1006
        %v1459 = vunpack.c.l.b16 %v1007
        %v1460 = vunpack.c.h.b16 %v1007
        %v1461 = vunpack.c.l.b16 %v1008
        %v1462 = vunpack.c.h.b16 %v1008
        %v1463 = vunpack.c.l.b16 %v1009
        %v1464 = vunpack.c.h.b16 %v1009
        %v1465 = vunpack.c.l.b16 %v1010
        %v1466 = vunpack.c.h.b16 %v1010
        %v1467 = vunpack.c.l.b16 %v1011
        %v1468 = vunpack.c.h.b16 %v1011
        %v1469 = vunpack.c.l.b16 %v1012
        %v1470 = vunpack.c.h.b16 %v1012
        %v1471 = vunpack.c.l.b16 %v1013
        %v1472 = vunpack.c.h.b16 %v1013
        %v1473 = vunpack.c.l.b16 %v1014
        %v1474 = vunpack.c.h.b16 %v1014
        %v1475 = vunpack.c.l.b16 %v1015
        %v1476 = vunpack.c.h.b16 %v1015
        %v1477 = vunpack.c.l.b16 %v1016
        %v1478 = vunpack.c.h.b16 %v1016
        %v1479 = vunpack.c.l.b16 %v1017
        %v1480 = vunpack.c.h.b16 %v1017
        %v1481 = vunpack.c.l.b16 %v1018
        %v1482 = vunpack.c.h.b16 %v1018
        %v1483 = vunpack.c.l.b16 %v1019
        %v1484 = vunpack.c.h.b16 %v1019
        %v1485 = vunpack.c.l.b16 %v1020
        %v1486 = vunpack.c.h.b16 %v1020
        %v1487 = vunpack.c.l.b16 %v1021
        %v1488 = vunpack.c.h.b16 %v1021
        %v1489 = vunpack.c.l.b16 %v1022
        %v1490 = vunpack.c.h.b16 %v1022
        %v1491 = vpack.c.b16 %v1251, %v1235
        %v1492 = vpack.c.b16 %v1252, %v1236
        %v1493 = vpack.c.b16 %v1253, %v1237
        %v1494 = vpack.c.b16 %v1254, %v1238
        %v1495 = vpack.c.b16 %v1255, %v1239
        %v1496 = vpack.c.b16 %v1256, %v1240
        %v1497 = vpack.c.b16 %v1257, %v1241
        %v1498 = vpack.c.b16 %v1258, %v1242
        %v1499 = vpack.c.b16 %v1259, %v1243
        %v1500 = vpack.c.b16 %v1260, %v1244
        %v1501 = vpack.c.b16 %v1261, %v1245
        %v1502 = vpack.c.b16 %v1262, %v1246
        %v1503 = vpack.c.b16 %v1263, %v1247
        %v1504 = vpack.c.b16 %v1264, %v1248
        %v1505 = vpack.c.b16 %v1265, %v1249
        %v1506 = vpack.c.b16 %v1266, %v1250
        %v1507 = vpack.c.b16 %v1283, %v1267
        %v1508 = vpack.c.b16 %v1284, %v1268
        %v1509 = vpack.c.b16 %v1285, %v1269
        %v1510 = vpack.c.b16 %v1286, %v1270
        %v1511 = vpack.c.b16 %v1287, %v1271
        %v1512 = vpack.c.b16 %v1288, %v1272
        %v1513 = vpack.c.b16 %v1289, %v1273
        %v1514 = vpack.c.b16 %v1290, %v1274
        %v1515 = vpack.c.b16 %v1291, %v1275
        %v1516 = vpack.c.b16 %v1292, %v1276
        %v1517 = vpack.c.b16 %v1293, %v1277
        %v1518 = vpack.c.b16 %v1294, %v1278
        %v1519 = vpack.c.b16 %v1295, %v1279
        %v1520 = vpack.c.b16 %v1296, %v1280
        %v1521 = vpack.c.b16 %v1297, %v1281
        %v1522 = vpack.c.b16 %v1298, %v1282
        %v1523 = vpack.c.b16 %v1315, %v1299
        %v1524 = vpack.c.b16 %v1316, %v1300
        %v1525 = vpack.c.b16 %v1317, %v1301
        %v1526 = vpack.c.b16 %v1318, %v1302
        %v1527 = vpack.c.b16 %v1319, %v1303
        %v1528 = vpack.c.b16 %v1320, %v1304
        %v1529 = vpack.c.b16 %v1321, %v1305
        %v1530 = vpack.c.b16 %v1322, %v1306
        %v1531 = vpack.c.b16 %v1323, %v1307
        %v1532 = vpack.c.b16 %v1324, %v1308
        %v1533 = vpack.c.b16 %v1325, %v1309
        %v1534 = vpack.c.b16 %v1326, %v1310
        %v1535 = vpack.c.b16 %v1327, %v1311
        %v1536 = vpack.c.b16 %v1328, %v1312
        %v1537 = vpack.c.b16 %v1329, %v1313
        %v1538 = vpack.c.b16 %v1330, %v1314
        %v1539 = vpack.c.b16 %v1347, %v1331
        %v1540 = vpack.c.b16 %v1348, %v1332
        %v1541 = vpack.c.b16 %v1349, %v1333
        %v1542 = vpack.c.b16 %v1350, %v1334
        %v1543 = vpack.c.b16 %v1351, %v1335
        %v1544 = vpack.c.b16 %v1352, %v1336
        %v1545 = vpack.c.b16 %v1353, %v1337
        %v1546 = vpack.c.b16 %v1354, %v1338
        %v1547 = vpack.c.b16 %v1355, %v1339
        %v1548 = vpack.c.b16 %v1356, %v1340
        %v1549 = vpack.c.b16 %v1357, %v1341
        %v1550 = vpack.c.b16 %v1358, %v1342
        %v1551 = vpack.c.b16 %v1359, %v1343
        %v1552 = vpack.c.b16 %v1360, %v1344
        %v1553 = vpack.c.b16 %v1361, %v1345
        %v1554 = vpack.c.b16 %v1362, %v1346
        %v1555 = vpack.c.b16 %v1379, %v1363
        %v1556 = vpack.c.b16 %v1380, %v1364
        %v1557 = vpack.c.b16 %v1381, %v1365
        %v1558 = vpack.c.b16 %v1382, %v1366
        %v1559 = vpack.c.b16 %v1383, %v1367
        %v1560 = vpack.c.b16 %v1384, %v1368
        %v1561 = vpack.c.b16 %v1385, %v1369
        %v1562 = vpack.c.b16 %v1386, %v1370
        %v1563 = vpack.c.b16 %v1387, %v1371
        %v1564 = vpack.c.b16 %v1388, %v1372
        %v1565 = vpack.c.b16 %v1389, %v1373
        %v1566 = vpack.c.b16 %v1390, %v1374
        %v1567 = vpack.c.b16 %v1391, %v1375
        %v1568 = vpack.c.b16 %v1392, %v1376
        %v1569 = vpack.c.b16 %v1393, %v1377
        %v1570 = vpack.c.b16 %v1394, %v1378
        %v1571 = vpack.c.b16 %v1411, %v1395
        %v1572 = vpack.c.b16 %v1412, %v1396
        %v1573 = vpack.c.b16 %v1413, %v1397
        %v1574 = vpack.c.b16 %v1414, %v1398
        %v1575 = vpack.c.b16 %v1415, %v1399
        %v1576 = vpack.c.b16 %v1416, %v1400
        %v1577 = vpack.c.b16 %v1417, %v1401
        %v1578 = vpack.c.b16 %v1418, %v1402
        %v1579 = vpack.c.b16 %v1419, %v1403
        %v1580 = vpack.c.b16 %v1420, %v1404
        %v1581 = vpack.c.b16 %v1421, %v1405
        %v1582 = vpack.c.b16 %v1422, %v1406
        %v1583 = vpack.c.b16 %v1423, %v1407
        %v1584 = vpack.c.b16 %v1424, %v1408
        %v1585 = vpack.c.b16 %v1425, %v1409
        %v1586 = vpack.c.b16 %v1426, %v1410
        %v1587 = vpack.c.b16 %v1443, %v1427
        %v1588 = vpack.c.b16 %v1444, %v1428
        %v1589 = vpack.c.b16 %v1445, %v1429
        %v1590 = vpack.c.b16 %v1446, %v1430
        %v1591 = vpack.c.b16 %v1447, %v1431
        %v1592 = vpack.c.b16 %v1448, %v1432
        %v1593 = vpack.c.b16 %v1449, %v1433
        %v1594 = vpack.c.b16 %v1450, %v1434
        %v1595 = vpack.c.b16 %v1451, %v1435
        %v1596 = vpack.c.b16 %v1452, %v1436
        %v1597 = vpack.c.b16 %v1453, %v1437
        %v1598 = vpack.c.b16 %v1454, %v1438
        %v1599 = vpack.c.b16 %v1455, %v1439
        %v1600 = vpack.c.b16 %v1456, %v1440
        %v1601 = vpack.c.b16 %v1457, %v1441
        %v1602 = vpack.c.b16 %v1458, %v1442
        %v1603 = vpack.c.b16 %v1475, %v1459
        %v1604 = vpack.c.b16 %v1476, %v1460
        %v1605 = vpack.c.b16 %v1477, %v1461
        %v1606 = vpack.c.b16 %v1478, %v1462
        %v1607 = vpack.c.b16 %v1479, %v1463
        %v1608 = vpack.c.b16 %v1480, %v1464
        %v1609 = vpack.c.b16 %v1481, %v1465
        %v1610 = vpack.c.b16 %v1482, %v1466
        %v1611 = vpack.c.b16 %v1483, %v1467
        %v1612 = vpack.c.b16 %v1484, %v1468
        %v1613 = vpack.c.b16 %v1485, %v1469
        %v1614 = vpack.c.b16 %v1486, %v1470
        %v1615 = vpack.c.b16 %v1487, %v1471
        %v1616 = vpack.c.b16 %v1488, %v1472
        %v1617 = vpack.c.b16 %v1489, %v1473
        %v1618 = vpack.c.b16 %v1490, %v1474
        %1747 = vmatprep.subr.bf16.mxu0 %v1604
        %1748 = vmatpush1.bf16.msra.mxu0 %v1603
        %1749 = vmatprep.subr.bf16.mxu0 %v1588
        %1750 = vmatpush1.bf16.msra.mxu0 %v1587
        %1751 = vmatprep.subr.bf16.mxu0 %v1572
        %1752 = vmatpush1.bf16.msra.mxu0 %v1571
        %1753 = vmatprep.subr.bf16.mxu0 %v1556
        %1754 = vmatpush1.bf16.msra.mxu0 %v1555
        %1755 = vmatprep.subr.bf16.mxu0 %v1540
        %1756 = vmatpush1.bf16.msra.mxu0 %v1539
        %1757 = vmatprep.subr.bf16.mxu0 %v1524
        %1758 = vmatpush1.bf16.msra.mxu0 %v1523
        %1759 = vmatprep.subr.bf16.mxu0 %v1508
        %1760 = vmatpush1.bf16.msra.mxu0 %v1507
        %1761 = vmatprep.subr.bf16.mxu0 %v1492
        %1762 = vmatpush1.bf16.msra.mxu0 %v1491
        %1763 = vmatprep.subr.bf16.mxu0 0
        %1764 = vmatpush2.bf16.msra.mxu0 0
        %1765 = vmatprep.subr.bf16.mxu0 0
        %1766 = vmatpush2.bf16.msra.mxu0 0
        %1767 = vmatprep.subr.bf16.mxu0 0
        %1768 = vmatpush2.bf16.msra.mxu0 0
        %1769 = vmatprep.subr.bf16.mxu0 0
        %1770 = vmatpush2.bf16.msra.mxu0 0
        %1771 = vmatprep.subr.bf16.mxu0 0
        %1772 = vmatpush2.bf16.msra.mxu0 0
        %1773 = vmatprep.subr.bf16.mxu0 0
        %1774 = vmatpush2.bf16.msra.mxu0 0
        %1775 = vmatprep.subr.bf16.mxu0 0
        %1776 = vmatpush2.bf16.msra.mxu0 0
        %1777 = vmatprep.subr.bf16.mxu0 0
        %1778 = vmatpush2.bf16.msra.mxu0 0
        %1779 = vmatprep.mubr.bf16.mxu0 0
        %1780 = vmatmul.mubr.bf16.gmra.mxu0 %v894
        %v1781 = vpop.f32.mrf.mxu0
        %v1782 = vadd.f32 %v1030, %v1781
        %v1783 = vpop.f32.mrf.mxu0
        %v1784 = vadd.f32 %v1034, %v1783
        %v1785 = vpop.f32.mrf.mxu0
        %v1786 = vpop.f32.mrf.mxu0
        %1787 = vdwg.mxu0
        %1788 = vmatprep.subr.bf16.mxu0 %v1606
        %1789 = vmatpush1.bf16.msra.mxu0 %v1605
        %1790 = vmatprep.subr.bf16.mxu0 %v1590
        %1791 = vmatpush1.bf16.msra.mxu0 %v1589
        %1792 = vmatprep.subr.bf16.mxu0 %v1574
        %1793 = vmatpush1.bf16.msra.mxu0 %v1573
        %1794 = vmatprep.subr.bf16.mxu0 %v1558
        %1795 = vmatpush1.bf16.msra.mxu0 %v1557
        %1796 = vmatprep.subr.bf16.mxu0 %v1542
        %1797 = vmatpush1.bf16.msra.mxu0 %v1541
        %1798 = vmatprep.subr.bf16.mxu0 %v1526
        %1799 = vmatpush1.bf16.msra.mxu0 %v1525
        %1800 = vmatprep.subr.bf16.mxu0 %v1510
        %1801 = vmatpush1.bf16.msra.mxu0 %v1509
        %1802 = vmatprep.subr.bf16.mxu0 %v1494
        %1803 = vmatpush1.bf16.msra.mxu0 %v1493
        %1804 = vmatprep.subr.bf16.mxu0 0
        %1805 = vmatpush2.bf16.msra.mxu0 0
        %1806 = vmatprep.subr.bf16.mxu0 0
        %1807 = vmatpush2.bf16.msra.mxu0 0
        %1808 = vmatprep.subr.bf16.mxu0 0
        %1809 = vmatpush2.bf16.msra.mxu0 0
        %1810 = vmatprep.subr.bf16.mxu0 0
        %1811 = vmatpush2.bf16.msra.mxu0 0
        %1812 = vmatprep.subr.bf16.mxu0 0
        %1813 = vmatpush2.bf16.msra.mxu0 0
        %1814 = vmatprep.subr.bf16.mxu0 0
        %1815 = vmatpush2.bf16.msra.mxu0 0
        %1816 = vmatprep.subr.bf16.mxu0 0
        %1817 = vmatpush2.bf16.msra.mxu0 0
        %1818 = vmatprep.subr.bf16.mxu0 0
        %1819 = vmatpush2.bf16.msra.mxu0 0
        %1820 = vmatprep.mubr.bf16.mxu0 0
        %1821 = vmatmul.mubr.bf16.gmra.mxu0 %v894
        %v1822 = vpop.f32.mrf.mxu0
        %v1823 = vadd.f32 %v1038, %v1822
        %v1824 = vpop.f32.mrf.mxu0
        %v1825 = vadd.f32 %v1042, %v1824
        %v1826 = vpop.f32.mrf.mxu0
        %v1827 = vpop.f32.mrf.mxu0
        %1828 = vdwg.mxu0
        %1829 = vmatprep.subr.bf16.mxu0 %v1608
        %1830 = vmatpush1.bf16.msra.mxu0 %v1607
        %1831 = vmatprep.subr.bf16.mxu0 %v1592
        %1832 = vmatpush1.bf16.msra.mxu0 %v1591
        %1833 = vmatprep.subr.bf16.mxu0 %v1576
        %1834 = vmatpush1.bf16.msra.mxu0 %v1575
        %1835 = vmatprep.subr.bf16.mxu0 %v1560
        %1836 = vmatpush1.bf16.msra.mxu0 %v1559
        %1837 = vmatprep.subr.bf16.mxu0 %v1544
        %1838 = vmatpush1.bf16.msra.mxu0 %v1543
        %1839 = vmatprep.subr.bf16.mxu0 %v1528
        %1840 = vmatpush1.bf16.msra.mxu0 %v1527
        %1841 = vmatprep.subr.bf16.mxu0 %v1512
        %1842 = vmatpush1.bf16.msra.mxu0 %v1511
        %1843 = vmatprep.subr.bf16.mxu0 %v1496
        %1844 = vmatpush1.bf16.msra.mxu0 %v1495
        %1845 = vmatprep.subr.bf16.mxu0 0
        %1846 = vmatpush2.bf16.msra.mxu0 0
        %1847 = vmatprep.subr.bf16.mxu0 0
        %1848 = vmatpush2.bf16.msra.mxu0 0
        %1849 = vmatprep.subr.bf16.mxu0 0
        %1850 = vmatpush2.bf16.msra.mxu0 0
        %1851 = vmatprep.subr.bf16.mxu0 0
        %1852 = vmatpush2.bf16.msra.mxu0 0
        %1853 = vmatprep.subr.bf16.mxu0 0
        %1854 = vmatpush2.bf16.msra.mxu0 0
        %1855 = vmatprep.subr.bf16.mxu0 0
        %1856 = vmatpush2.bf16.msra.mxu0 0
        %1857 = vmatprep.subr.bf16.mxu0 0
        %1858 = vmatpush2.bf16.msra.mxu0 0
        %1859 = vmatprep.subr.bf16.mxu0 0
        %1860 = vmatpush2.bf16.msra.mxu0 0
        %1861 = vmatprep.mubr.bf16.mxu0 0
        %1862 = vmatmul.mubr.bf16.gmra.mxu0 %v894
        %v1863 = vpop.f32.mrf.mxu0
        %v1864 = vadd.f32 %v1046, %v1863
        %v1865 = vpop.f32.mrf.mxu0
        %v1866 = vadd.f32 %v1050, %v1865
        %v1867 = vpop.f32.mrf.mxu0
        %v1868 = vpop.f32.mrf.mxu0
        %1869 = vdwg.mxu0
        %1870 = vmatprep.subr.bf16.mxu0 %v1610
        %1871 = vmatpush1.bf16.msra.mxu0 %v1609
        %1872 = vmatprep.subr.bf16.mxu0 %v1594
        %1873 = vmatpush1.bf16.msra.mxu0 %v1593
        %1874 = vmatprep.subr.bf16.mxu0 %v1578
        %1875 = vmatpush1.bf16.msra.mxu0 %v1577
        %1876 = vmatprep.subr.bf16.mxu0 %v1562
        %1877 = vmatpush1.bf16.msra.mxu0 %v1561
        %1878 = vmatprep.subr.bf16.mxu0 %v1546
        %1879 = vmatpush1.bf16.msra.mxu0 %v1545
        %1880 = vmatprep.subr.bf16.mxu0 %v1530
        %1881 = vmatpush1.bf16.msra.mxu0 %v1529
        %1882 = vmatprep.subr.bf16.mxu0 %v1514
        %1883 = vmatpush1.bf16.msra.mxu0 %v1513
        %1884 = vmatprep.subr.bf16.mxu0 %v1498
        %1885 = vmatpush1.bf16.msra.mxu0 %v1497
        %1886 = vmatprep.subr.bf16.mxu0 0
        %1887 = vmatpush2.bf16.msra.mxu0 0
        %1888 = vmatprep.subr.bf16.mxu0 0
        %1889 = vmatpush2.bf16.msra.mxu0 0
        %1890 = vmatprep.subr.bf16.mxu0 0
        %1891 = vmatpush2.bf16.msra.mxu0 0
        %1892 = vmatprep.subr.bf16.mxu0 0
        %1893 = vmatpush2.bf16.msra.mxu0 0
        %1894 = vmatprep.subr.bf16.mxu0 0
        %1895 = vmatpush2.bf16.msra.mxu0 0
        %1896 = vmatprep.subr.bf16.mxu0 0
        %1897 = vmatpush2.bf16.msra.mxu0 0
        %1898 = vmatprep.subr.bf16.mxu0 0
        %1899 = vmatpush2.bf16.msra.mxu0 0
        %1900 = vmatprep.subr.bf16.mxu0 0
        %1901 = vmatpush2.bf16.msra.mxu0 0
        %1902 = vmatprep.mubr.bf16.mxu0 0
        %1903 = vmatmul.mubr.bf16.gmra.mxu0 %v894
        %v1904 = vpop.f32.mrf.mxu0
        %v1905 = vadd.f32 %v1054, %v1904
        %v1906 = vpop.f32.mrf.mxu0
        %v1907 = vadd.f32 %v1058, %v1906
        %v1908 = vpop.f32.mrf.mxu0
        %v1909 = vpop.f32.mrf.mxu0
        %1910 = vdwg.mxu0
        %1911 = vmatprep.subr.bf16.mxu0 %v1612
        %1912 = vmatpush1.bf16.msra.mxu0 %v1611
        %1913 = vmatprep.subr.bf16.mxu0 %v1596
        %1914 = vmatpush1.bf16.msra.mxu0 %v1595
        %1915 = vmatprep.subr.bf16.mxu0 %v1580
        %1916 = vmatpush1.bf16.msra.mxu0 %v1579
        %1917 = vmatprep.subr.bf16.mxu0 %v1564
        %1918 = vmatpush1.bf16.msra.mxu0 %v1563
        %1919 = vmatprep.subr.bf16.mxu0 %v1548
        %1920 = vmatpush1.bf16.msra.mxu0 %v1547
        %1921 = vmatprep.subr.bf16.mxu0 %v1532
        %1922 = vmatpush1.bf16.msra.mxu0 %v1531
        %1923 = vmatprep.subr.bf16.mxu0 %v1516
        %1924 = vmatpush1.bf16.msra.mxu0 %v1515
        %1925 = vmatprep.subr.bf16.mxu0 %v1500
        %1926 = vmatpush1.bf16.msra.mxu0 %v1499
        %1927 = vmatprep.subr.bf16.mxu0 0
        %1928 = vmatpush2.bf16.msra.mxu0 0
        %1929 = vmatprep.subr.bf16.mxu0 0
        %1930 = vmatpush2.bf16.msra.mxu0 0
        %1931 = vmatprep.subr.bf16.mxu0 0
        %1932 = vmatpush2.bf16.msra.mxu0 0
        %1933 = vmatprep.subr.bf16.mxu0 0
        %1934 = vmatpush2.bf16.msra.mxu0 0
        %1935 = vmatprep.subr.bf16.mxu0 0
        %1936 = vmatpush2.bf16.msra.mxu0 0
        %1937 = vmatprep.subr.bf16.mxu0 0
        %1938 = vmatpush2.bf16.msra.mxu0 0
        %1939 = vmatprep.subr.bf16.mxu0 0
        %1940 = vmatpush2.bf16.msra.mxu0 0
        %1941 = vmatprep.subr.bf16.mxu0 0
        %1942 = vmatpush2.bf16.msra.mxu0 0
        %1943 = vmatprep.mubr.bf16.mxu0 0
        %1944 = vmatmul.mubr.bf16.gmra.mxu0 %v894
        %v1945 = vpop.f32.mrf.mxu0
        %v1946 = vadd.f32 %v1062, %v1945
        %v1947 = vpop.f32.mrf.mxu0
        %v1948 = vadd.f32 %v1066, %v1947
        %v1949 = vpop.f32.mrf.mxu0
        %v1950 = vpop.f32.mrf.mxu0
        %1951 = vdwg.mxu0
        %1952 = vmatprep.subr.bf16.mxu0 %v1614
        %1953 = vmatpush1.bf16.msra.mxu0 %v1613
        %1954 = vmatprep.subr.bf16.mxu0 %v1598
        %1955 = vmatpush1.bf16.msra.mxu0 %v1597
        %1956 = vmatprep.subr.bf16.mxu0 %v1582
        %1957 = vmatpush1.bf16.msra.mxu0 %v1581
        %1958 = vmatprep.subr.bf16.mxu0 %v1566
        %1959 = vmatpush1.bf16.msra.mxu0 %v1565
        %1960 = vmatprep.subr.bf16.mxu0 %v1550
        %1961 = vmatpush1.bf16.msra.mxu0 %v1549
        %1962 = vmatprep.subr.bf16.mxu0 %v1534
        %1963 = vmatpush1.bf16.msra.mxu0 %v1533
        %1964 = vmatprep.subr.bf16.mxu0 %v1518
        %1965 = vmatpush1.bf16.msra.mxu0 %v1517
        %1966 = vmatprep.subr.bf16.mxu0 %v1502
        %1967 = vmatpush1.bf16.msra.mxu0 %v1501
        %1968 = vmatprep.subr.bf16.mxu0 0
        %1969 = vmatpush2.bf16.msra.mxu0 0
        %1970 = vmatprep.subr.bf16.mxu0 0
        %1971 = vmatpush2.bf16.msra.mxu0 0
        %1972 = vmatprep.subr.bf16.mxu0 0
        %1973 = vmatpush2.bf16.msra.mxu0 0
        %1974 = vmatprep.subr.bf16.mxu0 0
        %1975 = vmatpush2.bf16.msra.mxu0 0
        %1976 = vmatprep.subr.bf16.mxu0 0
        %1977 = vmatpush2.bf16.msra.mxu0 0
        %1978 = vmatprep.subr.bf16.mxu0 0
        %1979 = vmatpush2.bf16.msra.mxu0 0
        %1980 = vmatprep.subr.bf16.mxu0 0
        %1981 = vmatpush2.bf16.msra.mxu0 0
        %1982 = vmatprep.subr.bf16.mxu0 0
        %1983 = vmatpush2.bf16.msra.mxu0 0
        %1984 = vmatprep.mubr.bf16.mxu0 0
        %1985 = vmatmul.mubr.bf16.gmra.mxu0 %v894
        %v1986 = vpop.f32.mrf.mxu0
        %v1987 = vadd.f32 %v1070, %v1986
        %v1988 = vpop.f32.mrf.mxu0
        %v1989 = vadd.f32 %v1074, %v1988
        %v1990 = vpop.f32.mrf.mxu0
        %v1991 = vpop.f32.mrf.mxu0
        %1992 = vdwg.mxu0
        %1993 = vmatprep.subr.bf16.mxu0 %v1616
        %1994 = vmatpush1.bf16.msra.mxu0 %v1615
        %1995 = vmatprep.subr.bf16.mxu0 %v1600
        %1996 = vmatpush1.bf16.msra.mxu0 %v1599
        %1997 = vmatprep.subr.bf16.mxu0 %v1584
        %1998 = vmatpush1.bf16.msra.mxu0 %v1583
        %1999 = vmatprep.subr.bf16.mxu0 %v1568
        %2000 = vmatpush1.bf16.msra.mxu0 %v1567
        %2001 = vmatprep.subr.bf16.mxu0 %v1552
        %2002 = vmatpush1.bf16.msra.mxu0 %v1551
        %2003 = vmatprep.subr.bf16.mxu0 %v1536
        %2004 = vmatpush1.bf16.msra.mxu0 %v1535
        %2005 = vmatprep.subr.bf16.mxu0 %v1520
        %2006 = vmatpush1.bf16.msra.mxu0 %v1519
        %2007 = vmatprep.subr.bf16.mxu0 %v1504
        %2008 = vmatpush1.bf16.msra.mxu0 %v1503
        %2009 = vmatprep.subr.bf16.mxu0 0
        %2010 = vmatpush2.bf16.msra.mxu0 0
        %2011 = vmatprep.subr.bf16.mxu0 0
        %2012 = vmatpush2.bf16.msra.mxu0 0
        %2013 = vmatprep.subr.bf16.mxu0 0
        %2014 = vmatpush2.bf16.msra.mxu0 0
        %2015 = vmatprep.subr.bf16.mxu0 0
        %2016 = vmatpush2.bf16.msra.mxu0 0
        %2017 = vmatprep.subr.bf16.mxu0 0
        %2018 = vmatpush2.bf16.msra.mxu0 0
        %2019 = vmatprep.subr.bf16.mxu0 0
        %2020 = vmatpush2.bf16.msra.mxu0 0
        %2021 = vmatprep.subr.bf16.mxu0 0
        %2022 = vmatpush2.bf16.msra.mxu0 0
        %2023 = vmatprep.subr.bf16.mxu0 0
        %2024 = vmatpush2.bf16.msra.mxu0 0
        %2025 = vmatprep.mubr.bf16.mxu0 0
        %2026 = vmatmul.mubr.bf16.gmra.mxu0 %v894
        %v2027 = vpop.f32.mrf.mxu0
        %v2028 = vadd.f32 %v1078, %v2027
        %v2029 = vpop.f32.mrf.mxu0
        %v2030 = vadd.f32 %v1082, %v2029
        %v2031 = vpop.f32.mrf.mxu0
        %v2032 = vpop.f32.mrf.mxu0
        %2033 = vdwg.mxu0
        %2034 = vmatprep.subr.bf16.mxu0 %v1618
        %2035 = vmatpush1.bf16.msra.mxu0 %v1617
        %2036 = vmatprep.subr.bf16.mxu0 %v1602
        %2037 = vmatpush1.bf16.msra.mxu0 %v1601
        %2038 = vmatprep.subr.bf16.mxu0 %v1586
        %2039 = vmatpush1.bf16.msra.mxu0 %v1585
        %2040 = vmatprep.subr.bf16.mxu0 %v1570
        %2041 = vmatpush1.bf16.msra.mxu0 %v1569
        %2042 = vmatprep.subr.bf16.mxu0 %v1554
        %2043 = vmatpush1.bf16.msra.mxu0 %v1553
        %2044 = vmatprep.subr.bf16.mxu0 %v1538
        %2045 = vmatpush1.bf16.msra.mxu0 %v1537
        %2046 = vmatprep.subr.bf16.mxu0 %v1522
        %2047 = vmatpush1.bf16.msra.mxu0 %v1521
        %2048 = vmatprep.subr.bf16.mxu0 %v1506
        %2049 = vmatpush1.bf16.msra.mxu0 %v1505
        %2050 = vmatprep.subr.bf16.mxu0 0
        %2051 = vmatpush2.bf16.msra.mxu0 0
        %2052 = vmatprep.subr.bf16.mxu0 0
        %2053 = vmatpush2.bf16.msra.mxu0 0
        %2054 = vmatprep.subr.bf16.mxu0 0
        %2055 = vmatpush2.bf16.msra.mxu0 0
        %2056 = vmatprep.subr.bf16.mxu0 0
        %2057 = vmatpush2.bf16.msra.mxu0 0
        %2058 = vmatprep.subr.bf16.mxu0 0
        %2059 = vmatpush2.bf16.msra.mxu0 0
        %2060 = vmatprep.subr.bf16.mxu0 0
        %2061 = vmatpush2.bf16.msra.mxu0 0
        %2062 = vmatprep.subr.bf16.mxu0 0
        %2063 = vmatpush2.bf16.msra.mxu0 0
        %2064 = vmatprep.subr.bf16.mxu0 0
        %2065 = vmatpush2.bf16.msra.mxu0 0
        %2066 = vmatprep.mubr.bf16.mxu0 0
        %2067 = vmatmul.mubr.bf16.gmra.mxu0 %v894
        %v2068 = vpop.f32.mrf.mxu0
        %v2069 = vadd.f32 %v1086, %v2068
        %v2070 = vpop.f32.mrf.mxu0
        %v2071 = vadd.f32 %v1090, %v2070
        %v2072 = vpop.f32.mrf.mxu0
        %v2073 = vpop.f32.mrf.mxu0
        %2074 = vdwg.mxu0
        %s2075 = smul.u32 %s26, 2048
        %s2076 = sshra.s32 %s2075, 7
        %s2077 = sand.u32 %s2075, 127
        %s2078 = smul.addr %s2076, 8
        %s2079 = scalar_lea.vmem [#allocation15], %s2078
        %2080 = vst [vmem:[%s2079] sm:$0xff] %v1782
        %2081 = vst [vmem:[%s2079 + $0x8] sm:$0xff] %v1784
        %2082 = vst [vmem:[%s2079 + $0x10] sm:$0xff] %v1823
        %2083 = vst [vmem:[%s2079 + $0x18] sm:$0xff] %v1825
        %2084 = vst [vmem:[%s2079 + $0x20] sm:$0xff] %v1864
        %2085 = vst [vmem:[%s2079 + $0x28] sm:$0xff] %v1866
        %2086 = vst [vmem:[%s2079 + $0x30] sm:$0xff] %v1905
        %2087 = vst [vmem:[%s2079 + $0x38] sm:$0xff] %v1907
        %2088 = vst [vmem:[%s2079 + $0x40] sm:$0xff] %v1946
        %2089 = vst [vmem:[%s2079 + $0x48] sm:$0xff] %v1948
        %2090 = vst [vmem:[%s2079 + $0x50] sm:$0xff] %v1987
        %2091 = vst [vmem:[%s2079 + $0x58] sm:$0xff] %v1989
        %2092 = vst [vmem:[%s2079 + $0x60] sm:$0xff] %v2028
        %2093 = vst [vmem:[%s2079 + $0x68] sm:$0xff] %v2030
        %2094 = vst [vmem:[%s2079 + $0x70] sm:$0xff] %v2069
        %2095 = vst [vmem:[%s2079 + $0x78] sm:$0xff] %v2071
        %v2096 = vmax.f32 %v1782, %v1864
        %v2097 = vmax.f32 %v1784, %v1866
        %v2098 = vmax.f32 %v1823, %v1905
        %v2099 = vmax.f32 %v1825, %v1907
        %v2100 = vmax.f32 %v2096, %v1946
        %v2101 = vmax.f32 %v2097, %v1948
        %v2102 = vmax.f32 %v2098, %v1987
        %v2103 = vmax.f32 %v2099, %v1989
        %v2104 = vmax.f32 %v2100, %v2028
        %v2105 = vmax.f32 %v2101, %v2030
        %v2106 = vmax.f32 %v2102, %v2069
        %v2107 = vmax.f32 %v2103, %v2071
        %v2108 = vmax.f32 %v2104, %v2105
        %v2109 = vmax.f32 %v2106, %v2107
        %v2110 = vmax.f32 %v2108, %v2109
        %2111 = vmax.xlane.f32.xlu0 %v2110
        %v2112 = vpop.xlane.xlu0 %2111
        %v2113 = vld [vmem:[#allocation6] sm:$0xff]
        %v2114 = vmax.f32 %v2113, %v2112
        %v2115 = vld [vmem:[#allocation7] sm:$0xff]
        %v2116 = vsub.f32 %v2113, %v2114
        %v2117 = vmul.f32 %v2116, 1.442695
        %v2118 = vpow.pop %v2117
        %v2119 = vmul.f32 %v2115, %v2118
        %2121 = vset.pattern.permute.xlu0 0
        %2122 = vperm.xlu0 %2121, %v2114
        %v2123 = vpop.permute.xlu0 %2122
        %v2125 = vsub.f32 %v1782, %v2123
        %v2126 = vsub.f32 %v1784, %v2123
        %v2127 = vsub.f32 %v1823, %v2123
        %v2128 = vsub.f32 %v1825, %v2123
        %v2129 = vsub.f32 %v1864, %v2123
        %v2130 = vsub.f32 %v1866, %v2123
        %v2131 = vsub.f32 %v1905, %v2123
        %v2132 = vsub.f32 %v1907, %v2123
        %v2133 = vsub.f32 %v1946, %v2123
        %v2134 = vsub.f32 %v1948, %v2123
        %v2135 = vsub.f32 %v1987, %v2123
        %v2136 = vsub.f32 %v1989, %v2123
        %v2137 = vsub.f32 %v2028, %v2123
        %v2138 = vsub.f32 %v2030, %v2123
        %v2139 = vsub.f32 %v2069, %v2123
        %v2140 = vsub.f32 %v2071, %v2123
        %v2141 = vmul.f32 %v2125, 1.442695
        %v2142 = vpow.pop %v2141
        %v2143 = vmul.f32 %v2126, 1.442695
        %v2144 = vpow.pop %v2143
        %v2145 = vmul.f32 %v2127, 1.442695
        %v2146 = vpow.pop %v2145
        %v2147 = vmul.f32 %v2128, 1.442695
        %v2148 = vpow.pop %v2147
        %v2149 = vmul.f32 %v2129, 1.442695
        %v2150 = vpow.pop %v2149
        %v2151 = vmul.f32 %v2130, 1.442695
        %v2152 = vpow.pop %v2151
        %v2153 = vmul.f32 %v2131, 1.442695
        %v2154 = vpow.pop %v2153
        %v2155 = vmul.f32 %v2132, 1.442695
        %v2156 = vpow.pop %v2155
        %v2157 = vmul.f32 %v2133, 1.442695
        %v2158 = vpow.pop %v2157
        %v2159 = vmul.f32 %v2134, 1.442695
        %v2160 = vpow.pop %v2159
        %v2161 = vmul.f32 %v2135, 1.442695
        %v2162 = vpow.pop %v2161
        %v2163 = vmul.f32 %v2136, 1.442695
        %v2164 = vpow.pop %v2163
        %v2165 = vmul.f32 %v2137, 1.442695
        %v2166 = vpow.pop %v2165
        %v2167 = vmul.f32 %v2138, 1.442695
        %v2168 = vpow.pop %v2167
        %v2169 = vmul.f32 %v2139, 1.442695
        %v2170 = vpow.pop %v2169
        %v2171 = vmul.f32 %v2140, 1.442695
        %v2172 = vpow.pop %v2171
        %v2173 = vadd.f32 %v2142, %v2144
        %v2174 = vadd.f32 %v2173, %v2146
        %v2175 = vadd.f32 %v2174, %v2148
        %v2176 = vadd.f32 %v2175, %v2150
        %v2177 = vadd.f32 %v2176, %v2152
        %v2178 = vadd.f32 %v2177, %v2154
        %v2179 = vadd.f32 %v2178, %v2156
        %v2180 = vadd.f32 %v2179, %v2158
        %v2181 = vadd.f32 %v2180, %v2160
        %v2182 = vadd.f32 %v2181, %v2162
        %v2183 = vadd.f32 %v2182, %v2164
        %v2184 = vadd.f32 %v2183, %v2166
        %v2185 = vadd.f32 %v2184, %v2168
        %v2186 = vadd.f32 %v2185, %v2170
        %v2187 = vadd.f32 %v2186, %v2172
        %2188 = vadd.xlane.f32.xlu0 %v2187
        %v2189 = vpop.xlane.xlu0 %2188
        %v2190 = vadd.f32 %v2119, %v2189
        %vm2191 = vcmask 7168
        %2192 = vst.msk [vmem:[#allocation7] sm:$0xff] %vm2191, %v2190
        %2193 = vst.msk [vmem:[#allocation6] sm:$0xff] %vm2191, %v2114
        %p2194 = scmp.eq.s32.totalorder %s26, 2
        // Predicated region
        $region169: #{tpu_custom_call.1} parent=27 // pred_check
          %p2195 = pneg %p2194
        $region170: #{tpu_custom_call.1} parent=27 // pred_check_branch
          %2197 = sbr.rel (%p2195) target = $region172
        $region171: #{tpu_custom_call.1} parent=27 // pred_region
          %v2198 = vld [vmem:[#allocation15] sm:$0xff]
          %v2199 = vld [vmem:[#allocation15 + $0x8] sm:$0xff]
          %v2200 = vld [vmem:[#allocation15 + $0x10] sm:$0xff]
          %v2201 = vld [vmem:[#allocation15 + $0x18] sm:$0xff]
          %v2202 = vld [vmem:[#allocation15 + $0x20] sm:$0xff]
          %v2203 = vld [vmem:[#allocation15 + $0x28] sm:$0xff]
          %v2204 = vld [vmem:[#allocation15 + $0x30] sm:$0xff]
          %v2205 = vld [vmem:[#allocation15 + $0x38] sm:$0xff]
          %v2206 = vld [vmem:[#allocation15 + $0x40] sm:$0xff]
          %v2207 = vld [vmem:[#allocation15 + $0x48] sm:$0xff]
          %v2208 = vld [vmem:[#allocation15 + $0x50] sm:$0xff]
          %v2209 = vld [vmem:[#allocation15 + $0x58] sm:$0xff]
          %v2210 = vld [vmem:[#allocation15 + $0x60] sm:$0xff]
          %v2211 = vld [vmem:[#allocation15 + $0x68] sm:$0xff]
          %v2212 = vld [vmem:[#allocation15 + $0x70] sm:$0xff]
          %v2213 = vld [vmem:[#allocation15 + $0x78] sm:$0xff]
          %v2214 = vld [vmem:[#allocation15 + $0x80] sm:$0xff]
          %v2215 = vld [vmem:[#allocation15 + $0x88] sm:$0xff]
          %v2216 = vld [vmem:[#allocation15 + $0x90] sm:$0xff]
          %v2217 = vld [vmem:[#allocation15 + $0x98] sm:$0xff]
          %v2218 = vld [vmem:[#allocation15 + $0xa0] sm:$0xff]
          %v2219 = vld [vmem:[#allocation15 + $0xa8] sm:$0xff]
          %v2220 = vld [vmem:[#allocation15 + $0xb0] sm:$0xff]
          %v2221 = vld [vmem:[#allocation15 + $0xb8] sm:$0xff]
          %v2222 = vld [vmem:[#allocation15 + $0xc0] sm:$0xff]
          %v2223 = vld [vmem:[#allocation15 + $0xc8] sm:$0xff]
          %v2224 = vld [vmem:[#allocation15 + $0xd0] sm:$0xff]
          %v2225 = vld [vmem:[#allocation15 + $0xd8] sm:$0xff]
          %v2226 = vld [vmem:[#allocation15 + $0xe0] sm:$0xff]
          %v2227 = vld [vmem:[#allocation15 + $0xe8] sm:$0xff]
          %v2228 = vld [vmem:[#allocation15 + $0xf0] sm:$0xff]
          %v2229 = vld [vmem:[#allocation15 + $0xf8] sm:$0xff]
          %v2230 = vld [vmem:[#allocation15 + $0x100] sm:$0xff]
          %v2231 = vld [vmem:[#allocation15 + $0x108] sm:$0xff]
          %v2232 = vld [vmem:[#allocation15 + $0x110] sm:$0xff]
          %v2233 = vld [vmem:[#allocation15 + $0x118] sm:$0xff]
          %v2234 = vld [vmem:[#allocation15 + $0x120] sm:$0xff]
          %v2235 = vld [vmem:[#allocation15 + $0x128] sm:$0xff]
          %v2236 = vld [vmem:[#allocation15 + $0x130] sm:$0xff]
          %v2237 = vld [vmem:[#allocation15 + $0x138] sm:$0xff]
          %v2238 = vld [vmem:[#allocation15 + $0x140] sm:$0xff]
          %v2239 = vld [vmem:[#allocation15 + $0x148] sm:$0xff]
          %v2240 = vld [vmem:[#allocation15 + $0x150] sm:$0xff]
          %v2241 = vld [vmem:[#allocation15 + $0x158] sm:$0xff]
          %v2242 = vld [vmem:[#allocation15 + $0x160] sm:$0xff]
          %v2243 = vld [vmem:[#allocation15 + $0x168] sm:$0xff]
          %v2244 = vld [vmem:[#allocation15 + $0x170] sm:$0xff]
          %v2245 = vld [vmem:[#allocation15 + $0x178] sm:$0xff]
          %v2246 = vld [vmem:[#allocation6] sm:$0xff]
          %v2247 = vld [vmem:[#allocation7] sm:$0xff]
          %v2248 = vlog2.pop %v2247
          %v2249 = vmul.f32 %v2248, 0.6931472
          %v2250 = vadd.f32 %v2246, %v2249
          %2252 = vset.pattern.permute.xlu0 0
          %2253 = vperm.xlu0 %2252, %v2250
          %v2254 = vpop.permute.xlu0 %2253
          %v2256 = vsub.f32 %v2198, %v2254
          %v2257 = vsub.f32 %v2199, %v2254
          %v2258 = vsub.f32 %v2200, %v2254
          %v2259 = vsub.f32 %v2201, %v2254
          %v2260 = vsub.f32 %v2202, %v2254
          %v2261 = vsub.f32 %v2203, %v2254
          %v2262 = vsub.f32 %v2204, %v2254
          %v2263 = vsub.f32 %v2205, %v2254
          %v2264 = vsub.f32 %v2206, %v2254
          %v2265 = vsub.f32 %v2207, %v2254
          %v2266 = vsub.f32 %v2208, %v2254
          %v2267 = vsub.f32 %v2209, %v2254
          %v2268 = vsub.f32 %v2210, %v2254
          %v2269 = vsub.f32 %v2211, %v2254
          %v2270 = vsub.f32 %v2212, %v2254
          %v2271 = vsub.f32 %v2213, %v2254
          %v2272 = vsub.f32 %v2214, %v2254
          %v2273 = vsub.f32 %v2215, %v2254
          %v2274 = vsub.f32 %v2216, %v2254
          %v2275 = vsub.f32 %v2217, %v2254
          %v2276 = vsub.f32 %v2218, %v2254
          %v2277 = vsub.f32 %v2219, %v2254
          %v2278 = vsub.f32 %v2220, %v2254
          %v2279 = vsub.f32 %v2221, %v2254
          %v2280 = vsub.f32 %v2222, %v2254
          %v2281 = vsub.f32 %v2223, %v2254
          %v2282 = vsub.f32 %v2224, %v2254
          %v2283 = vsub.f32 %v2225, %v2254
          %v2284 = vsub.f32 %v2226, %v2254
          %v2285 = vsub.f32 %v2227, %v2254
          %v2286 = vsub.f32 %v2228, %v2254
          %v2287 = vsub.f32 %v2229, %v2254
          %v2288 = vsub.f32 %v2230, %v2254
          %v2289 = vsub.f32 %v2231, %v2254
          %v2290 = vsub.f32 %v2232, %v2254
          %v2291 = vsub.f32 %v2233, %v2254
          %v2292 = vsub.f32 %v2234, %v2254
          %v2293 = vsub.f32 %v2235, %v2254
          %v2294 = vsub.f32 %v2236, %v2254
          %v2295 = vsub.f32 %v2237, %v2254
          %v2296 = vsub.f32 %v2238, %v2254
          %v2297 = vsub.f32 %v2239, %v2254
          %v2298 = vsub.f32 %v2240, %v2254
          %v2299 = vsub.f32 %v2241, %v2254
          %v2300 = vsub.f32 %v2242, %v2254
          %v2301 = vsub.f32 %v2243, %v2254
          %v2302 = vsub.f32 %v2244, %v2254
          %v2303 = vsub.f32 %v2245, %v2254
          %2304 = vst [vmem:[#allocation15] sm:$0xff] %v2256
          %2305 = vst [vmem:[#allocation15 + $0x8] sm:$0xff] %v2257
          %2306 = vst [vmem:[#allocation15 + $0x10] sm:$0xff] %v2258
          %2307 = vst [vmem:[#allocation15 + $0x18] sm:$0xff] %v2259
          %2308 = vst [vmem:[#allocation15 + $0x20] sm:$0xff] %v2260
          %2309 = vst [vmem:[#allocation15 + $0x28] sm:$0xff] %v2261
          %2310 = vst [vmem:[#allocation15 + $0x30] sm:$0xff] %v2262
          %2311 = vst [vmem:[#allocation15 + $0x38] sm:$0xff] %v2263
          %2312 = vst [vmem:[#allocation15 + $0x40] sm:$0xff] %v2264
          %2313 = vst [vmem:[#allocation15 + $0x48] sm:$0xff] %v2265
          %2314 = vst [vmem:[#allocation15 + $0x50] sm:$0xff] %v2266
          %2315 = vst [vmem:[#allocation15 + $0x58] sm:$0xff] %v2267
          %2316 = vst [vmem:[#allocation15 + $0x60] sm:$0xff] %v2268
          %2317 = vst [vmem:[#allocation15 + $0x68] sm:$0xff] %v2269
          %2318 = vst [vmem:[#allocation15 + $0x70] sm:$0xff] %v2270
          %2319 = vst [vmem:[#allocation15 + $0x78] sm:$0xff] %v2271
          %2320 = vst [vmem:[#allocation15 + $0x80] sm:$0xff] %v2272
          %2321 = vst [vmem:[#allocation15 + $0x88] sm:$0xff] %v2273
          %2322 = vst [vmem:[#allocation15 + $0x90] sm:$0xff] %v2274
          %2323 = vst [vmem:[#allocation15 + $0x98] sm:$0xff] %v2275
          %2324 = vst [vmem:[#allocation15 + $0xa0] sm:$0xff] %v2276
          %2325 = vst [vmem:[#allocation15 + $0xa8] sm:$0xff] %v2277
          %2326 = vst [vmem:[#allocation15 + $0xb0] sm:$0xff] %v2278
          %2327 = vst [vmem:[#allocation15 + $0xb8] sm:$0xff] %v2279
          %2328 = vst [vmem:[#allocation15 + $0xc0] sm:$0xff] %v2280
          %2329 = vst [vmem:[#allocation15 + $0xc8] sm:$0xff] %v2281
          %2330 = vst [vmem:[#allocation15 + $0xd0] sm:$0xff] %v2282
          %2331 = vst [vmem:[#allocation15 + $0xd8] sm:$0xff] %v2283
          %2332 = vst [vmem:[#allocation15 + $0xe0] sm:$0xff] %v2284
          %2333 = vst [vmem:[#allocation15 + $0xe8] sm:$0xff] %v2285
          %2334 = vst [vmem:[#allocation15 + $0xf0] sm:$0xff] %v2286
          %2335 = vst [vmem:[#allocation15 + $0xf8] sm:$0xff] %v2287
          %2336 = vst [vmem:[#allocation15 + $0x100] sm:$0xff] %v2288
          %2337 = vst [vmem:[#allocation15 + $0x108] sm:$0xff] %v2289
          %2338 = vst [vmem:[#allocation15 + $0x110] sm:$0xff] %v2290
          %2339 = vst [vmem:[#allocation15 + $0x118] sm:$0xff] %v2291
          %2340 = vst [vmem:[#allocation15 + $0x120] sm:$0xff] %v2292
          %2341 = vst [vmem:[#allocation15 + $0x128] sm:$0xff] %v2293
          %2342 = vst [vmem:[#allocation15 + $0x130] sm:$0xff] %v2294
          %2343 = vst [vmem:[#allocation15 + $0x138] sm:$0xff] %v2295
          %2344 = vst [vmem:[#allocation15 + $0x140] sm:$0xff] %v2296
          %2345 = vst [vmem:[#allocation15 + $0x148] sm:$0xff] %v2297
          %2346 = vst [vmem:[#allocation15 + $0x150] sm:$0xff] %v2298
          %2347 = vst [vmem:[#allocation15 + $0x158] sm:$0xff] %v2299
          %2348 = vst [vmem:[#allocation15 + $0x160] sm:$0xff] %v2300
          %2349 = vst [vmem:[#allocation15 + $0x168] sm:$0xff] %v2301
          %2350 = vst [vmem:[#allocation15 + $0x170] sm:$0xff] %v2302
          %2351 = vst [vmem:[#allocation15 + $0x178] sm:$0xff] %v2303
        $region172: #{tpu_custom_call.1} parent=27 // pred_fallthru
          _
        // Predicated region
        $region173: #{tpu_custom_call.1} parent=27 // pred_check
          %p2352 = pneg %p91
        $region174: #{tpu_custom_call.1} parent=27 // pred_check_branch
          %2354 = sbr.rel (%p2352) target = $region176
        $region175: #{tpu_custom_call.1} parent=27 // pred_region
          %s2356 = ssub.s32 6144, 6144
          %2357 = vsyncadd [#allocation12], %s2356
          %s2359 = sshll.u32 [#allocation15], 4
          %s2360 = int_to_ptr.vmem [resolvable:$true] %s2359
          %2362 = dma.vmem_to_hbm [thread:$0]  %s2360, 6144, %s4, [#allocation12]
        $region176: #{tpu_custom_call.1} parent=27 // pred_fallthru
          _
        // Predicated region
        $region177: #{tpu_custom_call.1} parent=27 // pred_check
          %p2363 = pneg %p91
        $region178: #{tpu_custom_call.1} parent=27 // pred_check_branch
          %2365 = sbr.rel (%p2363) target = $region180
        $region179: #{tpu_custom_call.1} parent=27 // pred_region
          %2366 = dma.done [#allocation12], 6144
        $region180: #{tpu_custom_call.1} parent=27 // pred_fallthru
          _
      $region28: #{tpu_custom_call.1} parent=5 // pred_fallthru
        _
      %p2367 = scmp.le.s32.totalorder 2, %s21
      // Predicated region
      $region181: #{tpu_custom_call.1} parent=5 // pred_check
        %p2368 = pneg %p2367
      $region182: #{tpu_custom_call.1} parent=5 // pred_check_branch
        %2370 = sbr.rel (%p2368) target = $region184
      $region183: #{tpu_custom_call.1} parent=5 // pred_region
        %s2371 = ssub.s32 %s21, 2
      $region184: #{tpu_custom_call.1} parent=5 // pred_fallthru
        _
    $region6: #{tpu_custom_call.1} parent=1 // loop_footer
      %s25 = sadd.s32 1, %s21
    $region7: #{tpu_custom_call.1} parent=1 // loop_footer_branch
      %20 = sbr.rel target = $region3
    $region8: #{tpu_custom_call.1} parent=1 // loop_exit
      _
    %2372 = vsyncpa [#allocation11], 1
    %s2373 = scalar_lea.sflag [#allocation11], 1
    %2374 = vsyncpa %s2373, 1
    %2375 = vsyncpa [#allocation14], 1
    %s2376 = scalar_lea.sflag [#allocation14], 1
    %2377 = vsyncpa %s2376, 1
    %2378 = vsyncpa [#allocation12], 1
    %s2379 = scalar_lea.sflag [#allocation12], 1
    %2380 = vsyncpa %s2379, 1
  %2381 = vsyncmov [#allocation3]
  %s2382 = vpop.sfrf %2381
  %p2383 = scmp.eq.s32.totalorder %s2382, 0
  %p2384 = pneg %p2383
  %2386 = shalt.err (%p2384)
  %s2387 = scalar_lea.sflag [#allocation3], 1
  %2388 = vsyncmov %s2387
  %s2389 = vpop.sfrf %2388
  %p2390 = scmp.eq.s32.totalorder %s2389, 0
  %p2391 = pneg %p2390
  %2393 = shalt.err (%p2391)
  %s2394 = scalar_lea.sflag [#allocation3], 2
  %2395 = vsyncmov %s2394
  %s2396 = vpop.sfrf %2395
  %p2397 = scmp.eq.s32.totalorder %s2396, 0
  %p2398 = pneg %p2397
  %2400 = shalt.err (%p2398)
  %s2401 = scalar_lea.sflag [#allocation3], 3
  %2402 = vsyncmov %s2401
  %s2403 = vpop.sfrf %2402
  %p2404 = scmp.eq.s32.totalorder %s2403, 0
  %p2405 = pneg %p2404
  %2407 = shalt.err (%p2405)
  %s2408 = scalar_lea.sflag [#allocation3], 4
  %2409 = vsyncmov %s2408
  %s2410 = vpop.sfrf %2409
  %p2411 = scmp.eq.s32.totalorder %s2410, 0
  %p2412 = pneg %p2411
  %2414 = shalt.err (%p2412)
  %s2415 = scalar_lea.sflag [#allocation3], 5
  %2416 = vsyncmov %s2415
  %s2417 = vpop.sfrf %2416
  %p2418 = scmp.eq.s32.totalorder %s2417, 0
  %p2419 = pneg %p2418
  %2421 = shalt.err (%p2419)
  %s2422 = scalar_lea.sflag [#allocation3], 6
  %2423 = vsyncmov %s2422
  %s2424 = vpop.sfrf %2423
  %p2425 = scmp.eq.s32.totalorder %s2424, 0
  %p2426 = pneg %p2425
  %2428 = shalt.err (%p2426)
  %s2429 = scalar_lea.sflag [#allocation3], 7
  %2430 = vsyncmov %s2429
  %s2431 = vpop.sfrf %2430
  %p2432 = scmp.eq.s32.totalorder %s2431, 0
  %p2433 = pneg %p2432
  %2435 = shalt.err (%p2433)
  %s2436 = scalar_lea.sflag [#allocation3], 8
  %2437 = vsyncmov %s2436
  %s2438 = vpop.sfrf %2437
  %p2439 = scmp.eq.s32.totalorder %s2438, 0
  %p2440 = pneg %p2439
  %2442 = shalt.err (%p2440)
  %s2443 = scalar_lea.sflag [#allocation3], 9
  %2444 = vsyncmov %s2443
  %s2445 = vpop.sfrf %2444
  %p2446 = scmp.eq.s32.totalorder %s2445, 0
  %p2447 = pneg %p2446
  %2449 = shalt.err (%p2447)
  %s2450 = scalar_lea.sflag [#allocation3], 10
  %2451 = vsyncmov %s2450
  %s2452 = vpop.sfrf %2451
  %p2453 = scmp.eq.s32.totalorder %s2452, 0
  %p2454 = pneg %p2453
  %2456 = shalt.err (%p2454)
  %s2457 = scalar_lea.sflag [#allocation3], 11
  %2458 = vsyncmov %s2457
  %s2459 = vpop.sfrf %2458
  %p2460 = scmp.eq.s32.totalorder %s2459, 0
  %p2461 = pneg %p2460
  %2463 = shalt.err (%p2461)
  %s2464 = scalar_lea.sflag [#allocation3], 12
  %2465 = vsyncmov %s2464
  %s2466 = vpop.sfrf %2465
  %p2467 = scmp.eq.s32.totalorder %s2466, 0
  %p2468 = pneg %p2467
  %2470 = shalt.err (%p2468)
  %s2471 = scalar_lea.sflag [#allocation3], 13
  %2472 = vsyncmov %s2471
  %s2473 = vpop.sfrf %2472
  %p2474 = scmp.eq.s32.totalorder %s2473, 0
  %p2475 = pneg %p2474
  %2477 = shalt.err (%p2475)
  %s2478 = scalar_lea.sflag [#allocation3], 14
  %2479 = vsyncmov %s2478
  %s2480 = vpop.sfrf %2479
  %p2481 = scmp.eq.s32.totalorder %s2480, 0
  %p2482 = pneg %p2481
  %2484 = shalt.err (%p2482)
  %s2485 = scalar_lea.sflag [#allocation3], 15
  %2486 = vsyncmov %s2485
  %s2487 = vpop.sfrf %2486
  %p2488 = scmp.eq.s32.totalorder %s2487, 0
  %p2489 = pneg %p2488
  %2491 = shalt.err (%p2489)
  %s2492 = scalar_lea.sflag [#allocation3], 16
  %2493 = vsyncmov %s2492
  %s2494 = vpop.sfrf %2493
  %p2495 = scmp.eq.s32.totalorder %s2494, 0
  %p2496 = pneg %p2495
  %2498 = shalt.err (%p2496)
  %s2499 = scalar_lea.sflag [#allocation3], 17
  %2500 = vsyncmov %s2499
  %s2501 = vpop.sfrf %2500
  %p2502 = scmp.eq.s32.totalorder %s2501, 0
  %p2503 = pneg %p2502
  %2505 = shalt.err (%p2503)
  %s2506 = scalar_lea.sflag [#allocation3], 18
  %2507 = vsyncmov %s2506
  %s2508 = vpop.sfrf %2507
  %p2509 = scmp.eq.s32.totalorder %s2508, 0
  %p2510 = pneg %p2509
  %2512 = shalt.err (%p2510)
  %s2513 = scalar_lea.sflag [#allocation3], 19
  %2514 = vsyncmov %s2513
  %s2515 = vpop.sfrf %2514
  %p2516 = scmp.eq.s32.totalorder %s2515, 0
  %p2517 = pneg %p2516
  %2519 = shalt.err (%p2517)
  %s2520 = scalar_lea.sflag [#allocation3], 20
  %2521 = vsyncmov %s2520
  %s2522 = vpop.sfrf %2521
  %p2523 = scmp.eq.s32.totalorder %s2522, 0
  %p2524 = pneg %p2523
  %2526 = shalt.err (%p2524)
  %s2527 = scalar_lea.sflag [#allocation3], 21
  %2528 = vsyncmov %s2527
  %s2529 = vpop.sfrf %2528
  %p2530 = scmp.eq.s32.totalorder %s2529, 0
  %p2531 = pneg %p2530
  %2533 = shalt.err (%p2531)
  %s2534 = scalar_lea.sflag [#allocation3], 22
  %2535 = vsyncmov %s2534
  %s2536 = vpop.sfrf %2535
  %p2537 = scmp.eq.s32.totalorder %s2536, 0
  %p2538 = pneg %p2537
  %2540 = shalt.err (%p2538)
  %s2541 = scalar_lea.sflag [#allocation3], 23
  %2542 = vsyncmov %s2541
  %s2543 = vpop.sfrf %2542
  %p2544 = scmp.eq.s32.totalorder %s2543, 0
  %p2545 = pneg %p2544
  %2547 = shalt.err (%p2545)
  %s2548 = scalar_lea.sflag [#allocation3], 24
  %2549 = vsyncmov %s2548
  %s2550 = vpop.sfrf %2549
  %p2551 = scmp.eq.s32.totalorder %s2550, 0
  %p2552 = pneg %p2551
  %2554 = shalt.err (%p2552)
  %s2555 = scalar_lea.sflag [#allocation3], 25
  %2556 = vsyncmov %s2555
  %s2557 = vpop.sfrf %2556
  %p2558 = scmp.eq.s32.totalorder %s2557, 0
  %p2559 = pneg %p2558
  %2561 = shalt.err (%p2559)
  %s2562 = scalar_lea.sflag [#allocation3], 26
  %2563 = vsyncmov %s2562
  %s2564 = vpop.sfrf %2563
  %p2565 = scmp.eq.s32.totalorder %s2564, 0
  %p2566 = pneg %p2565
  %2568 = shalt.err (%p2566)
  %s2569 = scalar_lea.sflag [#allocation3], 27
  %2570 = vsyncmov %s2569
  %s2571 = vpop.sfrf %2570
  %p2572 = scmp.eq.s32.totalorder %s2571, 0
  %p2573 = pneg %p2572
  %2575 = shalt.err (%p2573)
  %s2576 = scalar_lea.sflag [#allocation3], 28
  %2577 = vsyncmov %s2576
  %s2578 = vpop.sfrf %2577
  %p2579 = scmp.eq.s32.totalorder %s2578, 0
  %p2580 = pneg %p2579
  %2582 = shalt.err (%p2580)
  %s2583 = scalar_lea.sflag [#allocation3], 29
  %2584 = vsyncmov %s2583
  %s2585 = vpop.sfrf %2584
  %p2586 = scmp.eq.s32.totalorder %s2585, 0
  %p2587 = pneg %p2586
  %2589 = shalt.err (%p2587)
  %s2590 = scalar_lea.sflag [#allocation3], 30
  %2591 = vsyncmov %s2590
  %s2592 = vpop.sfrf %2591
  %p2593 = scmp.eq.s32.totalorder %s2592, 0
  %p2594 = pneg %p2593
  %2596 = shalt.err (%p2594)
  %s2597 = scalar_lea.sflag [#allocation3], 31
  %2598 = vsyncmov %s2597
  %s2599 = vpop.sfrf %2598
  %p2600 = scmp.eq.s32.totalorder %s2599, 0
  %p2601 = pneg %p2600
  %2603 = shalt.err (%p2601)

</llo_original>
